<compile_context>
chip_gen: v5e
topology: v5e:2x2
jax: 0.10.0
libtpu: 0.0.40
codegen_flags: <defaults>
</compile_context>

<pallas_src>
import functools

import jax
import jax.numpy as jnp
from jax.experimental import pallas as pl
from jax.experimental.pallas import tpu as pltpu

LANE = 128


def _round_up(n, m):
    return ((n + m - 1) // m) * m


def mlp_fused_kernel(x_ref, w1_ref, b1_ref, w2_ref, b2_ref, wh_ref, bh_ref, out_ref):
    # Layer 1: Linear + ReLU (BatchNorm already folded into W2/b2).
    h = jnp.dot(x_ref[...], w1_ref[...], preferred_element_type=jnp.float32)
    h = jnp.maximum(h + b1_ref[...], 0.0)
    # Dropout(0.5) is identity in eval mode.
    # Layer 2: Linear (BN-folded) + ReLU.
    h2 = jnp.dot(h.astype(w2_ref.dtype), w2_ref[...],
                 preferred_element_type=jnp.float32)
    h2 = jnp.maximum(h2 + b2_ref[...], 0.0)
    # Both heads fused into one lane-dense matmul + single wide store.
    out_ref[...] = (jnp.dot(h2.astype(wh_ref.dtype), wh_ref[...],
                            preferred_element_type=jnp.float32) + bh_ref[...])


def prepare_params(params, *, compute_dtype=jnp.bfloat16):
    """One-time transform: fold eval BN, fuse heads (per-head 128-lane segments),
    pad all matmul dims to 128 lanes, cast weights to bf16 (biases stay f32)."""
    (w1, b1, gamma, beta, mean, var, w2, b2, wcc, bcc, wit, bit) = params
    F, H = w1.shape
    H2 = w2.shape[1]
    ncc = wcc.shape[1]
    nit = wit.shape[1]

    # Fold eval-mode BatchNorm1d (running stats, eps=1e-5) into the 2nd linear
    # (exact, done in f32):
    #   BN(h) = h*s + t,  s = gamma/sqrt(var+eps),  t = beta - mean*s
    #   BN(h) @ W2 + b2 = h @ (s[:,None]*W2) + (t @ W2 + b2)
    s = gamma[0] * jax.lax.rsqrt(var[0] + 1e-5)             # (H,)
    t = beta[0] - mean[0] * s                                # (H,)
    w2f = s[:, None] * w2                                    # (H, H2)
    b2f = t[None, :] @ w2 + b2                               # (1, H2)

    # Pad every matmul dim (contraction + output) to 128 lanes. Each head gets
    # its own lane-aligned segment so the output split is a static aligned slice
    # and the fused head matmul fills a 256-wide MXU.
    Fp = _round_up(F, LANE)
    Hp = _round_up(H, LANE)
    H2p = _round_up(H2, LANE)
    seg_cc = _round_up(ncc, LANE)
    seg_it = _round_up(nit, LANE)
    NHp = seg_cc + seg_it

    w1p = jnp.zeros((Fp, Hp), jnp.float32).at[:F, :H].set(w1)
    b1p = jnp.zeros((1, Hp), jnp.float32).at[:, :H].set(b1)
    w2p = jnp.zeros((Hp, H2p), jnp.float32).at[:H, :H2].set(w2f)
    b2p = jnp.zeros((1, H2p), jnp.float32).at[:, :H2].set(b2f)
    whp = (jnp.zeros((H2p, NHp), jnp.float32)
           .at[:H2, :ncc].set(wcc)
           .at[:H2, seg_cc:seg_cc + nit].set(wit))
    bhp = (jnp.zeros((1, NHp), jnp.float32)
           .at[:, :ncc].set(bcc)
           .at[:, seg_cc:seg_cc + nit].set(bit))

    # bf16 weights halve DMA bytes and use the MXU's native bf16 rate; the
    # zero padding stays exactly zero under the cast. Biases remain f32.
    w1p = w1p.astype(compute_dtype)
    w2p = w2p.astype(compute_dtype)
    whp = whp.astype(compute_dtype)

    return (w1p, b1p, w2p, b2p, whp, bhp), (ncc, nit)


@functools.partial(jax.jit,
                   static_argnames=("ncc", "nit", "tile_b", "single_buffer_weights"))
def rede_multiplas_saidas(x, packed, *, ncc, nit, tile_b=512,
                          single_buffer_weights=True):
    w1, b1, w2, b2, wh, bh = packed
    B, F = x.shape
    Fp, Hp = w1.shape
    H2p = w2.shape[1]
    NHp = wh.shape[1]
    seg_cc = _round_up(ncc, LANE)

    # Pad features to the lane-padded contraction dim and match weight dtype.
    if Fp != F:
        x = jnp.pad(x, ((0, 0), (0, Fp - F)))
    x = x.astype(w1.dtype)

    # Batch tiling: big tiles amortize per-grid-step overhead; keep >= 2 grid
    # steps whenever possible so v7x's second TensorCore gets a share
    # ("parallel" semantics on the batch axis).
    tb = min(tile_b, _round_up(B, 8))
    if B > 8 and _round_up(B, tb) // tb < 2:
        tb = _round_up((B + 1) // 2, 8)
    Bp = _round_up(B, tb)
    if Bp != B:
        x = jnp.pad(x, ((0, Bp - B), (0, 0)))

    # Constant-block weights/biases: block index never changes across the grid,
    # so single-buffer them (default double-buffering wastes VMEM).
    if single_buffer_weights:
        def weight_spec(shape):
            return pl.BlockSpec(shape, lambda i: (0, 0),
                                pipeline_mode=pl.Buffered(1))
    else:
        def weight_spec(shape):
            return pl.BlockSpec(shape, lambda i: (0, 0))

    flops = 2 * Bp * (Fp * Hp + Hp * H2p + H2p * NHp)
    bytes_accessed = (x.size * x.dtype.itemsize
                      + sum(a.size * a.dtype.itemsize
                            for a in (w1, b1, w2, b2, wh, bh))
                      + Bp * NHp * 4)
    cost = pl.CostEstimate(flops=flops, transcendentals=0,
                           bytes_accessed=bytes_accessed)

    out = pl.pallas_call(
        mlp_fused_kernel,
        out_shape=jax.ShapeDtypeStruct((Bp, NHp), jnp.float32),
        grid=(Bp // tb,),
        in_specs=[
            pl.BlockSpec((tb, Fp), lambda i: (i, 0)),    # x (batch-tiled)
            weight_spec((Fp, Hp)),                       # w1
            weight_spec((1, Hp)),                        # b1
            weight_spec((Hp, H2p)),                      # w2 (BN folded)
            weight_spec((1, H2p)),                       # b2 (BN folded)
            weight_spec((H2p, NHp)),                     # fused heads W
            weight_spec((1, NHp)),                       # fused heads b
        ],
        out_specs=pl.BlockSpec((tb, NHp), lambda i: (i, 0)),
        compiler_params=pltpu.CompilerParams(
            dimension_semantics=("parallel",),
            vmem_limit_bytes=32 * 1024 * 1024,
        ),
        cost_estimate=cost,
    )(x, w1, b1, w2, b2, wh, bh)

    # Strip batch padding; split heads at lane-aligned (128-multiple) offsets.
    cc_out = out[:B, :ncc]
    item_out = out[:B, seg_cc:seg_cc + nit]
    return cc_out, item_out


def make_params(key, input_size, hidden_size, num_classes_cc, num_classes_item):
    """Deterministic synthetic parameters (shapes per the module's __init__)."""
    h2 = hidden_size // 2
    ks = jax.random.split(key, 8)
    scale = 0.05
    w1 = scale * jax.random.normal(ks[0], (input_size, hidden_size), jnp.float32)
    b1 = scale * jax.random.normal(ks[1], (1, hidden_size), jnp.float32)
    gamma = 1.0 + 0.1 * jax.random.normal(ks[2], (1, hidden_size), jnp.float32)
    beta = 0.1 * jax.random.normal(ks[3], (1, hidden_size), jnp.float32)
    mean = 0.1 * jax.random.normal(ks[4], (1, hidden_size), jnp.float32)
    var = jnp.abs(1.0 + 0.1 * jax.random.normal(ks[5], (1, hidden_size), jnp.float32))
    w2 = scale * jax.random.normal(ks[6], (hidden_size, h2), jnp.float32)
    b2 = scale * jax.random.normal(ks[7], (1, h2), jnp.float32)
    ks2 = jax.random.split(ks[0], 4)
    wcc = scale * jax.random.normal(ks2[0], (h2, num_classes_cc), jnp.float32)
    bcc = scale * jax.random.normal(ks2[1], (1, num_classes_cc), jnp.float32)
    wit = scale * jax.random.normal(ks2[2], (h2, num_classes_item), jnp.float32)
    bit = scale * jax.random.normal(ks2[3], (1, num_classes_item), jnp.float32)
    return (w1, b1, gamma, beta, mean, var, w2, b2, wcc, bcc, wit, bit)


def reference(x, params):
    (w1, b1, gamma, beta, mean, var, w2, b2, wcc, bcc, wit, bit) = params
    h = jnp.maximum(x @ w1 + b1, 0.0)
    h = (h - mean) * jax.lax.rsqrt(var + 1e-5) * gamma + beta
    h2 = jnp.maximum(h @ w2 + b2, 0.0)
    return h2 @ wcc + bcc, h2 @ wit + bit


if __name__ == "__main__":
    # Small shapes consistent with the module (one-hot dummy input features).
    batch = 1024              # -> two 512-row tiles (one per v7x TensorCore)
    input_size = 32
    hidden_size = 64          # stands in for the script's hidden_size = 500
    num_classes_cc = 12
    num_classes_item = 20

    key = jax.random.PRNGKey(0)
    kx, kp = jax.random.split(key)
    # dummy (one-hot-ish) input: 0/1 floats
    x = (jax.random.uniform(kx, (batch, input_size)) > 0.5).astype(jnp.float32)
    params = make_params(kp, input_size, hidden_size, num_classes_cc, num_classes_item)

    packed, (ncc, nit) = prepare_params(params)

    def run(single_buffer_weights):
        out = rede_multiplas_saidas(x, packed, ncc=ncc, nit=nit, tile_b=512,
                                    single_buffer_weights=single_buffer_weights)
        jax.block_until_ready(out)
        return out

    try:
        cc_out, item_out = run(True)
    except Exception:
        # Defensive fallback for JAX versions without BlockSpec pipeline_mode
        # support; identical math, weights just stay double-buffered.
        cc_out, item_out = run(False)

    cc_ref, item_ref = reference(x, params)
    assert cc_out.shape == (batch, num_classes_cc)
    assert item_out.shape == (batch, num_classes_item)
    # bf16 weights/activations (f32 accumulation) -> relaxed tolerance vs f32 ref.
    assert jnp.allclose(cc_out, cc_ref, atol=2e-2, rtol=2e-2)
    assert jnp.allclose(item_out, item_ref, atol=2e-2, rtol=2e-2)

    print("KERNEL_OK")
</pallas_src>

<mosaic_0001>
module attributes {stable_mosaic.version = 11 : i64} {
  func.func @mlp_fused_kernel(%arg0: i32, %arg1: memref<512x128xbf16, #tpu.memory_space<vmem>>, %arg2: memref<128x128xbf16, #tpu.memory_space<vmem>>, %arg3: memref<1x128xf32, #tpu.memory_space<vmem>>, %arg4: memref<128x128xbf16, #tpu.memory_space<vmem>>, %arg5: memref<1x128xf32, #tpu.memory_space<vmem>>, %arg6: memref<128x256xbf16, #tpu.memory_space<vmem>>, %arg7: memref<1x256xf32, #tpu.memory_space<vmem>>, %arg8: memref<512x256xf32, #tpu.memory_space<vmem>>) attributes {dimension_semantics = [#tpu.dimension_semantics<parallel>], iteration_bounds = array<i64: 2>, scalar_prefetch = 0 : i64, scratch_operands = 0 : i64, tpu.core_type = #tpu.core_type<tc>, window_params = [{transform_indices = @transform_0, window_bounds = array<i64: 512, 128>}, {pipeline_mode = #tpu.pipeline_mode<synchronous>, transform_indices = @transform_1, window_bounds = array<i64: 128, 128>}, {pipeline_mode = #tpu.pipeline_mode<synchronous>, transform_indices = @transform_2, window_bounds = array<i64: 1, 128>}, {pipeline_mode = #tpu.pipeline_mode<synchronous>, transform_indices = @transform_3, window_bounds = array<i64: 128, 128>}, {pipeline_mode = #tpu.pipeline_mode<synchronous>, transform_indices = @transform_4, window_bounds = array<i64: 1, 128>}, {pipeline_mode = #tpu.pipeline_mode<synchronous>, transform_indices = @transform_5, window_bounds = array<i64: 128, 256>}, {pipeline_mode = #tpu.pipeline_mode<synchronous>, transform_indices = @transform_6, window_bounds = array<i64: 1, 256>}, {transform_indices = @transform_7, window_bounds = array<i64: 512, 256>}]} {
    %c0 = arith.constant 0 : index
    %c0_0 = arith.constant 0 : index
    %0 = vector.load %arg1[%c0, %c0_0] : memref<512x128xbf16, #tpu.memory_space<vmem>>, vector<512x128xbf16>
    %c0_1 = arith.constant 0 : index
    %c0_2 = arith.constant 0 : index
    %1 = vector.load %arg2[%c0_1, %c0_2] : memref<128x128xbf16, #tpu.memory_space<vmem>>, vector<128x128xbf16>
    %cst = arith.constant dense<0.000000e+00> : vector<512x128xf32>
    %2 = tpu.matmul %0, %1, %cst {dimension_numbers = #tpu.dot_dimension_numbers<[1], [0], [0], [1], [0, 0, 1, 1], [], []>} : vector<512x128xbf16>, vector<128x128xbf16>, vector<512x128xf32> -> vector<512x128xf32>
    %c0_3 = arith.constant 0 : index
    %c0_4 = arith.constant 0 : index
    %3 = vector.load %arg3[%c0_3, %c0_4] : memref<1x128xf32, #tpu.memory_space<vmem>>, vector<1x128xf32>
    %4 = vector.broadcast %3 : vector<1x128xf32> to vector<512x128xf32>
    %5 = arith.addf %2, %4 : vector<512x128xf32>
    %cst_5 = arith.constant 0.000000e+00 : f32
    %6 = vector.broadcast %cst_5 : f32 to vector<512x128xf32>
    %7 = arith.maximumf %5, %6 : vector<512x128xf32>
    %8 = arith.truncf %7 : vector<512x128xf32> to vector<512x128xbf16>
    %c0_6 = arith.constant 0 : index
    %c0_7 = arith.constant 0 : index
    %9 = vector.load %arg4[%c0_6, %c0_7] : memref<128x128xbf16, #tpu.memory_space<vmem>>, vector<128x128xbf16>
    %cst_8 = arith.constant dense<0.000000e+00> : vector<512x128xf32>
    %10 = tpu.matmul %8, %9, %cst_8 {dimension_numbers = #tpu.dot_dimension_numbers<[1], [0], [0], [1], [0, 0, 1, 1], [], []>} : vector<512x128xbf16>, vector<128x128xbf16>, vector<512x128xf32> -> vector<512x128xf32>
    %c0_9 = arith.constant 0 : index
    %c0_10 = arith.constant 0 : index
    %11 = vector.load %arg5[%c0_9, %c0_10] : memref<1x128xf32, #tpu.memory_space<vmem>>, vector<1x128xf32>
    %12 = vector.broadcast %11 : vector<1x128xf32> to vector<512x128xf32>
    %13 = arith.addf %10, %12 : vector<512x128xf32>
    %cst_11 = arith.constant 0.000000e+00 : f32
    %14 = vector.broadcast %cst_11 : f32 to vector<512x128xf32>
    %15 = arith.maximumf %13, %14 : vector<512x128xf32>
    %16 = arith.truncf %15 : vector<512x128xf32> to vector<512x128xbf16>
    %c0_12 = arith.constant 0 : index
    %c0_13 = arith.constant 0 : index
    %17 = vector.load %arg6[%c0_12, %c0_13] : memref<128x256xbf16, #tpu.memory_space<vmem>>, vector<128x256xbf16>
    %cst_14 = arith.constant dense<0.000000e+00> : vector<512x256xf32>
    %18 = tpu.matmul %16, %17, %cst_14 {dimension_numbers = #tpu.dot_dimension_numbers<[1], [0], [0], [1], [0, 0, 1, 1], [], []>} : vector<512x128xbf16>, vector<128x256xbf16>, vector<512x256xf32> -> vector<512x256xf32>
    %c0_15 = arith.constant 0 : index
    %c0_16 = arith.constant 0 : index
    %19 = vector.load %arg7[%c0_15, %c0_16] : memref<1x256xf32, #tpu.memory_space<vmem>>, vector<1x256xf32>
    %20 = vector.broadcast %19 : vector<1x256xf32> to vector<512x256xf32>
    %21 = arith.addf %18, %20 : vector<512x256xf32>
    %c0_17 = arith.constant 0 : index
    %c0_18 = arith.constant 0 : index
    %22 = vector.load %arg8[%c0_17, %c0_18] : memref<512x256xf32, #tpu.memory_space<vmem>>, vector<512x256xf32>
    tpu.vector_store %arg8[%c0_17, %c0_18], %21 {strides = array<i32>} : memref<512x256xf32, #tpu.memory_space<vmem>>, vector<512x256xf32>,
    return
  }
  func.func @transform_0(%arg0: i32) -> (i32, i32) {
    %c0_i32 = arith.constant 0 : i32
    %c0_i32_0 = arith.constant 0 : i32
    return %arg0, %c0_i32 : i32, i32
  }
  func.func @transform_1(%arg0: i32) -> (i32, i32) {
    %c0_i32 = arith.constant 0 : i32
    %c0_i32_0 = arith.constant 0 : i32
    %c0_i32_1 = arith.constant 0 : i32
    return %c0_i32, %c0_i32_0 : i32, i32
  }
  func.func @transform_2(%arg0: i32) -> (i32, i32) {
    %c0_i32 = arith.constant 0 : i32
    %c0_i32_0 = arith.constant 0 : i32
    %c0_i32_1 = arith.constant 0 : i32
    return %c0_i32, %c0_i32_0 : i32, i32
  }
  func.func @transform_3(%arg0: i32) -> (i32, i32) {
    %c0_i32 = arith.constant 0 : i32
    %c0_i32_0 = arith.constant 0 : i32
    %c0_i32_1 = arith.constant 0 : i32
    return %c0_i32, %c0_i32_0 : i32, i32
  }
  func.func @transform_4(%arg0: i32) -> (i32, i32) {
    %c0_i32 = arith.constant 0 : i32
    %c0_i32_0 = arith.constant 0 : i32
    %c0_i32_1 = arith.constant 0 : i32
    return %c0_i32, %c0_i32_0 : i32, i32
  }
  func.func @transform_5(%arg0: i32) -> (i32, i32) {
    %c0_i32 = arith.constant 0 : i32
    %c0_i32_0 = arith.constant 0 : i32
    %c0_i32_1 = arith.constant 0 : i32
    return %c0_i32, %c0_i32_0 : i32, i32
  }
  func.func @transform_6(%arg0: i32) -> (i32, i32) {
    %c0_i32 = arith.constant 0 : i32
    %c0_i32_0 = arith.constant 0 : i32
    %c0_i32_1 = arith.constant 0 : i32
    return %c0_i32, %c0_i32_0 : i32, i32
  }
  func.func @transform_7(%arg0: i32) -> (i32, i32) {
    %c0_i32 = arith.constant 0 : i32
    %c0_i32_0 = arith.constant 0 : i32
    return %arg0, %c0_i32 : i32, i32
  }
}

module attributes {stable_mosaic.version = 11 : i64} {
  func.func @mlp_fused_kernel(%arg0: i32, %arg1: memref<512x128xbf16, #tpu.memory_space<vmem>>, %arg2: memref<128x128xbf16, #tpu.memory_space<vmem>>, %arg3: memref<1x128xf32, #tpu.memory_space<vmem>>, %arg4: memref<128x128xbf16, #tpu.memory_space<vmem>>, %arg5: memref<1x128xf32, #tpu.memory_space<vmem>>, %arg6: memref<128x256xbf16, #tpu.memory_space<vmem>>, %arg7: memref<1x256xf32, #tpu.memory_space<vmem>>, %arg8: memref<512x256xf32, #tpu.memory_space<vmem>>) attributes {dimension_semantics = [#tpu.dimension_semantics<parallel>], iteration_bounds = array<i64: 2>, scalar_prefetch = 0 : i64, scratch_operands = 0 : i64, tpu.core_type = #tpu.core_type<tc>, window_params = [{transform_indices = @transform_0, window_bounds = array<i64: 512, 128>}, {pipeline_mode = #tpu.pipeline_mode<synchronous>, transform_indices = @transform_1, window_bounds = array<i64: 128, 128>}, {pipeline_mode = #tpu.pipeline_mode<synchronous>, transform_indices = @transform_2, window_bounds = array<i64: 1, 128>}, {pipeline_mode = #tpu.pipeline_mode<synchronous>, transform_indices = @transform_3, window_bounds = array<i64: 128, 128>}, {pipeline_mode = #tpu.pipeline_mode<synchronous>, transform_indices = @transform_4, window_bounds = array<i64: 1, 128>}, {pipeline_mode = #tpu.pipeline_mode<synchronous>, transform_indices = @transform_5, window_bounds = array<i64: 128, 256>}, {pipeline_mode = #tpu.pipeline_mode<synchronous>, transform_indices = @transform_6, window_bounds = array<i64: 1, 256>}, {transform_indices = @transform_7, window_bounds = array<i64: 512, 256>}]} {
    %c0 = arith.constant 0 : index
    %c0_0 = arith.constant 0 : index
    %0 = vector.load %arg1[%c0, %c0_0] : memref<512x128xbf16, #tpu.memory_space<vmem>>, vector<512x128xbf16>
    %c0_1 = arith.constant 0 : index
    %c0_2 = arith.constant 0 : index
    %1 = vector.load %arg2[%c0_1, %c0_2] : memref<128x128xbf16, #tpu.memory_space<vmem>>, vector<128x128xbf16>
    %cst = arith.constant dense<0.000000e+00> : vector<512x128xf32>
    %2 = tpu.matmul %0, %1, %cst {dimension_numbers = #tpu.dot_dimension_numbers<[1], [0], [0], [1], [0, 0, 1, 1], [], []>} : vector<512x128xbf16>, vector<128x128xbf16>, vector<512x128xf32> -> vector<512x128xf32>
    %c0_3 = arith.constant 0 : index
    %c0_4 = arith.constant 0 : index
    %3 = vector.load %arg3[%c0_3, %c0_4] : memref<1x128xf32, #tpu.memory_space<vmem>>, vector<1x128xf32>
    %4 = vector.broadcast %3 : vector<1x128xf32> to vector<512x128xf32>
    %5 = arith.addf %2, %4 : vector<512x128xf32>
    %cst_5 = arith.constant 0.000000e+00 : f32
    %6 = vector.broadcast %cst_5 : f32 to vector<512x128xf32>
    %7 = arith.maximumf %5, %6 : vector<512x128xf32>
    %8 = arith.truncf %7 : vector<512x128xf32> to vector<512x128xbf16>
    %c0_6 = arith.constant 0 : index
    %c0_7 = arith.constant 0 : index
    %9 = vector.load %arg4[%c0_6, %c0_7] : memref<128x128xbf16, #tpu.memory_space<vmem>>, vector<128x128xbf16>
    %cst_8 = arith.constant dense<0.000000e+00> : vector<512x128xf32>
    %10 = tpu.matmul %8, %9, %cst_8 {dimension_numbers = #tpu.dot_dimension_numbers<[1], [0], [0], [1], [0, 0, 1, 1], [], []>} : vector<512x128xbf16>, vector<128x128xbf16>, vector<512x128xf32> -> vector<512x128xf32>
    %c0_9 = arith.constant 0 : index
    %c0_10 = arith.constant 0 : index
    %11 = vector.load %arg5[%c0_9, %c0_10] : memref<1x128xf32, #tpu.memory_space<vmem>>, vector<1x128xf32>
    %12 = vector.broadcast %11 : vector<1x128xf32> to vector<512x128xf32>
    %13 = arith.addf %10, %12 : vector<512x128xf32>
    %cst_11 = arith.constant 0.000000e+00 : f32
    %14 = vector.broadcast %cst_11 : f32 to vector<512x128xf32>
    %15 = arith.maximumf %13, %14 : vector<512x128xf32>
    %16 = arith.truncf %15 : vector<512x128xf32> to vector<512x128xbf16>
    %c0_12 = arith.constant 0 : index
    %c0_13 = arith.constant 0 : index
    %17 = vector.load %arg6[%c0_12, %c0_13] : memref<128x256xbf16, #tpu.memory_space<vmem>>, vector<128x256xbf16>
    %cst_14 = arith.constant dense<0.000000e+00> : vector<512x256xf32>
    %18 = tpu.matmul %16, %17, %cst_14 {dimension_numbers = #tpu.dot_dimension_numbers<[1], [0], [0], [1], [0, 0, 1, 1], [], []>} : vector<512x128xbf16>, vector<128x256xbf16>, vector<512x256xf32> -> vector<512x256xf32>
    %c0_15 = arith.constant 0 : index
    %c0_16 = arith.constant 0 : index
    %19 = vector.load %arg7[%c0_15, %c0_16] : memref<1x256xf32, #tpu.memory_space<vmem>>, vector<1x256xf32>
    %20 = vector.broadcast %19 : vector<1x256xf32> to vector<512x256xf32>
    %21 = arith.addf %18, %20 : vector<512x256xf32>
    %c0_17 = arith.constant 0 : index
    %c0_18 = arith.constant 0 : index
    %22 = vector.load %arg8[%c0_17, %c0_18] : memref<512x256xf32, #tpu.memory_space<vmem>>, vector<512x256xf32>
    tpu.vector_store %arg8[%c0_17, %c0_18], %21 {strides = array<i32>} : memref<512x256xf32, #tpu.memory_space<vmem>>, vector<512x256xf32>,
    return
  }
  func.func @transform_0(%arg0: i32) -> (i32, i32) {
    %c0_i32 = arith.constant 0 : i32
    %c0_i32_0 = arith.constant 0 : i32
    return %arg0, %c0_i32 : i32, i32
  }
  func.func @transform_1(%arg0: i32) -> (i32, i32) {
    %c0_i32 = arith.constant 0 : i32
    %c0_i32_0 = arith.constant 0 : i32
    %c0_i32_1 = arith.constant 0 : i32
    return %c0_i32, %c0_i32_0 : i32, i32
  }
  func.func @transform_2(%arg0: i32) -> (i32, i32) {
    %c0_i32 = arith.constant 0 : i32
    %c0_i32_0 = arith.constant 0 : i32
    %c0_i32_1 = arith.constant 0 : i32
    return %c0_i32, %c0_i32_0 : i32, i32
  }
  func.func @transform_3(%arg0: i32) -> (i32, i32) {
    %c0_i32 = arith.constant 0 : i32
    %c0_i32_0 = arith.constant 0 : i32
    %c0_i32_1 = arith.constant 0 : i32
    return %c0_i32, %c0_i32_0 : i32, i32
  }
  func.func @transform_4(%arg0: i32) -> (i32, i32) {
    %c0_i32 = arith.constant 0 : i32
    %c0_i32_0 = arith.constant 0 : i32
    %c0_i32_1 = arith.constant 0 : i32
    return %c0_i32, %c0_i32_0 : i32, i32
  }
  func.func @transform_5(%arg0: i32) -> (i32, i32) {
    %c0_i32 = arith.constant 0 : i32
    %c0_i32_0 = arith.constant 0 : i32
    %c0_i32_1 = arith.constant 0 : i32
    return %c0_i32, %c0_i32_0 : i32, i32
  }
  func.func @transform_6(%arg0: i32) -> (i32, i32) {
    %c0_i32 = arith.constant 0 : i32
    %c0_i32_0 = arith.constant 0 : i32
    %c0_i32_1 = arith.constant 0 : i32
    return %c0_i32, %c0_i32_0 : i32, i32
  }
  func.func @transform_7(%arg0: i32) -> (i32, i32) {
    %c0_i32 = arith.constant 0 : i32
    %c0_i32_0 = arith.constant 0 : i32
    return %arg0, %c0_i32 : i32, i32
  }
}

</mosaic_0001>

<llo_original>
// kernel: rede_multiplas_saidas.1
$region0: #{rede_multiplas_saidas.1}
  #allocation0 [shape = 'u32[]', space=smem, size = 0x4, offset = 0x4, fixed_abs, tag = 'smem constant byte address 0x4 - core index']
  #allocation1 [shape = 'u32[72,128]{1,0:T(1,128)}', space=vmem, size = 0x9000, scoped, tag = 'internal scratch']
  %s0 = inlined_call_operand.vmem [shape: bf16[1024,128], index: 0, kind: input, shape index: {}]
  %s1 = inlined_call_operand.vmem [shape: bf16[128,128], index: 1, kind: input, shape index: {}]
  %s2 = inlined_call_operand.vmem [shape: f32[1,128], index: 2, kind: input, shape index: {}]
  %s3 = inlined_call_operand.vmem [shape: bf16[128,128], index: 3, kind: input, shape index: {}]
  %s4 = inlined_call_operand.vmem [shape: f32[1,128], index: 4, kind: input, shape index: {}]
  %s5 = inlined_call_operand.vmem [shape: bf16[128,256], index: 5, kind: input, shape index: {}]
  %s6 = inlined_call_operand.vmem [shape: f32[1,256], index: 6, kind: input, shape index: {}]
  %s7 = inlined_call_operand.vmem [shape: f32[1024,256], index: 7, kind: output, shape index: {}]
  %s8 = sld [smem:[#allocation0]]
  $region61: #{rede_multiplas_saidas.1} parent=0
    _
  %s10 = ssub.s32 1, %s8
  %s11 = scalar_select 0, %s10, %s8
  loop: start=0, step=1, limit=4
  $region2: #{rede_multiplas_saidas.1} parent=0 // loop_pre_header
    _
  $region3: #{rede_multiplas_saidas.1} parent=0 // loop_header
    %s13 = sphi 0, %s17
    %p14 = scmp.ge.s32.totalorder %s13, 4
    %s23 = sphi 0, %s25
    %s26 = sphi 0, %s23
    %s27 = sphi 0, %s26
    %s43 = sphi 0, %s27
    %s47 = sphi 0, %s47
    %s49 = sphi 0, %s47
    %s50 = sphi 0, %s49
    %s64 = sphi 0, %s50
    %s68 = sphi 0, %s68
    %s70 = sphi 0, %s68
    %s71 = sphi 0, %s70
    %s85 = sphi 0, %s71
    %s89 = sphi 0, %s89
    %s91 = sphi 0, %s89
    %s92 = sphi 0, %s91
    %s106 = sphi 0, %s92
    %s110 = sphi 0, %s110
    %s112 = sphi 0, %s110
    %s113 = sphi 0, %s112
    %s127 = sphi 0, %s113
    %s131 = sphi 0, %s131
    %s133 = sphi 0, %s131
    %s134 = sphi 0, %s133
    %s148 = sphi 0, %s134
    %s152 = sphi 0, %s152
    %s154 = sphi 0, %s152
    %s155 = sphi 0, %s154
    %s169 = sphi 0, %s155
    %s175 = sphi 0, %s177
    %s178 = sphi 0, %s175
    %s179 = sphi 0, %s178
    %s195 = sphi 0, %s179
  $region4: #{rede_multiplas_saidas.1} parent=0 // loop_header_branch
    %16 = sbr.rel (%p14) target = $region8
  $region5: #{rede_multiplas_saidas.1} parent=0 // loop_body
    %s18 = ssub.s32 %s13, 1
    %s19 = ssub.s32 %s13, 2
    %s20 = sadd.s32 %s13, 1
    %s21 = ssub.s32 %s13, %s20
    %p22 = scmp.eq.s32.totalorder %s21, 0
    %s24 = sadd.s32 %s23, 1
    %s25 = scalar_select %p22, %s23, %s24
    %p28 = pneg %p22
    %p29 = scmp.eq.s32.totalorder %s13, 1
    %p30 = por %p28, %p29
    %p31 = scmp.ne.s32.totalorder %s23, %s26
    %p32 = scmp.eq.s32.totalorder %s13, 0
    %p33 = por %p31, %p32
    %p34 = scmp.ne.s32.totalorder %s23, %s26
    %p35 = scmp.eq.s32.totalorder %s18, 1
    %p36 = por %p34, %p35
    %p37 = scmp.ne.s32.totalorder %s26, %s27
    %p38 = scmp.eq.s32.totalorder %s18, 0
    %p39 = por %p37, %p38
    %p40 = scmp.ne.s32.totalorder %s26, %s27
    %p41 = scmp.eq.s32.totalorder %s19, 1
    %p42 = por %p40, %p41
    %p44 = scmp.ne.s32.totalorder %s27, %s43
    %p45 = scmp.eq.s32.totalorder %s19, 0
    %p46 = por %p44, %p45
    %s48 = sadd.s32 %s47, 1
    %p51 = scmp.eq.s32.totalorder %s13, 1
    %p52 = scmp.ne.s32.totalorder %s47, %s49
    %p53 = scmp.eq.s32.totalorder %s13, 0
    %p54 = por %p52, %p53
    %p55 = scmp.ne.s32.totalorder %s47, %s49
    %p56 = scmp.eq.s32.totalorder %s18, 1
    %p57 = por %p55, %p56
    %p58 = scmp.ne.s32.totalorder %s49, %s50
    %p59 = scmp.eq.s32.totalorder %s18, 0
    %p60 = por %p58, %p59
    %p61 = scmp.ne.s32.totalorder %s49, %s50
    %p62 = scmp.eq.s32.totalorder %s19, 1
    %p63 = por %p61, %p62
    %p65 = scmp.ne.s32.totalorder %s50, %s64
    %p66 = scmp.eq.s32.totalorder %s19, 0
    %p67 = por %p65, %p66
    %s69 = sadd.s32 %s68, 1
    %p72 = scmp.eq.s32.totalorder %s13, 1
    %p73 = scmp.ne.s32.totalorder %s68, %s70
    %p74 = scmp.eq.s32.totalorder %s13, 0
    %p75 = por %p73, %p74
    %p76 = scmp.ne.s32.totalorder %s68, %s70
    %p77 = scmp.eq.s32.totalorder %s18, 1
    %p78 = por %p76, %p77
    %p79 = scmp.ne.s32.totalorder %s70, %s71
    %p80 = scmp.eq.s32.totalorder %s18, 0
    %p81 = por %p79, %p80
    %p82 = scmp.ne.s32.totalorder %s70, %s71
    %p83 = scmp.eq.s32.totalorder %s19, 1
    %p84 = por %p82, %p83
    %p86 = scmp.ne.s32.totalorder %s71, %s85
    %p87 = scmp.eq.s32.totalorder %s19, 0
    %p88 = por %p86, %p87
    %s90 = sadd.s32 %s89, 1
    %p93 = scmp.eq.s32.totalorder %s13, 1
    %p94 = scmp.ne.s32.totalorder %s89, %s91
    %p95 = scmp.eq.s32.totalorder %s13, 0
    %p96 = por %p94, %p95
    %p97 = scmp.ne.s32.totalorder %s89, %s91
    %p98 = scmp.eq.s32.totalorder %s18, 1
    %p99 = por %p97, %p98
    %p100 = scmp.ne.s32.totalorder %s91, %s92
    %p101 = scmp.eq.s32.totalorder %s18, 0
    %p102 = por %p100, %p101
    %p103 = scmp.ne.s32.totalorder %s91, %s92
    %p104 = scmp.eq.s32.totalorder %s19, 1
    %p105 = por %p103, %p104
    %p107 = scmp.ne.s32.totalorder %s92, %s106
    %p108 = scmp.eq.s32.totalorder %s19, 0
    %p109 = por %p107, %p108
    %s111 = sadd.s32 %s110, 1
    %p114 = scmp.eq.s32.totalorder %s13, 1
    %p115 = scmp.ne.s32.totalorder %s110, %s112
    %p116 = scmp.eq.s32.totalorder %s13, 0
    %p117 = por %p115, %p116
    %p118 = scmp.ne.s32.totalorder %s110, %s112
    %p119 = scmp.eq.s32.totalorder %s18, 1
    %p120 = por %p118, %p119
    %p121 = scmp.ne.s32.totalorder %s112, %s113
    %p122 = scmp.eq.s32.totalorder %s18, 0
    %p123 = por %p121, %p122
    %p124 = scmp.ne.s32.totalorder %s112, %s113
    %p125 = scmp.eq.s32.totalorder %s19, 1
    %p126 = por %p124, %p125
    %p128 = scmp.ne.s32.totalorder %s113, %s127
    %p129 = scmp.eq.s32.totalorder %s19, 0
    %p130 = por %p128, %p129
    %s132 = sadd.s32 %s131, 1
    %p135 = scmp.eq.s32.totalorder %s13, 1
    %p136 = scmp.ne.s32.totalorder %s131, %s133
    %p137 = scmp.eq.s32.totalorder %s13, 0
    %p138 = por %p136, %p137
    %p139 = scmp.ne.s32.totalorder %s131, %s133
    %p140 = scmp.eq.s32.totalorder %s18, 1
    %p141 = por %p139, %p140
    %p142 = scmp.ne.s32.totalorder %s133, %s134
    %p143 = scmp.eq.s32.totalorder %s18, 0
    %p144 = por %p142, %p143
    %p145 = scmp.ne.s32.totalorder %s133, %s134
    %p146 = scmp.eq.s32.totalorder %s19, 1
    %p147 = por %p145, %p146
    %p149 = scmp.ne.s32.totalorder %s134, %s148
    %p150 = scmp.eq.s32.totalorder %s19, 0
    %p151 = por %p149, %p150
    %s153 = sadd.s32 %s152, 1
    %p156 = scmp.eq.s32.totalorder %s13, 1
    %p157 = scmp.ne.s32.totalorder %s152, %s154
    %p158 = scmp.eq.s32.totalorder %s13, 0
    %p159 = por %p157, %p158
    %p160 = scmp.ne.s32.totalorder %s152, %s154
    %p161 = scmp.eq.s32.totalorder %s18, 1
    %p162 = por %p160, %p161
    %p163 = scmp.ne.s32.totalorder %s154, %s155
    %p164 = scmp.eq.s32.totalorder %s18, 0
    %p165 = por %p163, %p164
    %p166 = scmp.ne.s32.totalorder %s154, %s155
    %p167 = scmp.eq.s32.totalorder %s19, 1
    %p168 = por %p166, %p167
    %p170 = scmp.ne.s32.totalorder %s155, %s169
    %p171 = scmp.eq.s32.totalorder %s19, 0
    %p172 = por %p170, %p171
    %s173 = ssub.s32 %s13, %s20
    %p174 = scmp.eq.s32.totalorder %s173, 0
    %s176 = sadd.s32 %s175, 1
    %s177 = scalar_select %p174, %s175, %s176
    %p180 = pneg %p174
    %p181 = scmp.eq.s32.totalorder %s13, 1
    %p182 = por %p180, %p181
    %p183 = scmp.ne.s32.totalorder %s175, %s178
    %p184 = scmp.eq.s32.totalorder %s13, 0
    %p185 = por %p183, %p184
    %p186 = scmp.ne.s32.totalorder %s175, %s178
    %p187 = scmp.eq.s32.totalorder %s18, 1
    %p188 = por %p186, %p187
    %p189 = scmp.ne.s32.totalorder %s178, %s179
    %p190 = scmp.eq.s32.totalorder %s18, 0
    %p191 = por %p189, %p190
    %p192 = scmp.ne.s32.totalorder %s178, %s179
    %p193 = scmp.eq.s32.totalorder %s19, 1
    %p194 = por %p192, %p193
    %p196 = scmp.ne.s32.totalorder %s179, %s195
    %p197 = scmp.eq.s32.totalorder %s19, 0
    %p198 = por %p196, %p197
    %p199 = scmp.le.s32.totalorder 1, %s13
    %p200 = scmp.lt.s32.totalorder %s13, 3
    %p201 = pnand %p199, %p200
    %p202 = pneg %p201
    // Predicated region
    $region9: #{rede_multiplas_saidas.1} parent=5 // pred_check
      _
    $region10: #{rede_multiplas_saidas.1} parent=5 // pred_check_branch
      %204 = sbr.rel (%p201) target = $region12
    $region11: #{rede_multiplas_saidas.1} parent=5 // pred_region
      %s205 = ssub.s32 %s13, 1
      // Predicated region
      $region13: #{rede_multiplas_saidas.1} parent=11 // pred_check
        %p206 = pneg %p60
      $region14: #{rede_multiplas_saidas.1} parent=11 // pred_check_branch
        %208 = sbr.rel (%p206) target = $region16
      $region15: #{rede_multiplas_saidas.1} parent=11 // pred_region
        _
      $region16: #{rede_multiplas_saidas.1} parent=11 // pred_fallthru
        _
      // Predicated region
      $region17: #{rede_multiplas_saidas.1} parent=11 // pred_check
        %p209 = pneg %p81
      $region18: #{rede_multiplas_saidas.1} parent=11 // pred_check_branch
        %211 = sbr.rel (%p209) target = $region20
      $region19: #{rede_multiplas_saidas.1} parent=11 // pred_region
        _
      $region20: #{rede_multiplas_saidas.1} parent=11 // pred_fallthru
        _
      // Predicated region
      $region21: #{rede_multiplas_saidas.1} parent=11 // pred_check
        %p212 = pneg %p102
      $region22: #{rede_multiplas_saidas.1} parent=11 // pred_check_branch
        %214 = sbr.rel (%p212) target = $region24
      $region23: #{rede_multiplas_saidas.1} parent=11 // pred_region
        _
      $region24: #{rede_multiplas_saidas.1} parent=11 // pred_fallthru
        _
      // Predicated region
      $region25: #{rede_multiplas_saidas.1} parent=11 // pred_check
        %p215 = pneg %p123
      $region26: #{rede_multiplas_saidas.1} parent=11 // pred_check_branch
        %217 = sbr.rel (%p215) target = $region28
      $region27: #{rede_multiplas_saidas.1} parent=11 // pred_region
        _
      $region28: #{rede_multiplas_saidas.1} parent=11 // pred_fallthru
        _
      // Predicated region
      $region29: #{rede_multiplas_saidas.1} parent=11 // pred_check
        %p218 = pneg %p144
      $region30: #{rede_multiplas_saidas.1} parent=11 // pred_check_branch
        %220 = sbr.rel (%p218) target = $region32
      $region31: #{rede_multiplas_saidas.1} parent=11 // pred_region
        _
      $region32: #{rede_multiplas_saidas.1} parent=11 // pred_fallthru
        _
      // Predicated region
      $region33: #{rede_multiplas_saidas.1} parent=11 // pred_check
        %p221 = pneg %p165
      $region34: #{rede_multiplas_saidas.1} parent=11 // pred_check_branch
        %223 = sbr.rel (%p221) target = $region36
      $region35: #{rede_multiplas_saidas.1} parent=11 // pred_region
        _
      $region36: #{rede_multiplas_saidas.1} parent=11 // pred_fallthru
        _
    $region12: #{rede_multiplas_saidas.1} parent=5 // pred_fallthru
      _
    %p224 = scmp.lt.s32.totalorder %s13, 2
    // Predicated region
    $region37: #{rede_multiplas_saidas.1} parent=5 // pred_check
      %p225 = pneg %p224
    $region38: #{rede_multiplas_saidas.1} parent=5 // pred_check_branch
      %227 = sbr.rel (%p225) target = $region40
    $region39: #{rede_multiplas_saidas.1} parent=5 // pred_region
      // Predicated region
      $region41: #{rede_multiplas_saidas.1} parent=39 // pred_check
        %p228 = pneg %p33
      $region42: #{rede_multiplas_saidas.1} parent=39 // pred_check_branch
        %230 = sbr.rel (%p228) target = $region44
      $region43: #{rede_multiplas_saidas.1} parent=39 // pred_region
        %s231 = smul.u32 64, %s13
        %p232 = scmp.lt.s32.totalorder %s231, 127
        %s233 = scalar_select %p232, %s231, 127
        %s234 = smul.addr %s233, 4
        %s235 = scalar_lea.vmem %s0, %s234
        %s236 = smul.u32 64, %s13
      $region44: #{rede_multiplas_saidas.1} parent=39 // pred_fallthru
        _
    $region40: #{rede_multiplas_saidas.1} parent=5 // pred_fallthru
      _
    %p237 = scmp.le.s32.totalorder 1, %s13
    %p238 = scmp.lt.s32.totalorder %s13, 3
    %p239 = pnand %p237, %p238
    %p240 = pneg %p239
    // Predicated region
    $region45: #{rede_multiplas_saidas.1} parent=5 // pred_check
      _
    $region46: #{rede_multiplas_saidas.1} parent=5 // pred_check_branch
      %242 = sbr.rel (%p239) target = $region48
    $region47: #{rede_multiplas_saidas.1} parent=5 // pred_region
      %s243 = ssub.s32 %s13, 1
      %s244 = smul.u32 64, %s18
      %p245 = scmp.lt.s32.totalorder %s244, 127
      %s246 = scalar_select %p245, %s244, 127
      %s247 = smul.addr %s246, 4
      %s248 = scalar_lea.vmem %s0, %s247
      %p249 = pneg %p39
      %p250 = pneg %p36
      %p251 = pneg %p60
      %p252 = pneg %p57
      %p253 = pneg %p81
      %p254 = pneg %p78
      %p255 = pneg %p102
      %p256 = pneg %p99
      %p257 = pneg %p123
      %p258 = pneg %p120
      %p259 = pneg %p144
      %p260 = pneg %p141
      %p261 = pneg %p165
      %p262 = pneg %p162
      %p263 = pneg %p191
      %p264 = pneg %p188
      %s265 = smul.u32 64, %s18
      %p266 = scmp.lt.s32.totalorder %s265, 127
      %s267 = scalar_select %p266, %s265, 127
      %s268 = smul.addr %s267, 2
      %s269 = smul.addr %s268, 8
      %s270 = scalar_lea.vmem %s7, %s269
      %s271 = smul.u32 64, %s18
      %p272 = scmp.lt.s32.totalorder %s271, 127
      %s273 = scalar_select %p272, %s271, 127
      %s274 = smul.addr %s273, 4
      %s275 = scalar_lea.vmem %s0, %s274
      %s276 = smul.u32 64, %s18
      %s277 = smul.u32 64, %s18
      %p278 = scmp.lt.s32.totalorder %s277, 127
      %s279 = scalar_select %p278, %s277, 127
      %s280 = smul.addr %s279, 2
      %s281 = smul.addr %s280, 8
      %s282 = scalar_lea.vmem %s7, %s281
      %s283 = smul.u32 64, %s18
      %v284 = vld [vmem:[%s275] sm:$0xf]
      %v285 = vld [vmem:[%s275 + $0x4] sm:$0xf]
      %v286 = vld [vmem:[%s275 + $0x8] sm:$0xf]
      %v287 = vld [vmem:[%s275 + $0xc] sm:$0xf]
      %v288 = vld [vmem:[%s275 + $0x10] sm:$0xf]
      %v289 = vld [vmem:[%s275 + $0x14] sm:$0xf]
      %v290 = vld [vmem:[%s275 + $0x18] sm:$0xf]
      %v291 = vld [vmem:[%s275 + $0x1c] sm:$0xf]
      %v292 = vld [vmem:[%s275 + $0x20] sm:$0xf]
      %v293 = vld [vmem:[%s275 + $0x24] sm:$0xf]
      %v294 = vld [vmem:[%s275 + $0x28] sm:$0xf]
      %v295 = vld [vmem:[%s275 + $0x2c] sm:$0xf]
      %v296 = vld [vmem:[%s275 + $0x30] sm:$0xf]
      %v297 = vld [vmem:[%s275 + $0x34] sm:$0xf]
      %v298 = vld [vmem:[%s275 + $0x38] sm:$0xf]
      %v299 = vld [vmem:[%s275 + $0x3c] sm:$0xf]
      %v300 = vld [vmem:[%s275 + $0x40] sm:$0xf]
      %v301 = vld [vmem:[%s275 + $0x44] sm:$0xf]
      %v302 = vld [vmem:[%s275 + $0x48] sm:$0xf]
      %v303 = vld [vmem:[%s275 + $0x4c] sm:$0xf]
      %v304 = vld [vmem:[%s275 + $0x50] sm:$0xf]
      %v305 = vld [vmem:[%s275 + $0x54] sm:$0xf]
      %v306 = vld [vmem:[%s275 + $0x58] sm:$0xf]
      %v307 = vld [vmem:[%s275 + $0x5c] sm:$0xf]
      %v308 = vld [vmem:[%s275 + $0x60] sm:$0xf]
      %v309 = vld [vmem:[%s275 + $0x64] sm:$0xf]
      %v310 = vld [vmem:[%s275 + $0x68] sm:$0xf]
      %v311 = vld [vmem:[%s275 + $0x6c] sm:$0xf]
      %v312 = vld [vmem:[%s275 + $0x70] sm:$0xf]
      %v313 = vld [vmem:[%s275 + $0x74] sm:$0xf]
      %v314 = vld [vmem:[%s275 + $0x78] sm:$0xf]
      %v315 = vld [vmem:[%s275 + $0x7c] sm:$0xf]
      %v316 = vld [vmem:[%s275 + $0x80] sm:$0xf]
      %v317 = vld [vmem:[%s275 + $0x84] sm:$0xf]
      %v318 = vld [vmem:[%s275 + $0x88] sm:$0xf]
      %v319 = vld [vmem:[%s275 + $0x8c] sm:$0xf]
      %v320 = vld [vmem:[%s275 + $0x90] sm:$0xf]
      %v321 = vld [vmem:[%s275 + $0x94] sm:$0xf]
      %v322 = vld [vmem:[%s275 + $0x98] sm:$0xf]
      %v323 = vld [vmem:[%s275 + $0x9c] sm:$0xf]
      %v324 = vld [vmem:[%s275 + $0xa0] sm:$0xf]
      %v325 = vld [vmem:[%s275 + $0xa4] sm:$0xf]
      %v326 = vld [vmem:[%s275 + $0xa8] sm:$0xf]
      %v327 = vld [vmem:[%s275 + $0xac] sm:$0xf]
      %v328 = vld [vmem:[%s275 + $0xb0] sm:$0xf]
      %v329 = vld [vmem:[%s275 + $0xb4] sm:$0xf]
      %v330 = vld [vmem:[%s275 + $0xb8] sm:$0xf]
      %v331 = vld [vmem:[%s275 + $0xbc] sm:$0xf]
      %v332 = vld [vmem:[%s275 + $0xc0] sm:$0xf]
      %v333 = vld [vmem:[%s275 + $0xc4] sm:$0xf]
      %v334 = vld [vmem:[%s275 + $0xc8] sm:$0xf]
      %v335 = vld [vmem:[%s275 + $0xcc] sm:$0xf]
      %v336 = vld [vmem:[%s275 + $0xd0] sm:$0xf]
      %v337 = vld [vmem:[%s275 + $0xd4] sm:$0xf]
      %v338 = vld [vmem:[%s275 + $0xd8] sm:$0xf]
      %v339 = vld [vmem:[%s275 + $0xdc] sm:$0xf]
      %v340 = vld [vmem:[%s275 + $0xe0] sm:$0xf]
      %v341 = vld [vmem:[%s275 + $0xe4] sm:$0xf]
      %v342 = vld [vmem:[%s275 + $0xe8] sm:$0xf]
      %v343 = vld [vmem:[%s275 + $0xec] sm:$0xf]
      %v344 = vld [vmem:[%s275 + $0xf0] sm:$0xf]
      %v345 = vld [vmem:[%s275 + $0xf4] sm:$0xf]
      %v346 = vld [vmem:[%s275 + $0xf8] sm:$0xf]
      %v347 = vld [vmem:[%s275 + $0xfc] sm:$0xf]
      %v348 = vld [vmem:[%s1] sm:$0xf]
      %v349 = vld [vmem:[%s1 + $0x4] sm:$0xf]
      %v350 = vld [vmem:[%s1 + $0x8] sm:$0xf]
      %v351 = vld [vmem:[%s1 + $0xc] sm:$0xf]
      %v352 = vld [vmem:[%s1 + $0x10] sm:$0xf]
      %v353 = vld [vmem:[%s1 + $0x14] sm:$0xf]
      %v354 = vld [vmem:[%s1 + $0x18] sm:$0xf]
      %v355 = vld [vmem:[%s1 + $0x1c] sm:$0xf]
      %v356 = vld [vmem:[%s1 + $0x20] sm:$0xf]
      %v357 = vld [vmem:[%s1 + $0x24] sm:$0xf]
      %v358 = vld [vmem:[%s1 + $0x28] sm:$0xf]
      %v359 = vld [vmem:[%s1 + $0x2c] sm:$0xf]
      %v360 = vld [vmem:[%s1 + $0x30] sm:$0xf]
      %v361 = vld [vmem:[%s1 + $0x34] sm:$0xf]
      %v362 = vld [vmem:[%s1 + $0x38] sm:$0xf]
      %v363 = vld [vmem:[%s1 + $0x3c] sm:$0xf]
      %v364 = vld [vmem:[%s2] sm:$0x1]
      %v366 = vperm.slane %v364, 0
      %v432 = vunpack.c.l.b16 %v284
      %v433 = vunpack.c.l.b16 %v285
      %v434 = vunpack.c.l.b16 %v286
      %v435 = vunpack.c.l.b16 %v287
      %v436 = vunpack.c.l.b16 %v288
      %v437 = vunpack.c.l.b16 %v289
      %v438 = vunpack.c.l.b16 %v290
      %v439 = vunpack.c.l.b16 %v291
      %v440 = vunpack.c.l.b16 %v292
      %v441 = vunpack.c.l.b16 %v293
      %v442 = vunpack.c.l.b16 %v294
      %v443 = vunpack.c.l.b16 %v295
      %v444 = vunpack.c.l.b16 %v296
      %v445 = vunpack.c.l.b16 %v297
      %v446 = vunpack.c.l.b16 %v298
      %v447 = vunpack.c.l.b16 %v299
      %v448 = vunpack.c.l.b16 %v300
      %v449 = vunpack.c.l.b16 %v301
      %v450 = vunpack.c.l.b16 %v302
      %v451 = vunpack.c.l.b16 %v303
      %v452 = vunpack.c.l.b16 %v304
      %v453 = vunpack.c.l.b16 %v305
      %v454 = vunpack.c.l.b16 %v306
      %v455 = vunpack.c.l.b16 %v307
      %v456 = vunpack.c.l.b16 %v308
      %v457 = vunpack.c.l.b16 %v309
      %v458 = vunpack.c.l.b16 %v310
      %v459 = vunpack.c.l.b16 %v311
      %v460 = vunpack.c.l.b16 %v312
      %v461 = vunpack.c.l.b16 %v313
      %v462 = vunpack.c.l.b16 %v314
      %v463 = vunpack.c.l.b16 %v315
      %v464 = vunpack.c.l.b16 %v316
      %v465 = vunpack.c.l.b16 %v317
      %v466 = vunpack.c.l.b16 %v318
      %v467 = vunpack.c.l.b16 %v319
      %v468 = vunpack.c.l.b16 %v320
      %v469 = vunpack.c.l.b16 %v321
      %v470 = vunpack.c.l.b16 %v322
      %v471 = vunpack.c.l.b16 %v323
      %v472 = vunpack.c.l.b16 %v324
      %v473 = vunpack.c.l.b16 %v325
      %v474 = vunpack.c.l.b16 %v326
      %v475 = vunpack.c.l.b16 %v327
      %v476 = vunpack.c.l.b16 %v328
      %v477 = vunpack.c.l.b16 %v329
      %v478 = vunpack.c.l.b16 %v330
      %v479 = vunpack.c.l.b16 %v331
      %v480 = vunpack.c.l.b16 %v332
      %v481 = vunpack.c.l.b16 %v333
      %v482 = vunpack.c.l.b16 %v334
      %v483 = vunpack.c.l.b16 %v335
      %v484 = vunpack.c.l.b16 %v336
      %v485 = vunpack.c.l.b16 %v337
      %v486 = vunpack.c.l.b16 %v338
      %v487 = vunpack.c.l.b16 %v339
      %v488 = vunpack.c.l.b16 %v340
      %v489 = vunpack.c.l.b16 %v341
      %v490 = vunpack.c.l.b16 %v342
      %v491 = vunpack.c.l.b16 %v343
      %v492 = vunpack.c.l.b16 %v344
      %v493 = vunpack.c.l.b16 %v345
      %v494 = vunpack.c.l.b16 %v346
      %v495 = vunpack.c.l.b16 %v347
      %v496 = vpack.c.b16 %v433, %v432
      %v497 = vpack.c.b16 %v435, %v434
      %v498 = vpack.c.b16 %v437, %v436
      %v499 = vpack.c.b16 %v439, %v438
      %v500 = vpack.c.b16 %v441, %v440
      %v501 = vpack.c.b16 %v443, %v442
      %v502 = vpack.c.b16 %v445, %v444
      %v503 = vpack.c.b16 %v447, %v446
      %v504 = vpack.c.b16 %v449, %v448
      %v505 = vpack.c.b16 %v451, %v450
      %v506 = vpack.c.b16 %v453, %v452
      %v507 = vpack.c.b16 %v455, %v454
      %v508 = vpack.c.b16 %v457, %v456
      %v509 = vpack.c.b16 %v459, %v458
      %v510 = vpack.c.b16 %v461, %v460
      %v511 = vpack.c.b16 %v463, %v462
      %v512 = vpack.c.b16 %v465, %v464
      %v513 = vpack.c.b16 %v467, %v466
      %v514 = vpack.c.b16 %v469, %v468
      %v515 = vpack.c.b16 %v471, %v470
      %v516 = vpack.c.b16 %v473, %v472
      %v517 = vpack.c.b16 %v475, %v474
      %v518 = vpack.c.b16 %v477, %v476
      %v519 = vpack.c.b16 %v479, %v478
      %v520 = vpack.c.b16 %v481, %v480
      %v521 = vpack.c.b16 %v483, %v482
      %v522 = vpack.c.b16 %v485, %v484
      %v523 = vpack.c.b16 %v487, %v486
      %v524 = vpack.c.b16 %v489, %v488
      %v525 = vpack.c.b16 %v491, %v490
      %v526 = vpack.c.b16 %v493, %v492
      %v527 = vpack.c.b16 %v495, %v494
      %v576 = vunpack.c.l.b16 %v348
      %v577 = vunpack.c.l.b16 %v349
      %v578 = vunpack.c.l.b16 %v350
      %v579 = vunpack.c.l.b16 %v351
      %v580 = vunpack.c.l.b16 %v352
      %v581 = vunpack.c.l.b16 %v353
      %v582 = vunpack.c.l.b16 %v354
      %v583 = vunpack.c.l.b16 %v355
      %v584 = vunpack.c.l.b16 %v356
      %v585 = vunpack.c.l.b16 %v357
      %v586 = vunpack.c.l.b16 %v358
      %v587 = vunpack.c.l.b16 %v359
      %v588 = vunpack.c.l.b16 %v360
      %v589 = vunpack.c.l.b16 %v361
      %v590 = vunpack.c.l.b16 %v362
      %v591 = vunpack.c.l.b16 %v363
      %v592 = vpack.c.b16 %v577, %v576
      %v593 = vpack.c.b16 %v579, %v578
      %v594 = vpack.c.b16 %v581, %v580
      %v595 = vpack.c.b16 %v583, %v582
      %v596 = vpack.c.b16 %v585, %v584
      %v597 = vpack.c.b16 %v587, %v586
      %v598 = vpack.c.b16 %v589, %v588
      %v599 = vpack.c.b16 %v591, %v590
      %608 = vmatpush.bf16.msra.mxu0 %v599
      %609 = vmatpush.bf16.msra.mxu0 %v598
      %610 = vmatpush.bf16.msra.mxu0 %v597
      %611 = vmatpush.bf16.msra.mxu0 %v596
      %612 = vmatpush.bf16.msra.mxu0 %v595
      %613 = vmatpush.bf16.msra.mxu0 %v594
      %614 = vmatpush.bf16.msra.mxu0 %v593
      %615 = vmatpush.bf16.msra.mxu0 %v592
      %616 = vmatmul.bf16.gmra.mxu0 %v496
      %v617 = vpop.f32.mrf.mxu0
      %v618 = vadd.f32 %v366, %v617
      %v619 = vpop.f32.mrf.mxu0
      %v620 = vadd.f32 %v366, %v619
      %621 = vmatmul.bf16.gmra.mxu0 %v497
      %v622 = vpop.f32.mrf.mxu0
      %v623 = vadd.f32 %v366, %v622
      %v624 = vpop.f32.mrf.mxu0
      %v625 = vadd.f32 %v366, %v624
      %626 = vmatmul.bf16.gmra.mxu0 %v498
      %v627 = vpop.f32.mrf.mxu0
      %v628 = vadd.f32 %v366, %v627
      %v629 = vpop.f32.mrf.mxu0
      %v630 = vadd.f32 %v366, %v629
      %631 = vmatmul.bf16.gmra.mxu0 %v499
      %v632 = vpop.f32.mrf.mxu0
      %v633 = vadd.f32 %v366, %v632
      %v634 = vpop.f32.mrf.mxu0
      %v635 = vadd.f32 %v366, %v634
      %636 = vmatmul.bf16.gmra.mxu0 %v500
      %v637 = vpop.f32.mrf.mxu0
      %v638 = vadd.f32 %v366, %v637
      %v639 = vpop.f32.mrf.mxu0
      %v640 = vadd.f32 %v366, %v639
      %641 = vmatmul.bf16.gmra.mxu0 %v501
      %v642 = vpop.f32.mrf.mxu0
      %v643 = vadd.f32 %v366, %v642
      %v644 = vpop.f32.mrf.mxu0
      %v645 = vadd.f32 %v366, %v644
      %646 = vmatmul.bf16.gmra.mxu0 %v502
      %v647 = vpop.f32.mrf.mxu0
      %v648 = vadd.f32 %v366, %v647
      %v649 = vpop.f32.mrf.mxu0
      %v650 = vadd.f32 %v366, %v649
      %651 = vmatmul.bf16.gmra.mxu0 %v503
      %v652 = vpop.f32.mrf.mxu0
      %v653 = vadd.f32 %v366, %v652
      %v654 = vpop.f32.mrf.mxu0
      %v655 = vadd.f32 %v366, %v654
      %656 = vmatmul.bf16.gmra.mxu0 %v504
      %v657 = vpop.f32.mrf.mxu0
      %v658 = vadd.f32 %v366, %v657
      %v659 = vpop.f32.mrf.mxu0
      %v660 = vadd.f32 %v366, %v659
      %661 = vmatmul.bf16.gmra.mxu0 %v505
      %v662 = vpop.f32.mrf.mxu0
      %v663 = vadd.f32 %v366, %v662
      %v664 = vpop.f32.mrf.mxu0
      %v665 = vadd.f32 %v366, %v664
      %666 = vmatmul.bf16.gmra.mxu0 %v506
      %v667 = vpop.f32.mrf.mxu0
      %v668 = vadd.f32 %v366, %v667
      %v669 = vpop.f32.mrf.mxu0
      %v670 = vadd.f32 %v366, %v669
      %671 = vmatmul.bf16.gmra.mxu0 %v507
      %v672 = vpop.f32.mrf.mxu0
      %v673 = vadd.f32 %v366, %v672
      %v674 = vpop.f32.mrf.mxu0
      %v675 = vadd.f32 %v366, %v674
      %676 = vmatmul.bf16.gmra.mxu0 %v508
      %v677 = vpop.f32.mrf.mxu0
      %v678 = vadd.f32 %v366, %v677
      %v679 = vpop.f32.mrf.mxu0
      %v680 = vadd.f32 %v366, %v679
      %681 = vmatmul.bf16.gmra.mxu0 %v509
      %v682 = vpop.f32.mrf.mxu0
      %v683 = vadd.f32 %v366, %v682
      %v684 = vpop.f32.mrf.mxu0
      %v685 = vadd.f32 %v366, %v684
      %686 = vmatmul.bf16.gmra.mxu0 %v510
      %v687 = vpop.f32.mrf.mxu0
      %v688 = vadd.f32 %v366, %v687
      %v689 = vpop.f32.mrf.mxu0
      %v690 = vadd.f32 %v366, %v689
      %691 = vmatmul.bf16.gmra.mxu0 %v511
      %v692 = vpop.f32.mrf.mxu0
      %v693 = vadd.f32 %v366, %v692
      %v694 = vpop.f32.mrf.mxu0
      %v695 = vadd.f32 %v366, %v694
      %696 = vmatmul.bf16.gmra.mxu0 %v512
      %v697 = vpop.f32.mrf.mxu0
      %v698 = vadd.f32 %v366, %v697
      %v699 = vpop.f32.mrf.mxu0
      %v700 = vadd.f32 %v366, %v699
      %701 = vmatmul.bf16.gmra.mxu0 %v513
      %v702 = vpop.f32.mrf.mxu0
      %v703 = vadd.f32 %v366, %v702
      %v704 = vpop.f32.mrf.mxu0
      %v705 = vadd.f32 %v366, %v704
      %706 = vmatmul.bf16.gmra.mxu0 %v514
      %v707 = vpop.f32.mrf.mxu0
      %v708 = vadd.f32 %v366, %v707
      %v709 = vpop.f32.mrf.mxu0
      %v710 = vadd.f32 %v366, %v709
      %711 = vmatmul.bf16.gmra.mxu0 %v515
      %v712 = vpop.f32.mrf.mxu0
      %v713 = vadd.f32 %v366, %v712
      %v714 = vpop.f32.mrf.mxu0
      %v715 = vadd.f32 %v366, %v714
      %716 = vmatmul.bf16.gmra.mxu0 %v516
      %v717 = vpop.f32.mrf.mxu0
      %v718 = vadd.f32 %v366, %v717
      %v719 = vpop.f32.mrf.mxu0
      %v720 = vadd.f32 %v366, %v719
      %721 = vmatmul.bf16.gmra.mxu0 %v517
      %v722 = vpop.f32.mrf.mxu0
      %v723 = vadd.f32 %v366, %v722
      %v724 = vpop.f32.mrf.mxu0
      %v725 = vadd.f32 %v366, %v724
      %726 = vmatmul.bf16.gmra.mxu0 %v518
      %v727 = vpop.f32.mrf.mxu0
      %v728 = vadd.f32 %v366, %v727
      %v729 = vpop.f32.mrf.mxu0
      %v730 = vadd.f32 %v366, %v729
      %731 = vmatmul.bf16.gmra.mxu0 %v519
      %v732 = vpop.f32.mrf.mxu0
      %v733 = vadd.f32 %v366, %v732
      %v734 = vpop.f32.mrf.mxu0
      %v735 = vadd.f32 %v366, %v734
      %736 = vmatmul.bf16.gmra.mxu0 %v520
      %v737 = vpop.f32.mrf.mxu0
      %v738 = vadd.f32 %v366, %v737
      %v739 = vpop.f32.mrf.mxu0
      %v740 = vadd.f32 %v366, %v739
      %741 = vmatmul.bf16.gmra.mxu0 %v521
      %v742 = vpop.f32.mrf.mxu0
      %v743 = vadd.f32 %v366, %v742
      %v744 = vpop.f32.mrf.mxu0
      %v745 = vadd.f32 %v366, %v744
      %746 = vmatmul.bf16.gmra.mxu0 %v522
      %v747 = vpop.f32.mrf.mxu0
      %v748 = vadd.f32 %v366, %v747
      %v749 = vpop.f32.mrf.mxu0
      %v750 = vadd.f32 %v366, %v749
      %751 = vmatmul.bf16.gmra.mxu0 %v523
      %v752 = vpop.f32.mrf.mxu0
      %v753 = vadd.f32 %v366, %v752
      %v754 = vpop.f32.mrf.mxu0
      %v755 = vadd.f32 %v366, %v754
      %756 = vmatmul.bf16.gmra.mxu0 %v524
      %v757 = vpop.f32.mrf.mxu0
      %v758 = vadd.f32 %v366, %v757
      %v759 = vpop.f32.mrf.mxu0
      %v760 = vadd.f32 %v366, %v759
      %761 = vmatmul.bf16.gmra.mxu0 %v525
      %v762 = vpop.f32.mrf.mxu0
      %v763 = vadd.f32 %v366, %v762
      %v764 = vpop.f32.mrf.mxu0
      %v765 = vadd.f32 %v366, %v764
      %766 = vmatmul.bf16.gmra.mxu0 %v526
      %v767 = vpop.f32.mrf.mxu0
      %v768 = vadd.f32 %v366, %v767
      %v769 = vpop.f32.mrf.mxu0
      %v770 = vadd.f32 %v366, %v769
      %771 = vmatmul.bf16.gmra.mxu0 %v527
      %v772 = vpop.f32.mrf.mxu0
      %v773 = vadd.f32 %v366, %v772
      %v774 = vpop.f32.mrf.mxu0
      %v775 = vadd.f32 %v366, %v774
      %776 = vdwg.mxu0
      %v777 = vmax.f32 %v618, 0.0
      %v778 = vmax.f32 %v620, 0.0
      %v779 = vmax.f32 %v623, 0.0
      %v780 = vmax.f32 %v625, 0.0
      %v781 = vmax.f32 %v628, 0.0
      %v782 = vmax.f32 %v630, 0.0
      %v783 = vmax.f32 %v633, 0.0
      %v784 = vmax.f32 %v635, 0.0
      %v785 = vmax.f32 %v638, 0.0
      %v786 = vmax.f32 %v640, 0.0
      %v787 = vmax.f32 %v643, 0.0
      %v788 = vmax.f32 %v645, 0.0
      %v789 = vmax.f32 %v648, 0.0
      %v790 = vmax.f32 %v650, 0.0
      %v791 = vmax.f32 %v653, 0.0
      %v792 = vmax.f32 %v655, 0.0
      %v793 = vmax.f32 %v658, 0.0
      %v794 = vmax.f32 %v660, 0.0
      %v795 = vmax.f32 %v663, 0.0
      %v796 = vmax.f32 %v665, 0.0
      %v797 = vmax.f32 %v668, 0.0
      %v798 = vmax.f32 %v670, 0.0
      %v799 = vmax.f32 %v673, 0.0
      %v800 = vmax.f32 %v675, 0.0
      %v801 = vmax.f32 %v678, 0.0
      %v802 = vmax.f32 %v680, 0.0
      %v803 = vmax.f32 %v683, 0.0
      %v804 = vmax.f32 %v685, 0.0
      %v805 = vmax.f32 %v688, 0.0
      %v806 = vmax.f32 %v690, 0.0
      %v807 = vmax.f32 %v693, 0.0
      %v808 = vmax.f32 %v695, 0.0
      %v809 = vmax.f32 %v698, 0.0
      %v810 = vmax.f32 %v700, 0.0
      %v811 = vmax.f32 %v703, 0.0
      %v812 = vmax.f32 %v705, 0.0
      %v813 = vmax.f32 %v708, 0.0
      %v814 = vmax.f32 %v710, 0.0
      %v815 = vmax.f32 %v713, 0.0
      %v816 = vmax.f32 %v715, 0.0
      %v817 = vmax.f32 %v718, 0.0
      %v818 = vmax.f32 %v720, 0.0
      %v819 = vmax.f32 %v723, 0.0
      %v820 = vmax.f32 %v725, 0.0
      %v821 = vmax.f32 %v728, 0.0
      %v822 = vmax.f32 %v730, 0.0
      %v823 = vmax.f32 %v733, 0.0
      %v824 = vmax.f32 %v735, 0.0
      %v825 = vmax.f32 %v738, 0.0
      %v826 = vmax.f32 %v740, 0.0
      %v827 = vmax.f32 %v743, 0.0
      %v828 = vmax.f32 %v745, 0.0
      %v829 = vmax.f32 %v748, 0.0
      %v830 = vmax.f32 %v750, 0.0
      %v831 = vmax.f32 %v753, 0.0
      %v832 = vmax.f32 %v755, 0.0
      %v833 = vmax.f32 %v758, 0.0
      %v834 = vmax.f32 %v760, 0.0
      %v835 = vmax.f32 %v763, 0.0
      %v836 = vmax.f32 %v765, 0.0
      %v837 = vmax.f32 %v768, 0.0
      %v838 = vmax.f32 %v770, 0.0
      %v839 = vmax.f32 %v773, 0.0
      %v840 = vmax.f32 %v775, 0.0
      %v841 = vpack.c.bf16 %v778, %v777
      %v842 = vpack.c.bf16 %v780, %v779
      %v843 = vpack.c.bf16 %v782, %v781
      %v844 = vpack.c.bf16 %v784, %v783
      %v845 = vpack.c.bf16 %v786, %v785
      %v846 = vpack.c.bf16 %v788, %v787
      %v847 = vpack.c.bf16 %v790, %v789
      %v848 = vpack.c.bf16 %v792, %v791
      %v849 = vpack.c.bf16 %v794, %v793
      %v850 = vpack.c.bf16 %v796, %v795
      %v851 = vpack.c.bf16 %v798, %v797
      %v852 = vpack.c.bf16 %v800, %v799
      %v853 = vpack.c.bf16 %v802, %v801
      %v854 = vpack.c.bf16 %v804, %v803
      %v855 = vpack.c.bf16 %v806, %v805
      %v856 = vpack.c.bf16 %v808, %v807
      %v857 = vpack.c.bf16 %v810, %v809
      %v858 = vpack.c.bf16 %v812, %v811
      %v859 = vpack.c.bf16 %v814, %v813
      %v860 = vpack.c.bf16 %v816, %v815
      %v861 = vpack.c.bf16 %v818, %v817
      %v862 = vpack.c.bf16 %v820, %v819
      %v863 = vpack.c.bf16 %v822, %v821
      %v864 = vpack.c.bf16 %v824, %v823
      %v865 = vpack.c.bf16 %v826, %v825
      %v866 = vpack.c.bf16 %v828, %v827
      %v867 = vpack.c.bf16 %v830, %v829
      %v868 = vpack.c.bf16 %v832, %v831
      %v869 = vpack.c.bf16 %v834, %v833
      %v870 = vpack.c.bf16 %v836, %v835
      %v871 = vpack.c.bf16 %v838, %v837
      %v872 = vpack.c.bf16 %v840, %v839
      %v873 = vld [vmem:[%s3] sm:$0xf]
      %v874 = vld [vmem:[%s3 + $0x4] sm:$0xf]
      %v875 = vld [vmem:[%s3 + $0x8] sm:$0xf]
      %v876 = vld [vmem:[%s3 + $0xc] sm:$0xf]
      %v877 = vld [vmem:[%s3 + $0x10] sm:$0xf]
      %v878 = vld [vmem:[%s3 + $0x14] sm:$0xf]
      %v879 = vld [vmem:[%s3 + $0x18] sm:$0xf]
      %v880 = vld [vmem:[%s3 + $0x1c] sm:$0xf]
      %v881 = vld [vmem:[%s3 + $0x20] sm:$0xf]
      %v882 = vld [vmem:[%s3 + $0x24] sm:$0xf]
      %v883 = vld [vmem:[%s3 + $0x28] sm:$0xf]
      %v884 = vld [vmem:[%s3 + $0x2c] sm:$0xf]
      %v885 = vld [vmem:[%s3 + $0x30] sm:$0xf]
      %v886 = vld [vmem:[%s3 + $0x34] sm:$0xf]
      %v887 = vld [vmem:[%s3 + $0x38] sm:$0xf]
      %v888 = vld [vmem:[%s3 + $0x3c] sm:$0xf]
      %v889 = vld [vmem:[%s4] sm:$0x1]
      %v891 = vperm.slane %v889, 0
      %v909 = vunpack.c.l.b16 %v873
      %v910 = vunpack.c.l.b16 %v874
      %v911 = vunpack.c.l.b16 %v875
      %v912 = vunpack.c.l.b16 %v876
      %v913 = vunpack.c.l.b16 %v877
      %v914 = vunpack.c.l.b16 %v878
      %v915 = vunpack.c.l.b16 %v879
      %v916 = vunpack.c.l.b16 %v880
      %v917 = vunpack.c.l.b16 %v881
      %v918 = vunpack.c.l.b16 %v882
      %v919 = vunpack.c.l.b16 %v883
      %v920 = vunpack.c.l.b16 %v884
      %v921 = vunpack.c.l.b16 %v885
      %v922 = vunpack.c.l.b16 %v886
      %v923 = vunpack.c.l.b16 %v887
      %v924 = vunpack.c.l.b16 %v888
      %v925 = vpack.c.b16 %v910, %v909
      %v926 = vpack.c.b16 %v912, %v911
      %v927 = vpack.c.b16 %v914, %v913
      %v928 = vpack.c.b16 %v916, %v915
      %v929 = vpack.c.b16 %v918, %v917
      %v930 = vpack.c.b16 %v920, %v919
      %v931 = vpack.c.b16 %v922, %v921
      %v932 = vpack.c.b16 %v924, %v923
      %941 = vmatpush.bf16.msra.mxu0 %v932
      %942 = vmatpush.bf16.msra.mxu0 %v931
      %943 = vmatpush.bf16.msra.mxu0 %v930
      %944 = vmatpush.bf16.msra.mxu0 %v929
      %945 = vmatpush.bf16.msra.mxu0 %v928
      %946 = vmatpush.bf16.msra.mxu0 %v927
      %947 = vmatpush.bf16.msra.mxu0 %v926
      %948 = vmatpush.bf16.msra.mxu0 %v925
      %949 = vmatmul.bf16.gmra.mxu0 %v841
      %v950 = vpop.f32.mrf.mxu0
      %v951 = vadd.f32 %v891, %v950
      %v952 = vpop.f32.mrf.mxu0
      %v953 = vadd.f32 %v891, %v952
      %954 = vmatmul.bf16.gmra.mxu0 %v842
      %v955 = vpop.f32.mrf.mxu0
      %v956 = vadd.f32 %v891, %v955
      %v957 = vpop.f32.mrf.mxu0
      %v958 = vadd.f32 %v891, %v957
      %959 = vmatmul.bf16.gmra.mxu0 %v843
      %v960 = vpop.f32.mrf.mxu0
      %v961 = vadd.f32 %v891, %v960
      %v962 = vpop.f32.mrf.mxu0
      %v963 = vadd.f32 %v891, %v962
      %964 = vmatmul.bf16.gmra.mxu0 %v844
      %v965 = vpop.f32.mrf.mxu0
      %v966 = vadd.f32 %v891, %v965
      %v967 = vpop.f32.mrf.mxu0
      %v968 = vadd.f32 %v891, %v967
      %969 = vmatmul.bf16.gmra.mxu0 %v845
      %v970 = vpop.f32.mrf.mxu0
      %v971 = vadd.f32 %v891, %v970
      %v972 = vpop.f32.mrf.mxu0
      %v973 = vadd.f32 %v891, %v972
      %974 = vmatmul.bf16.gmra.mxu0 %v846
      %v975 = vpop.f32.mrf.mxu0
      %v976 = vadd.f32 %v891, %v975
      %v977 = vpop.f32.mrf.mxu0
      %v978 = vadd.f32 %v891, %v977
      %979 = vmatmul.bf16.gmra.mxu0 %v847
      %v980 = vpop.f32.mrf.mxu0
      %v981 = vadd.f32 %v891, %v980
      %v982 = vpop.f32.mrf.mxu0
      %v983 = vadd.f32 %v891, %v982
      %984 = vmatmul.bf16.gmra.mxu0 %v848
      %v985 = vpop.f32.mrf.mxu0
      %v986 = vadd.f32 %v891, %v985
      %v987 = vpop.f32.mrf.mxu0
      %v988 = vadd.f32 %v891, %v987
      %989 = vmatmul.bf16.gmra.mxu0 %v849
      %v990 = vpop.f32.mrf.mxu0
      %v991 = vadd.f32 %v891, %v990
      %v992 = vpop.f32.mrf.mxu0
      %v993 = vadd.f32 %v891, %v992
      %994 = vmatmul.bf16.gmra.mxu0 %v850
      %v995 = vpop.f32.mrf.mxu0
      %v996 = vadd.f32 %v891, %v995
      %v997 = vpop.f32.mrf.mxu0
      %v998 = vadd.f32 %v891, %v997
      %999 = vmatmul.bf16.gmra.mxu0 %v851
      %v1000 = vpop.f32.mrf.mxu0
      %v1001 = vadd.f32 %v891, %v1000
      %v1002 = vpop.f32.mrf.mxu0
      %v1003 = vadd.f32 %v891, %v1002
      %1004 = vmatmul.bf16.gmra.mxu0 %v852
      %v1005 = vpop.f32.mrf.mxu0
      %v1006 = vadd.f32 %v891, %v1005
      %v1007 = vpop.f32.mrf.mxu0
      %v1008 = vadd.f32 %v891, %v1007
      %1009 = vmatmul.bf16.gmra.mxu0 %v853
      %v1010 = vpop.f32.mrf.mxu0
      %v1011 = vadd.f32 %v891, %v1010
      %v1012 = vpop.f32.mrf.mxu0
      %v1013 = vadd.f32 %v891, %v1012
      %1014 = vmatmul.bf16.gmra.mxu0 %v854
      %v1015 = vpop.f32.mrf.mxu0
      %v1016 = vadd.f32 %v891, %v1015
      %v1017 = vpop.f32.mrf.mxu0
      %v1018 = vadd.f32 %v891, %v1017
      %1019 = vmatmul.bf16.gmra.mxu0 %v855
      %v1020 = vpop.f32.mrf.mxu0
      %v1021 = vadd.f32 %v891, %v1020
      %v1022 = vpop.f32.mrf.mxu0
      %v1023 = vadd.f32 %v891, %v1022
      %1024 = vmatmul.bf16.gmra.mxu0 %v856
      %v1025 = vpop.f32.mrf.mxu0
      %v1026 = vadd.f32 %v891, %v1025
      %v1027 = vpop.f32.mrf.mxu0
      %v1028 = vadd.f32 %v891, %v1027
      %1029 = vmatmul.bf16.gmra.mxu0 %v857
      %v1030 = vpop.f32.mrf.mxu0
      %v1031 = vadd.f32 %v891, %v1030
      %v1032 = vpop.f32.mrf.mxu0
      %v1033 = vadd.f32 %v891, %v1032
      %1034 = vmatmul.bf16.gmra.mxu0 %v858
      %v1035 = vpop.f32.mrf.mxu0
      %v1036 = vadd.f32 %v891, %v1035
      %v1037 = vpop.f32.mrf.mxu0
      %v1038 = vadd.f32 %v891, %v1037
      %1039 = vmatmul.bf16.gmra.mxu0 %v859
      %v1040 = vpop.f32.mrf.mxu0
      %v1041 = vadd.f32 %v891, %v1040
      %v1042 = vpop.f32.mrf.mxu0
      %v1043 = vadd.f32 %v891, %v1042
      %1044 = vmatmul.bf16.gmra.mxu0 %v860
      %v1045 = vpop.f32.mrf.mxu0
      %v1046 = vadd.f32 %v891, %v1045
      %v1047 = vpop.f32.mrf.mxu0
      %v1048 = vadd.f32 %v891, %v1047
      %1049 = vmatmul.bf16.gmra.mxu0 %v861
      %v1050 = vpop.f32.mrf.mxu0
      %v1051 = vadd.f32 %v891, %v1050
      %v1052 = vpop.f32.mrf.mxu0
      %v1053 = vadd.f32 %v891, %v1052
      %1054 = vmatmul.bf16.gmra.mxu0 %v862
      %v1055 = vpop.f32.mrf.mxu0
      %v1056 = vadd.f32 %v891, %v1055
      %v1057 = vpop.f32.mrf.mxu0
      %v1058 = vadd.f32 %v891, %v1057
      %1059 = vmatmul.bf16.gmra.mxu0 %v863
      %v1060 = vpop.f32.mrf.mxu0
      %v1061 = vadd.f32 %v891, %v1060
      %v1062 = vpop.f32.mrf.mxu0
      %v1063 = vadd.f32 %v891, %v1062
      %1064 = vmatmul.bf16.gmra.mxu0 %v864
      %v1065 = vpop.f32.mrf.mxu0
      %v1066 = vadd.f32 %v891, %v1065
      %v1067 = vpop.f32.mrf.mxu0
      %v1068 = vadd.f32 %v891, %v1067
      %1069 = vmatmul.bf16.gmra.mxu0 %v865
      %v1070 = vpop.f32.mrf.mxu0
      %v1071 = vadd.f32 %v891, %v1070
      %v1072 = vpop.f32.mrf.mxu0
      %v1073 = vadd.f32 %v891, %v1072
      %1074 = vmatmul.bf16.gmra.mxu0 %v866
      %v1075 = vpop.f32.mrf.mxu0
      %v1076 = vadd.f32 %v891, %v1075
      %v1077 = vpop.f32.mrf.mxu0
      %v1078 = vadd.f32 %v891, %v1077
      %1079 = vmatmul.bf16.gmra.mxu0 %v867
      %v1080 = vpop.f32.mrf.mxu0
      %v1081 = vadd.f32 %v891, %v1080
      %v1082 = vpop.f32.mrf.mxu0
      %v1083 = vadd.f32 %v891, %v1082
      %1084 = vmatmul.bf16.gmra.mxu0 %v868
      %v1085 = vpop.f32.mrf.mxu0
      %v1086 = vadd.f32 %v891, %v1085
      %v1087 = vpop.f32.mrf.mxu0
      %v1088 = vadd.f32 %v891, %v1087
      %1089 = vmatmul.bf16.gmra.mxu0 %v869
      %v1090 = vpop.f32.mrf.mxu0
      %v1091 = vadd.f32 %v891, %v1090
      %v1092 = vpop.f32.mrf.mxu0
      %v1093 = vadd.f32 %v891, %v1092
      %1094 = vmatmul.bf16.gmra.mxu0 %v870
      %v1095 = vpop.f32.mrf.mxu0
      %v1096 = vadd.f32 %v891, %v1095
      %v1097 = vpop.f32.mrf.mxu0
      %v1098 = vadd.f32 %v891, %v1097
      %1099 = vmatmul.bf16.gmra.mxu0 %v871
      %v1100 = vpop.f32.mrf.mxu0
      %v1101 = vadd.f32 %v891, %v1100
      %v1102 = vpop.f32.mrf.mxu0
      %v1103 = vadd.f32 %v891, %v1102
      %1104 = vmatmul.bf16.gmra.mxu0 %v872
      %v1105 = vpop.f32.mrf.mxu0
      %v1106 = vadd.f32 %v891, %v1105
      %v1107 = vpop.f32.mrf.mxu0
      %v1108 = vadd.f32 %v891, %v1107
      %1109 = vdwg.mxu0
      %v1110 = vmax.f32 %v951, 0.0
      %v1111 = vmax.f32 %v953, 0.0
      %v1112 = vmax.f32 %v956, 0.0
      %v1113 = vmax.f32 %v958, 0.0
      %v1114 = vmax.f32 %v961, 0.0
      %v1115 = vmax.f32 %v963, 0.0
      %v1116 = vmax.f32 %v966, 0.0
      %v1117 = vmax.f32 %v968, 0.0
      %v1118 = vmax.f32 %v971, 0.0
      %v1119 = vmax.f32 %v973, 0.0
      %v1120 = vmax.f32 %v976, 0.0
      %v1121 = vmax.f32 %v978, 0.0
      %v1122 = vmax.f32 %v981, 0.0
      %v1123 = vmax.f32 %v983, 0.0
      %v1124 = vmax.f32 %v986, 0.0
      %v1125 = vmax.f32 %v988, 0.0
      %v1126 = vmax.f32 %v991, 0.0
      %v1127 = vmax.f32 %v993, 0.0
      %v1128 = vmax.f32 %v996, 0.0
      %v1129 = vmax.f32 %v998, 0.0
      %v1130 = vmax.f32 %v1001, 0.0
      %v1131 = vmax.f32 %v1003, 0.0
      %v1132 = vmax.f32 %v1006, 0.0
      %v1133 = vmax.f32 %v1008, 0.0
      %v1134 = vmax.f32 %v1011, 0.0
      %v1135 = vmax.f32 %v1013, 0.0
      %v1136 = vmax.f32 %v1016, 0.0
      %v1137 = vmax.f32 %v1018, 0.0
      %v1138 = vmax.f32 %v1021, 0.0
      %v1139 = vmax.f32 %v1023, 0.0
      %v1140 = vmax.f32 %v1026, 0.0
      %v1141 = vmax.f32 %v1028, 0.0
      %v1142 = vmax.f32 %v1031, 0.0
      %v1143 = vmax.f32 %v1033, 0.0
      %v1144 = vmax.f32 %v1036, 0.0
      %v1145 = vmax.f32 %v1038, 0.0
      %v1146 = vmax.f32 %v1041, 0.0
      %v1147 = vmax.f32 %v1043, 0.0
      %v1148 = vmax.f32 %v1046, 0.0
      %v1149 = vmax.f32 %v1048, 0.0
      %v1150 = vmax.f32 %v1051, 0.0
      %v1151 = vmax.f32 %v1053, 0.0
      %v1152 = vmax.f32 %v1056, 0.0
      %v1153 = vmax.f32 %v1058, 0.0
      %v1154 = vmax.f32 %v1061, 0.0
      %v1155 = vmax.f32 %v1063, 0.0
      %v1156 = vmax.f32 %v1066, 0.0
      %v1157 = vmax.f32 %v1068, 0.0
      %v1158 = vmax.f32 %v1071, 0.0
      %v1159 = vmax.f32 %v1073, 0.0
      %v1160 = vmax.f32 %v1076, 0.0
      %v1161 = vmax.f32 %v1078, 0.0
      %v1162 = vmax.f32 %v1081, 0.0
      %v1163 = vmax.f32 %v1083, 0.0
      %v1164 = vmax.f32 %v1086, 0.0
      %v1165 = vmax.f32 %v1088, 0.0
      %v1166 = vmax.f32 %v1091, 0.0
      %v1167 = vmax.f32 %v1093, 0.0
      %v1168 = vmax.f32 %v1096, 0.0
      %v1169 = vmax.f32 %v1098, 0.0
      %v1170 = vmax.f32 %v1101, 0.0
      %v1171 = vmax.f32 %v1103, 0.0
      %v1172 = vmax.f32 %v1106, 0.0
      %v1173 = vmax.f32 %v1108, 0.0
      %v1174 = vpack.c.bf16 %v1111, %v1110
      %v1175 = vpack.c.bf16 %v1113, %v1112
      %v1176 = vpack.c.bf16 %v1115, %v1114
      %v1177 = vpack.c.bf16 %v1117, %v1116
      %v1178 = vpack.c.bf16 %v1119, %v1118
      %v1179 = vpack.c.bf16 %v1121, %v1120
      %v1180 = vpack.c.bf16 %v1123, %v1122
      %v1181 = vpack.c.bf16 %v1125, %v1124
      %v1182 = vpack.c.bf16 %v1127, %v1126
      %v1183 = vpack.c.bf16 %v1129, %v1128
      %v1184 = vpack.c.bf16 %v1131, %v1130
      %v1185 = vpack.c.bf16 %v1133, %v1132
      %v1186 = vpack.c.bf16 %v1135, %v1134
      %v1187 = vpack.c.bf16 %v1137, %v1136
      %v1188 = vpack.c.bf16 %v1139, %v1138
      %v1189 = vpack.c.bf16 %v1141, %v1140
      %v1190 = vpack.c.bf16 %v1143, %v1142
      %v1191 = vpack.c.bf16 %v1145, %v1144
      %v1192 = vpack.c.bf16 %v1147, %v1146
      %v1193 = vpack.c.bf16 %v1149, %v1148
      %v1194 = vpack.c.bf16 %v1151, %v1150
      %v1195 = vpack.c.bf16 %v1153, %v1152
      %v1196 = vpack.c.bf16 %v1155, %v1154
      %v1197 = vpack.c.bf16 %v1157, %v1156
      %v1198 = vpack.c.bf16 %v1159, %v1158
      %v1199 = vpack.c.bf16 %v1161, %v1160
      %v1200 = vpack.c.bf16 %v1163, %v1162
      %v1201 = vpack.c.bf16 %v1165, %v1164
      %v1202 = vpack.c.bf16 %v1167, %v1166
      %v1203 = vpack.c.bf16 %v1169, %v1168
      %v1204 = vpack.c.bf16 %v1171, %v1170
      %v1205 = vpack.c.bf16 %v1173, %v1172
      %v1206 = vld [vmem:[%s5] sm:$0xff]
      %v1207 = vld [vmem:[%s5 + $0x8] sm:$0xff]
      %v1208 = vld [vmem:[%s5 + $0x10] sm:$0xff]
      %v1209 = vld [vmem:[%s5 + $0x18] sm:$0xff]
      %v1210 = vld [vmem:[%s5 + $0x20] sm:$0xff]
      %v1211 = vld [vmem:[%s5 + $0x28] sm:$0xff]
      %v1212 = vld [vmem:[%s5 + $0x30] sm:$0xff]
      %v1213 = vld [vmem:[%s5 + $0x38] sm:$0xff]
      %v1214 = vld [vmem:[%s5 + $0x40] sm:$0xff]
      %v1215 = vld [vmem:[%s5 + $0x48] sm:$0xff]
      %v1216 = vld [vmem:[%s5 + $0x50] sm:$0xff]
      %v1217 = vld [vmem:[%s5 + $0x58] sm:$0xff]
      %v1218 = vld [vmem:[%s5 + $0x60] sm:$0xff]
      %v1219 = vld [vmem:[%s5 + $0x68] sm:$0xff]
      %v1220 = vld [vmem:[%s5 + $0x70] sm:$0xff]
      %v1221 = vld [vmem:[%s5 + $0x78] sm:$0xff]
      %v1222 = vld [vmem:[%s6] sm:$0x3]
      %v1224 = vperm.slane %v1222, 0
      %v1225 = vperm.slane %v1222, 1
      %v1244 = vunpack.c.l.b16 %v1206
      %v1245 = vunpack.c.h.b16 %v1206
      %v1246 = vunpack.c.l.b16 %v1207
      %v1247 = vunpack.c.h.b16 %v1207
      %v1248 = vunpack.c.l.b16 %v1208
      %v1249 = vunpack.c.h.b16 %v1208
      %v1250 = vunpack.c.l.b16 %v1209
      %v1251 = vunpack.c.h.b16 %v1209
      %v1252 = vunpack.c.l.b16 %v1210
      %v1253 = vunpack.c.h.b16 %v1210
      %v1254 = vunpack.c.l.b16 %v1211
      %v1255 = vunpack.c.h.b16 %v1211
      %v1256 = vunpack.c.l.b16 %v1212
      %v1257 = vunpack.c.h.b16 %v1212
      %v1258 = vunpack.c.l.b16 %v1213
      %v1259 = vunpack.c.h.b16 %v1213
      %v1260 = vunpack.c.l.b16 %v1214
      %v1261 = vunpack.c.h.b16 %v1214
      %v1262 = vunpack.c.l.b16 %v1215
      %v1263 = vunpack.c.h.b16 %v1215
      %v1264 = vunpack.c.l.b16 %v1216
      %v1265 = vunpack.c.h.b16 %v1216
      %v1266 = vunpack.c.l.b16 %v1217
      %v1267 = vunpack.c.h.b16 %v1217
      %v1268 = vunpack.c.l.b16 %v1218
      %v1269 = vunpack.c.h.b16 %v1218
      %v1270 = vunpack.c.l.b16 %v1219
      %v1271 = vunpack.c.h.b16 %v1219
      %v1272 = vunpack.c.l.b16 %v1220
      %v1273 = vunpack.c.h.b16 %v1220
      %v1274 = vunpack.c.l.b16 %v1221
      %v1275 = vunpack.c.h.b16 %v1221
      %v1276 = vpack.c.b16 %v1246, %v1244
      %v1277 = vpack.c.b16 %v1247, %v1245
      %v1278 = vpack.c.b16 %v1250, %v1248
      %v1279 = vpack.c.b16 %v1251, %v1249
      %v1280 = vpack.c.b16 %v1254, %v1252
      %v1281 = vpack.c.b16 %v1255, %v1253
      %v1282 = vpack.c.b16 %v1258, %v1256
      %v1283 = vpack.c.b16 %v1259, %v1257
      %v1284 = vpack.c.b16 %v1262, %v1260
      %v1285 = vpack.c.b16 %v1263, %v1261
      %v1286 = vpack.c.b16 %v1266, %v1264
      %v1287 = vpack.c.b16 %v1267, %v1265
      %v1288 = vpack.c.b16 %v1270, %v1268
      %v1289 = vpack.c.b16 %v1271, %v1269
      %v1290 = vpack.c.b16 %v1274, %v1272
      %v1291 = vpack.c.b16 %v1275, %v1273
      %1308 = vmatpush.bf16.msra.mxu0 %v1290
      %1309 = vmatpush.bf16.msra.mxu0 %v1288
      %1310 = vmatpush.bf16.msra.mxu0 %v1286
      %1311 = vmatpush.bf16.msra.mxu0 %v1284
      %1312 = vmatpush.bf16.msra.mxu0 %v1282
      %1313 = vmatpush.bf16.msra.mxu0 %v1280
      %1314 = vmatpush.bf16.msra.mxu0 %v1278
      %1315 = vmatpush.bf16.msra.mxu0 %v1276
      %1316 = vmatmul.bf16.gmra.mxu0 %v1174
      %v1317 = vpop.f32.mrf.mxu0
      %v1318 = vadd.f32 %v1224, %v1317
      %v1319 = vpop.f32.mrf.mxu0
      %v1320 = vadd.f32 %v1224, %v1319
      %1321 = vmatmul.bf16.gmra.mxu0 %v1175
      %v1322 = vpop.f32.mrf.mxu0
      %v1323 = vadd.f32 %v1224, %v1322
      %v1324 = vpop.f32.mrf.mxu0
      %v1325 = vadd.f32 %v1224, %v1324
      %1326 = vmatmul.bf16.gmra.mxu0 %v1176
      %v1327 = vpop.f32.mrf.mxu0
      %v1328 = vadd.f32 %v1224, %v1327
      %v1329 = vpop.f32.mrf.mxu0
      %v1330 = vadd.f32 %v1224, %v1329
      %1331 = vmatmul.bf16.gmra.mxu0 %v1177
      %v1332 = vpop.f32.mrf.mxu0
      %v1333 = vadd.f32 %v1224, %v1332
      %v1334 = vpop.f32.mrf.mxu0
      %v1335 = vadd.f32 %v1224, %v1334
      %1336 = vmatmul.bf16.gmra.mxu0 %v1178
      %v1337 = vpop.f32.mrf.mxu0
      %v1338 = vadd.f32 %v1224, %v1337
      %v1339 = vpop.f32.mrf.mxu0
      %v1340 = vadd.f32 %v1224, %v1339
      %1341 = vmatmul.bf16.gmra.mxu0 %v1179
      %v1342 = vpop.f32.mrf.mxu0
      %v1343 = vadd.f32 %v1224, %v1342
      %v1344 = vpop.f32.mrf.mxu0
      %v1345 = vadd.f32 %v1224, %v1344
      %1346 = vmatmul.bf16.gmra.mxu0 %v1180
      %v1347 = vpop.f32.mrf.mxu0
      %v1348 = vadd.f32 %v1224, %v1347
      %v1349 = vpop.f32.mrf.mxu0
      %v1350 = vadd.f32 %v1224, %v1349
      %1351 = vmatmul.bf16.gmra.mxu0 %v1181
      %v1352 = vpop.f32.mrf.mxu0
      %v1353 = vadd.f32 %v1224, %v1352
      %v1354 = vpop.f32.mrf.mxu0
      %v1355 = vadd.f32 %v1224, %v1354
      %1356 = vmatmul.bf16.gmra.mxu0 %v1182
      %v1357 = vpop.f32.mrf.mxu0
      %v1358 = vadd.f32 %v1224, %v1357
      %v1359 = vpop.f32.mrf.mxu0
      %v1360 = vadd.f32 %v1224, %v1359
      %1361 = vmatmul.bf16.gmra.mxu0 %v1183
      %v1362 = vpop.f32.mrf.mxu0
      %v1363 = vadd.f32 %v1224, %v1362
      %v1364 = vpop.f32.mrf.mxu0
      %v1365 = vadd.f32 %v1224, %v1364
      %1366 = vmatmul.bf16.gmra.mxu0 %v1184
      %v1367 = vpop.f32.mrf.mxu0
      %v1368 = vadd.f32 %v1224, %v1367
      %v1369 = vpop.f32.mrf.mxu0
      %v1370 = vadd.f32 %v1224, %v1369
      %1371 = vmatmul.bf16.gmra.mxu0 %v1185
      %v1372 = vpop.f32.mrf.mxu0
      %v1373 = vadd.f32 %v1224, %v1372
      %v1374 = vpop.f32.mrf.mxu0
      %v1375 = vadd.f32 %v1224, %v1374
      %1376 = vmatmul.bf16.gmra.mxu0 %v1186
      %v1377 = vpop.f32.mrf.mxu0
      %v1378 = vadd.f32 %v1224, %v1377
      %v1379 = vpop.f32.mrf.mxu0
      %v1380 = vadd.f32 %v1224, %v1379
      %1381 = vmatmul.bf16.gmra.mxu0 %v1187
      %v1382 = vpop.f32.mrf.mxu0
      %v1383 = vadd.f32 %v1224, %v1382
      %v1384 = vpop.f32.mrf.mxu0
      %v1385 = vadd.f32 %v1224, %v1384
      %1386 = vmatmul.bf16.gmra.mxu0 %v1188
      %v1387 = vpop.f32.mrf.mxu0
      %v1388 = vadd.f32 %v1224, %v1387
      %v1389 = vpop.f32.mrf.mxu0
      %v1390 = vadd.f32 %v1224, %v1389
      %1391 = vmatmul.bf16.gmra.mxu0 %v1189
      %v1392 = vpop.f32.mrf.mxu0
      %v1393 = vadd.f32 %v1224, %v1392
      %v1394 = vpop.f32.mrf.mxu0
      %v1395 = vadd.f32 %v1224, %v1394
      %1396 = vmatmul.bf16.gmra.mxu0 %v1190
      %v1397 = vpop.f32.mrf.mxu0
      %v1398 = vadd.f32 %v1224, %v1397
      %v1399 = vpop.f32.mrf.mxu0
      %v1400 = vadd.f32 %v1224, %v1399
      %1401 = vmatmul.bf16.gmra.mxu0 %v1191
      %v1402 = vpop.f32.mrf.mxu0
      %v1403 = vadd.f32 %v1224, %v1402
      %v1404 = vpop.f32.mrf.mxu0
      %v1405 = vadd.f32 %v1224, %v1404
      %1406 = vmatmul.bf16.gmra.mxu0 %v1192
      %v1407 = vpop.f32.mrf.mxu0
      %v1408 = vadd.f32 %v1224, %v1407
      %v1409 = vpop.f32.mrf.mxu0
      %v1410 = vadd.f32 %v1224, %v1409
      %1411 = vmatmul.bf16.gmra.mxu0 %v1193
      %v1412 = vpop.f32.mrf.mxu0
      %v1413 = vadd.f32 %v1224, %v1412
      %v1414 = vpop.f32.mrf.mxu0
      %v1415 = vadd.f32 %v1224, %v1414
      %1416 = vmatmul.bf16.gmra.mxu0 %v1194
      %v1417 = vpop.f32.mrf.mxu0
      %v1418 = vadd.f32 %v1224, %v1417
      %v1419 = vpop.f32.mrf.mxu0
      %v1420 = vadd.f32 %v1224, %v1419
      %1421 = vmatmul.bf16.gmra.mxu0 %v1195
      %v1422 = vpop.f32.mrf.mxu0
      %v1423 = vadd.f32 %v1224, %v1422
      %v1424 = vpop.f32.mrf.mxu0
      %v1425 = vadd.f32 %v1224, %v1424
      %1426 = vmatmul.bf16.gmra.mxu0 %v1196
      %v1427 = vpop.f32.mrf.mxu0
      %v1428 = vadd.f32 %v1224, %v1427
      %v1429 = vpop.f32.mrf.mxu0
      %v1430 = vadd.f32 %v1224, %v1429
      %1431 = vmatmul.bf16.gmra.mxu0 %v1197
      %v1432 = vpop.f32.mrf.mxu0
      %v1433 = vadd.f32 %v1224, %v1432
      %v1434 = vpop.f32.mrf.mxu0
      %v1435 = vadd.f32 %v1224, %v1434
      %1436 = vmatmul.bf16.gmra.mxu0 %v1198
      %v1437 = vpop.f32.mrf.mxu0
      %v1438 = vadd.f32 %v1224, %v1437
      %v1439 = vpop.f32.mrf.mxu0
      %v1440 = vadd.f32 %v1224, %v1439
      %1441 = vmatmul.bf16.gmra.mxu0 %v1199
      %v1442 = vpop.f32.mrf.mxu0
      %v1443 = vadd.f32 %v1224, %v1442
      %v1444 = vpop.f32.mrf.mxu0
      %v1445 = vadd.f32 %v1224, %v1444
      %1446 = vmatmul.bf16.gmra.mxu0 %v1200
      %v1447 = vpop.f32.mrf.mxu0
      %v1448 = vadd.f32 %v1224, %v1447
      %v1449 = vpop.f32.mrf.mxu0
      %v1450 = vadd.f32 %v1224, %v1449
      %1451 = vmatmul.bf16.gmra.mxu0 %v1201
      %v1452 = vpop.f32.mrf.mxu0
      %v1453 = vadd.f32 %v1224, %v1452
      %v1454 = vpop.f32.mrf.mxu0
      %v1455 = vadd.f32 %v1224, %v1454
      %1456 = vmatmul.bf16.gmra.mxu0 %v1202
      %v1457 = vpop.f32.mrf.mxu0
      %v1458 = vadd.f32 %v1224, %v1457
      %v1459 = vpop.f32.mrf.mxu0
      %v1460 = vadd.f32 %v1224, %v1459
      %1461 = vmatmul.bf16.gmra.mxu0 %v1203
      %v1462 = vpop.f32.mrf.mxu0
      %v1463 = vadd.f32 %v1224, %v1462
      %v1464 = vpop.f32.mrf.mxu0
      %v1465 = vadd.f32 %v1224, %v1464
      %1466 = vmatmul.bf16.gmra.mxu0 %v1204
      %v1467 = vpop.f32.mrf.mxu0
      %v1468 = vadd.f32 %v1224, %v1467
      %v1469 = vpop.f32.mrf.mxu0
      %v1470 = vadd.f32 %v1224, %v1469
      %1471 = vmatmul.bf16.gmra.mxu0 %v1205
      %v1472 = vpop.f32.mrf.mxu0
      %v1473 = vadd.f32 %v1224, %v1472
      %v1474 = vpop.f32.mrf.mxu0
      %v1475 = vadd.f32 %v1224, %v1474
      %1476 = vdwg.mxu0
      %1477 = vmatpush.bf16.msra.mxu0 %v1291
      %1478 = vmatpush.bf16.msra.mxu0 %v1289
      %1479 = vmatpush.bf16.msra.mxu0 %v1287
      %1480 = vmatpush.bf16.msra.mxu0 %v1285
      %1481 = vmatpush.bf16.msra.mxu0 %v1283
      %1482 = vmatpush.bf16.msra.mxu0 %v1281
      %1483 = vmatpush.bf16.msra.mxu0 %v1279
      %1484 = vmatpush.bf16.msra.mxu0 %v1277
      %1485 = vmatmul.bf16.gmra.mxu0 %v1174
      %v1486 = vpop.f32.mrf.mxu0
      %v1487 = vadd.f32 %v1225, %v1486
      %v1488 = vpop.f32.mrf.mxu0
      %v1489 = vadd.f32 %v1225, %v1488
      %1490 = vmatmul.bf16.gmra.mxu0 %v1175
      %v1491 = vpop.f32.mrf.mxu0
      %v1492 = vadd.f32 %v1225, %v1491
      %v1493 = vpop.f32.mrf.mxu0
      %v1494 = vadd.f32 %v1225, %v1493
      %1495 = vmatmul.bf16.gmra.mxu0 %v1176
      %v1496 = vpop.f32.mrf.mxu0
      %v1497 = vadd.f32 %v1225, %v1496
      %v1498 = vpop.f32.mrf.mxu0
      %v1499 = vadd.f32 %v1225, %v1498
      %1500 = vmatmul.bf16.gmra.mxu0 %v1177
      %v1501 = vpop.f32.mrf.mxu0
      %v1502 = vadd.f32 %v1225, %v1501
      %v1503 = vpop.f32.mrf.mxu0
      %v1504 = vadd.f32 %v1225, %v1503
      %1505 = vmatmul.bf16.gmra.mxu0 %v1178
      %v1506 = vpop.f32.mrf.mxu0
      %v1507 = vadd.f32 %v1225, %v1506
      %v1508 = vpop.f32.mrf.mxu0
      %v1509 = vadd.f32 %v1225, %v1508
      %1510 = vmatmul.bf16.gmra.mxu0 %v1179
      %v1511 = vpop.f32.mrf.mxu0
      %v1512 = vadd.f32 %v1225, %v1511
      %v1513 = vpop.f32.mrf.mxu0
      %v1514 = vadd.f32 %v1225, %v1513
      %1515 = vmatmul.bf16.gmra.mxu0 %v1180
      %v1516 = vpop.f32.mrf.mxu0
      %v1517 = vadd.f32 %v1225, %v1516
      %v1518 = vpop.f32.mrf.mxu0
      %v1519 = vadd.f32 %v1225, %v1518
      %1520 = vmatmul.bf16.gmra.mxu0 %v1181
      %v1521 = vpop.f32.mrf.mxu0
      %v1522 = vadd.f32 %v1225, %v1521
      %v1523 = vpop.f32.mrf.mxu0
      %v1524 = vadd.f32 %v1225, %v1523
      %1525 = vmatmul.bf16.gmra.mxu0 %v1182
      %v1526 = vpop.f32.mrf.mxu0
      %v1527 = vadd.f32 %v1225, %v1526
      %v1528 = vpop.f32.mrf.mxu0
      %v1529 = vadd.f32 %v1225, %v1528
      %1530 = vmatmul.bf16.gmra.mxu0 %v1183
      %v1531 = vpop.f32.mrf.mxu0
      %v1532 = vadd.f32 %v1225, %v1531
      %v1533 = vpop.f32.mrf.mxu0
      %v1534 = vadd.f32 %v1225, %v1533
      %1535 = vmatmul.bf16.gmra.mxu0 %v1184
      %v1536 = vpop.f32.mrf.mxu0
      %v1537 = vadd.f32 %v1225, %v1536
      %v1538 = vpop.f32.mrf.mxu0
      %v1539 = vadd.f32 %v1225, %v1538
      %1540 = vmatmul.bf16.gmra.mxu0 %v1185
      %v1541 = vpop.f32.mrf.mxu0
      %v1542 = vadd.f32 %v1225, %v1541
      %v1543 = vpop.f32.mrf.mxu0
      %v1544 = vadd.f32 %v1225, %v1543
      %1545 = vmatmul.bf16.gmra.mxu0 %v1186
      %v1546 = vpop.f32.mrf.mxu0
      %v1547 = vadd.f32 %v1225, %v1546
      %v1548 = vpop.f32.mrf.mxu0
      %v1549 = vadd.f32 %v1225, %v1548
      %1550 = vmatmul.bf16.gmra.mxu0 %v1187
      %v1551 = vpop.f32.mrf.mxu0
      %v1552 = vadd.f32 %v1225, %v1551
      %v1553 = vpop.f32.mrf.mxu0
      %v1554 = vadd.f32 %v1225, %v1553
      %1555 = vmatmul.bf16.gmra.mxu0 %v1188
      %v1556 = vpop.f32.mrf.mxu0
      %v1557 = vadd.f32 %v1225, %v1556
      %v1558 = vpop.f32.mrf.mxu0
      %v1559 = vadd.f32 %v1225, %v1558
      %1560 = vmatmul.bf16.gmra.mxu0 %v1189
      %v1561 = vpop.f32.mrf.mxu0
      %v1562 = vadd.f32 %v1225, %v1561
      %v1563 = vpop.f32.mrf.mxu0
      %v1564 = vadd.f32 %v1225, %v1563
      %1565 = vmatmul.bf16.gmra.mxu0 %v1190
      %v1566 = vpop.f32.mrf.mxu0
      %v1567 = vadd.f32 %v1225, %v1566
      %v1568 = vpop.f32.mrf.mxu0
      %v1569 = vadd.f32 %v1225, %v1568
      %1570 = vmatmul.bf16.gmra.mxu0 %v1191
      %v1571 = vpop.f32.mrf.mxu0
      %v1572 = vadd.f32 %v1225, %v1571
      %v1573 = vpop.f32.mrf.mxu0
      %v1574 = vadd.f32 %v1225, %v1573
      %1575 = vmatmul.bf16.gmra.mxu0 %v1192
      %v1576 = vpop.f32.mrf.mxu0
      %v1577 = vadd.f32 %v1225, %v1576
      %v1578 = vpop.f32.mrf.mxu0
      %v1579 = vadd.f32 %v1225, %v1578
      %1580 = vmatmul.bf16.gmra.mxu0 %v1193
      %v1581 = vpop.f32.mrf.mxu0
      %v1582 = vadd.f32 %v1225, %v1581
      %v1583 = vpop.f32.mrf.mxu0
      %v1584 = vadd.f32 %v1225, %v1583
      %1585 = vmatmul.bf16.gmra.mxu0 %v1194
      %v1586 = vpop.f32.mrf.mxu0
      %v1587 = vadd.f32 %v1225, %v1586
      %v1588 = vpop.f32.mrf.mxu0
      %v1589 = vadd.f32 %v1225, %v1588
      %1590 = vmatmul.bf16.gmra.mxu0 %v1195
      %v1591 = vpop.f32.mrf.mxu0
      %v1592 = vadd.f32 %v1225, %v1591
      %v1593 = vpop.f32.mrf.mxu0
      %v1594 = vadd.f32 %v1225, %v1593
      %1595 = vmatmul.bf16.gmra.mxu0 %v1196
      %v1596 = vpop.f32.mrf.mxu0
      %v1597 = vadd.f32 %v1225, %v1596
      %v1598 = vpop.f32.mrf.mxu0
      %v1599 = vadd.f32 %v1225, %v1598
      %1600 = vmatmul.bf16.gmra.mxu0 %v1197
      %v1601 = vpop.f32.mrf.mxu0
      %v1602 = vadd.f32 %v1225, %v1601
      %v1603 = vpop.f32.mrf.mxu0
      %v1604 = vadd.f32 %v1225, %v1603
      %1605 = vmatmul.bf16.gmra.mxu0 %v1198
      %v1606 = vpop.f32.mrf.mxu0
      %v1607 = vadd.f32 %v1225, %v1606
      %v1608 = vpop.f32.mrf.mxu0
      %v1609 = vadd.f32 %v1225, %v1608
      %1610 = vmatmul.bf16.gmra.mxu0 %v1199
      %v1611 = vpop.f32.mrf.mxu0
      %v1612 = vadd.f32 %v1225, %v1611
      %v1613 = vpop.f32.mrf.mxu0
      %v1614 = vadd.f32 %v1225, %v1613
      %1615 = vmatmul.bf16.gmra.mxu0 %v1200
      %v1616 = vpop.f32.mrf.mxu0
      %v1617 = vadd.f32 %v1225, %v1616
      %v1618 = vpop.f32.mrf.mxu0
      %v1619 = vadd.f32 %v1225, %v1618
      %1620 = vmatmul.bf16.gmra.mxu0 %v1201
      %v1621 = vpop.f32.mrf.mxu0
      %v1622 = vadd.f32 %v1225, %v1621
      %v1623 = vpop.f32.mrf.mxu0
      %v1624 = vadd.f32 %v1225, %v1623
      %1625 = vmatmul.bf16.gmra.mxu0 %v1202
      %v1626 = vpop.f32.mrf.mxu0
      %v1627 = vadd.f32 %v1225, %v1626
      %v1628 = vpop.f32.mrf.mxu0
      %v1629 = vadd.f32 %v1225, %v1628
      %1630 = vmatmul.bf16.gmra.mxu0 %v1203
      %v1631 = vpop.f32.mrf.mxu0
      %v1632 = vadd.f32 %v1225, %v1631
      %v1633 = vpop.f32.mrf.mxu0
      %v1634 = vadd.f32 %v1225, %v1633
      %1635 = vmatmul.bf16.gmra.mxu0 %v1204
      %v1636 = vpop.f32.mrf.mxu0
      %v1637 = vadd.f32 %v1225, %v1636
      %v1638 = vpop.f32.mrf.mxu0
      %v1639 = vadd.f32 %v1225, %v1638
      %1640 = vmatmul.bf16.gmra.mxu0 %v1205
      %v1641 = vpop.f32.mrf.mxu0
      %v1642 = vadd.f32 %v1225, %v1641
      %v1643 = vpop.f32.mrf.mxu0
      %v1644 = vadd.f32 %v1225, %v1643
      %1645 = vdwg.mxu0
      %1646 = vst [vmem:[%s282] sm:$0xff] %v1318
      %1647 = vst [vmem:[%s282 + $0x8] sm:$0xff] %v1487
      %1648 = vst [vmem:[%s282 + $0x10] sm:$0xff] %v1320
      %1649 = vst [vmem:[%s282 + $0x18] sm:$0xff] %v1489
      %1650 = vst [vmem:[%s282 + $0x20] sm:$0xff] %v1323
      %1651 = vst [vmem:[%s282 + $0x28] sm:$0xff] %v1492
      %1652 = vst [vmem:[%s282 + $0x30] sm:$0xff] %v1325
      %1653 = vst [vmem:[%s282 + $0x38] sm:$0xff] %v1494
      %1654 = vst [vmem:[%s282 + $0x40] sm:$0xff] %v1328
      %1655 = vst [vmem:[%s282 + $0x48] sm:$0xff] %v1497
      %1656 = vst [vmem:[%s282 + $0x50] sm:$0xff] %v1330
      %1657 = vst [vmem:[%s282 + $0x58] sm:$0xff] %v1499
      %1658 = vst [vmem:[%s282 + $0x60] sm:$0xff] %v1333
      %1659 = vst [vmem:[%s282 + $0x68] sm:$0xff] %v1502
      %1660 = vst [vmem:[%s282 + $0x70] sm:$0xff] %v1335
      %1661 = vst [vmem:[%s282 + $0x78] sm:$0xff] %v1504
      %1662 = vst [vmem:[%s282 + $0x80] sm:$0xff] %v1338
      %1663 = vst [vmem:[%s282 + $0x88] sm:$0xff] %v1507
      %1664 = vst [vmem:[%s282 + $0x90] sm:$0xff] %v1340
      %1665 = vst [vmem:[%s282 + $0x98] sm:$0xff] %v1509
      %1666 = vst [vmem:[%s282 + $0xa0] sm:$0xff] %v1343
      %1667 = vst [vmem:[%s282 + $0xa8] sm:$0xff] %v1512
      %1668 = vst [vmem:[%s282 + $0xb0] sm:$0xff] %v1345
      %1669 = vst [vmem:[%s282 + $0xb8] sm:$0xff] %v1514
      %1670 = vst [vmem:[%s282 + $0xc0] sm:$0xff] %v1348
      %1671 = vst [vmem:[%s282 + $0xc8] sm:$0xff] %v1517
      %1672 = vst [vmem:[%s282 + $0xd0] sm:$0xff] %v1350
      %1673 = vst [vmem:[%s282 + $0xd8] sm:$0xff] %v1519
      %1674 = vst [vmem:[%s282 + $0xe0] sm:$0xff] %v1353
      %1675 = vst [vmem:[%s282 + $0xe8] sm:$0xff] %v1522
      %1676 = vst [vmem:[%s282 + $0xf0] sm:$0xff] %v1355
      %1677 = vst [vmem:[%s282 + $0xf8] sm:$0xff] %v1524
      %1678 = vst [vmem:[%s282 + $0x100] sm:$0xff] %v1358
      %1679 = vst [vmem:[%s282 + $0x108] sm:$0xff] %v1527
      %1680 = vst [vmem:[%s282 + $0x110] sm:$0xff] %v1360
      %1681 = vst [vmem:[%s282 + $0x118] sm:$0xff] %v1529
      %1682 = vst [vmem:[%s282 + $0x120] sm:$0xff] %v1363
      %1683 = vst [vmem:[%s282 + $0x128] sm:$0xff] %v1532
      %1684 = vst [vmem:[%s282 + $0x130] sm:$0xff] %v1365
      %1685 = vst [vmem:[%s282 + $0x138] sm:$0xff] %v1534
      %1686 = vst [vmem:[%s282 + $0x140] sm:$0xff] %v1368
      %1687 = vst [vmem:[%s282 + $0x148] sm:$0xff] %v1537
      %1688 = vst [vmem:[%s282 + $0x150] sm:$0xff] %v1370
      %1689 = vst [vmem:[%s282 + $0x158] sm:$0xff] %v1539
      %1690 = vst [vmem:[%s282 + $0x160] sm:$0xff] %v1373
      %1691 = vst [vmem:[%s282 + $0x168] sm:$0xff] %v1542
      %1692 = vst [vmem:[%s282 + $0x170] sm:$0xff] %v1375
      %1693 = vst [vmem:[%s282 + $0x178] sm:$0xff] %v1544
      %1694 = vst [vmem:[%s282 + $0x180] sm:$0xff] %v1378
      %1695 = vst [vmem:[%s282 + $0x188] sm:$0xff] %v1547
      %1696 = vst [vmem:[%s282 + $0x190] sm:$0xff] %v1380
      %1697 = vst [vmem:[%s282 + $0x198] sm:$0xff] %v1549
      %1698 = vst [vmem:[%s282 + $0x1a0] sm:$0xff] %v1383
      %1699 = vst [vmem:[%s282 + $0x1a8] sm:$0xff] %v1552
      %1700 = vst [vmem:[%s282 + $0x1b0] sm:$0xff] %v1385
      %1701 = vst [vmem:[%s282 + $0x1b8] sm:$0xff] %v1554
      %1702 = vst [vmem:[%s282 + $0x1c0] sm:$0xff] %v1388
      %1703 = vst [vmem:[%s282 + $0x1c8] sm:$0xff] %v1557
      %1704 = vst [vmem:[%s282 + $0x1d0] sm:$0xff] %v1390
      %1705 = vst [vmem:[%s282 + $0x1d8] sm:$0xff] %v1559
      %1706 = vst [vmem:[%s282 + $0x1e0] sm:$0xff] %v1393
      %1707 = vst [vmem:[%s282 + $0x1e8] sm:$0xff] %v1562
      %1708 = vst [vmem:[%s282 + $0x1f0] sm:$0xff] %v1395
      %1709 = vst [vmem:[%s282 + $0x1f8] sm:$0xff] %v1564
      %1710 = vst [vmem:[%s282 + $0x200] sm:$0xff] %v1398
      %1711 = vst [vmem:[%s282 + $0x208] sm:$0xff] %v1567
      %1712 = vst [vmem:[%s282 + $0x210] sm:$0xff] %v1400
      %1713 = vst [vmem:[%s282 + $0x218] sm:$0xff] %v1569
      %1714 = vst [vmem:[%s282 + $0x220] sm:$0xff] %v1403
      %1715 = vst [vmem:[%s282 + $0x228] sm:$0xff] %v1572
      %1716 = vst [vmem:[%s282 + $0x230] sm:$0xff] %v1405
      %1717 = vst [vmem:[%s282 + $0x238] sm:$0xff] %v1574
      %1718 = vst [vmem:[%s282 + $0x240] sm:$0xff] %v1408
      %1719 = vst [vmem:[%s282 + $0x248] sm:$0xff] %v1577
      %1720 = vst [vmem:[%s282 + $0x250] sm:$0xff] %v1410
      %1721 = vst [vmem:[%s282 + $0x258] sm:$0xff] %v1579
      %1722 = vst [vmem:[%s282 + $0x260] sm:$0xff] %v1413
      %1723 = vst [vmem:[%s282 + $0x268] sm:$0xff] %v1582
      %1724 = vst [vmem:[%s282 + $0x270] sm:$0xff] %v1415
      %1725 = vst [vmem:[%s282 + $0x278] sm:$0xff] %v1584
      %1726 = vst [vmem:[%s282 + $0x280] sm:$0xff] %v1418
      %1727 = vst [vmem:[%s282 + $0x288] sm:$0xff] %v1587
      %1728 = vst [vmem:[%s282 + $0x290] sm:$0xff] %v1420
      %1729 = vst [vmem:[%s282 + $0x298] sm:$0xff] %v1589
      %1730 = vst [vmem:[%s282 + $0x2a0] sm:$0xff] %v1423
      %1731 = vst [vmem:[%s282 + $0x2a8] sm:$0xff] %v1592
      %1732 = vst [vmem:[%s282 + $0x2b0] sm:$0xff] %v1425
      %1733 = vst [vmem:[%s282 + $0x2b8] sm:$0xff] %v1594
      %1734 = vst [vmem:[%s282 + $0x2c0] sm:$0xff] %v1428
      %1735 = vst [vmem:[%s282 + $0x2c8] sm:$0xff] %v1597
      %1736 = vst [vmem:[%s282 + $0x2d0] sm:$0xff] %v1430
      %1737 = vst [vmem:[%s282 + $0x2d8] sm:$0xff] %v1599
      %1738 = vst [vmem:[%s282 + $0x2e0] sm:$0xff] %v1433
      %1739 = vst [vmem:[%s282 + $0x2e8] sm:$0xff] %v1602
      %1740 = vst [vmem:[%s282 + $0x2f0] sm:$0xff] %v1435
      %1741 = vst [vmem:[%s282 + $0x2f8] sm:$0xff] %v1604
      %1742 = vst [vmem:[%s282 + $0x300] sm:$0xff] %v1438
      %1743 = vst [vmem:[%s282 + $0x308] sm:$0xff] %v1607
      %1744 = vst [vmem:[%s282 + $0x310] sm:$0xff] %v1440
      %1745 = vst [vmem:[%s282 + $0x318] sm:$0xff] %v1609
      %1746 = vst [vmem:[%s282 + $0x320] sm:$0xff] %v1443
      %1747 = vst [vmem:[%s282 + $0x328] sm:$0xff] %v1612
      %1748 = vst [vmem:[%s282 + $0x330] sm:$0xff] %v1445
      %1749 = vst [vmem:[%s282 + $0x338] sm:$0xff] %v1614
      %1750 = vst [vmem:[%s282 + $0x340] sm:$0xff] %v1448
      %1751 = vst [vmem:[%s282 + $0x348] sm:$0xff] %v1617
      %1752 = vst [vmem:[%s282 + $0x350] sm:$0xff] %v1450
      %1753 = vst [vmem:[%s282 + $0x358] sm:$0xff] %v1619
      %1754 = vst [vmem:[%s282 + $0x360] sm:$0xff] %v1453
      %1755 = vst [vmem:[%s282 + $0x368] sm:$0xff] %v1622
      %1756 = vst [vmem:[%s282 + $0x370] sm:$0xff] %v1455
      %1757 = vst [vmem:[%s282 + $0x378] sm:$0xff] %v1624
      %1758 = vst [vmem:[%s282 + $0x380] sm:$0xff] %v1458
      %1759 = vst [vmem:[%s282 + $0x388] sm:$0xff] %v1627
      %1760 = vst [vmem:[%s282 + $0x390] sm:$0xff] %v1460
      %1761 = vst [vmem:[%s282 + $0x398] sm:$0xff] %v1629
      %1762 = vst [vmem:[%s282 + $0x3a0] sm:$0xff] %v1463
      %1763 = vst [vmem:[%s282 + $0x3a8] sm:$0xff] %v1632
      %1764 = vst [vmem:[%s282 + $0x3b0] sm:$0xff] %v1465
      %1765 = vst [vmem:[%s282 + $0x3b8] sm:$0xff] %v1634
      %1766 = vst [vmem:[%s282 + $0x3c0] sm:$0xff] %v1468
      %1767 = vst [vmem:[%s282 + $0x3c8] sm:$0xff] %v1637
      %1768 = vst [vmem:[%s282 + $0x3d0] sm:$0xff] %v1470
      %1769 = vst [vmem:[%s282 + $0x3d8] sm:$0xff] %v1639
      %1770 = vst [vmem:[%s282 + $0x3e0] sm:$0xff] %v1473
      %1771 = vst [vmem:[%s282 + $0x3e8] sm:$0xff] %v1642
      %1772 = vst [vmem:[%s282 + $0x3f0] sm:$0xff] %v1475
      %1773 = vst [vmem:[%s282 + $0x3f8] sm:$0xff] %v1644
      %s1774 = smul.u32 64, %s18
      %p1775 = scmp.lt.s32.totalorder %s1774, 127
      %s1776 = scalar_select %p1775, %s1774, 127
      %s1777 = smul.addr %s1776, 2
      %s1778 = smul.addr %s1777, 8
      %s1779 = scalar_lea.vmem %s7, %s1778
      // Predicated region
      $region49: #{rede_multiplas_saidas.1} parent=47 // pred_check
        %p1780 = pneg %p188
      $region50: #{rede_multiplas_saidas.1} parent=47 // pred_check_branch
        %1782 = sbr.rel (%p1780) target = $region52
      $region51: #{rede_multiplas_saidas.1} parent=47 // pred_region
        %s1783 = smul.u32 64, %s18
      $region52: #{rede_multiplas_saidas.1} parent=47 // pred_fallthru
        _
    $region48: #{rede_multiplas_saidas.1} parent=5 // pred_fallthru
      _
    %p1784 = scmp.le.s32.totalorder 2, %s13
    // Predicated region
    $region53: #{rede_multiplas_saidas.1} parent=5 // pred_check
      %p1785 = pneg %p1784
    $region54: #{rede_multiplas_saidas.1} parent=5 // pred_check_branch
      %1787 = sbr.rel (%p1785) target = $region56
    $region55: #{rede_multiplas_saidas.1} parent=5 // pred_region
      %s1788 = ssub.s32 %s13, 2
      // Predicated region
      $region57: #{rede_multiplas_saidas.1} parent=55 // pred_check
        %p1789 = pneg %p194
      $region58: #{rede_multiplas_saidas.1} parent=55 // pred_check_branch
        %1791 = sbr.rel (%p1789) target = $region60
      $region59: #{rede_multiplas_saidas.1} parent=55 // pred_region
        %s1792 = smul.u32 64, %s19
        %p1793 = scmp.lt.s32.totalorder %s1792, 127
        %s1794 = scalar_select %p1793, %s1792, 127
        %s1795 = smul.addr %s1794, 2
        %s1796 = smul.addr %s1795, 8
        %s1797 = scalar_lea.vmem %s7, %s1796
      $region60: #{rede_multiplas_saidas.1} parent=55 // pred_fallthru
        _
    $region56: #{rede_multiplas_saidas.1} parent=5 // pred_fallthru
      _
  $region6: #{rede_multiplas_saidas.1} parent=0 // loop_footer
    %s17 = sadd.s32 1, %s13
  $region7: #{rede_multiplas_saidas.1} parent=0 // loop_footer_branch
    %12 = sbr.rel target = $region3
  $region8: #{rede_multiplas_saidas.1} parent=0 // loop_exit
    _

// kernel: rede_multiplas_saidas.1
$region0: #{rede_multiplas_saidas.1}
  #allocation0 [shape = 'u32[]', space=smem, size = 0x4, offset = 0x4, fixed_abs, tag = 'smem constant byte address 0x4 - core index']
  #allocation1 [shape = 'u32[72,128]{1,0:T(1,128)}', space=vmem, size = 0x9000, scoped, tag = 'internal scratch']
  %s0 = inlined_call_operand.vmem [shape: bf16[1024,128], index: 0, kind: input, shape index: {}]
  %s1 = inlined_call_operand.vmem [shape: bf16[128,128], index: 1, kind: input, shape index: {}]
  %s2 = inlined_call_operand.vmem [shape: f32[1,128], index: 2, kind: input, shape index: {}]
  %s3 = inlined_call_operand.vmem [shape: bf16[128,128], index: 3, kind: input, shape index: {}]
  %s4 = inlined_call_operand.vmem [shape: f32[1,128], index: 4, kind: input, shape index: {}]
  %s5 = inlined_call_operand.vmem [shape: bf16[128,256], index: 5, kind: input, shape index: {}]
  %s6 = inlined_call_operand.vmem [shape: f32[1,256], index: 6, kind: input, shape index: {}]
  %s7 = inlined_call_operand.vmem [shape: f32[1024,256], index: 7, kind: output, shape index: {}]
  %s8 = sld [smem:[#allocation0]]
  $region61: #{rede_multiplas_saidas.1} parent=0
    _
  %s10 = ssub.s32 1, %s8
  %s11 = scalar_select 0, %s10, %s8
  loop: start=0, step=1, limit=4
  $region2: #{rede_multiplas_saidas.1} parent=0 // loop_pre_header
    _
  $region3: #{rede_multiplas_saidas.1} parent=0 // loop_header
    %s13 = sphi 0, %s17
    %p14 = scmp.ge.s32.totalorder %s13, 4
    %s23 = sphi 0, %s25
    %s26 = sphi 0, %s23
    %s27 = sphi 0, %s26
    %s43 = sphi 0, %s27
    %s47 = sphi 0, %s47
    %s49 = sphi 0, %s47
    %s50 = sphi 0, %s49
    %s64 = sphi 0, %s50
    %s68 = sphi 0, %s68
    %s70 = sphi 0, %s68
    %s71 = sphi 0, %s70
    %s85 = sphi 0, %s71
    %s89 = sphi 0, %s89
    %s91 = sphi 0, %s89
    %s92 = sphi 0, %s91
    %s106 = sphi 0, %s92
    %s110 = sphi 0, %s110
    %s112 = sphi 0, %s110
    %s113 = sphi 0, %s112
    %s127 = sphi 0, %s113
    %s131 = sphi 0, %s131
    %s133 = sphi 0, %s131
    %s134 = sphi 0, %s133
    %s148 = sphi 0, %s134
    %s152 = sphi 0, %s152
    %s154 = sphi 0, %s152
    %s155 = sphi 0, %s154
    %s169 = sphi 0, %s155
    %s175 = sphi 0, %s177
    %s178 = sphi 0, %s175
    %s179 = sphi 0, %s178
    %s195 = sphi 0, %s179
  $region4: #{rede_multiplas_saidas.1} parent=0 // loop_header_branch
    %16 = sbr.rel (%p14) target = $region8
  $region5: #{rede_multiplas_saidas.1} parent=0 // loop_body
    %s18 = ssub.s32 %s13, 1
    %s19 = ssub.s32 %s13, 2
    %s20 = sadd.s32 %s13, 1
    %s21 = ssub.s32 %s13, %s20
    %p22 = scmp.eq.s32.totalorder %s21, 0
    %s24 = sadd.s32 %s23, 1
    %s25 = scalar_select %p22, %s23, %s24
    %p28 = pneg %p22
    %p29 = scmp.eq.s32.totalorder %s13, 1
    %p30 = por %p28, %p29
    %p31 = scmp.ne.s32.totalorder %s23, %s26
    %p32 = scmp.eq.s32.totalorder %s13, 0
    %p33 = por %p31, %p32
    %p34 = scmp.ne.s32.totalorder %s23, %s26
    %p35 = scmp.eq.s32.totalorder %s18, 1
    %p36 = por %p34, %p35
    %p37 = scmp.ne.s32.totalorder %s26, %s27
    %p38 = scmp.eq.s32.totalorder %s18, 0
    %p39 = por %p37, %p38
    %p40 = scmp.ne.s32.totalorder %s26, %s27
    %p41 = scmp.eq.s32.totalorder %s19, 1
    %p42 = por %p40, %p41
    %p44 = scmp.ne.s32.totalorder %s27, %s43
    %p45 = scmp.eq.s32.totalorder %s19, 0
    %p46 = por %p44, %p45
    %s48 = sadd.s32 %s47, 1
    %p51 = scmp.eq.s32.totalorder %s13, 1
    %p52 = scmp.ne.s32.totalorder %s47, %s49
    %p53 = scmp.eq.s32.totalorder %s13, 0
    %p54 = por %p52, %p53
    %p55 = scmp.ne.s32.totalorder %s47, %s49
    %p56 = scmp.eq.s32.totalorder %s18, 1
    %p57 = por %p55, %p56
    %p58 = scmp.ne.s32.totalorder %s49, %s50
    %p59 = scmp.eq.s32.totalorder %s18, 0
    %p60 = por %p58, %p59
    %p61 = scmp.ne.s32.totalorder %s49, %s50
    %p62 = scmp.eq.s32.totalorder %s19, 1
    %p63 = por %p61, %p62
    %p65 = scmp.ne.s32.totalorder %s50, %s64
    %p66 = scmp.eq.s32.totalorder %s19, 0
    %p67 = por %p65, %p66
    %s69 = sadd.s32 %s68, 1
    %p72 = scmp.eq.s32.totalorder %s13, 1
    %p73 = scmp.ne.s32.totalorder %s68, %s70
    %p74 = scmp.eq.s32.totalorder %s13, 0
    %p75 = por %p73, %p74
    %p76 = scmp.ne.s32.totalorder %s68, %s70
    %p77 = scmp.eq.s32.totalorder %s18, 1
    %p78 = por %p76, %p77
    %p79 = scmp.ne.s32.totalorder %s70, %s71
    %p80 = scmp.eq.s32.totalorder %s18, 0
    %p81 = por %p79, %p80
    %p82 = scmp.ne.s32.totalorder %s70, %s71
    %p83 = scmp.eq.s32.totalorder %s19, 1
    %p84 = por %p82, %p83
    %p86 = scmp.ne.s32.totalorder %s71, %s85
    %p87 = scmp.eq.s32.totalorder %s19, 0
    %p88 = por %p86, %p87
    %s90 = sadd.s32 %s89, 1
    %p93 = scmp.eq.s32.totalorder %s13, 1
    %p94 = scmp.ne.s32.totalorder %s89, %s91
    %p95 = scmp.eq.s32.totalorder %s13, 0
    %p96 = por %p94, %p95
    %p97 = scmp.ne.s32.totalorder %s89, %s91
    %p98 = scmp.eq.s32.totalorder %s18, 1
    %p99 = por %p97, %p98
    %p100 = scmp.ne.s32.totalorder %s91, %s92
    %p101 = scmp.eq.s32.totalorder %s18, 0
    %p102 = por %p100, %p101
    %p103 = scmp.ne.s32.totalorder %s91, %s92
    %p104 = scmp.eq.s32.totalorder %s19, 1
    %p105 = por %p103, %p104
    %p107 = scmp.ne.s32.totalorder %s92, %s106
    %p108 = scmp.eq.s32.totalorder %s19, 0
    %p109 = por %p107, %p108
    %s111 = sadd.s32 %s110, 1
    %p114 = scmp.eq.s32.totalorder %s13, 1
    %p115 = scmp.ne.s32.totalorder %s110, %s112
    %p116 = scmp.eq.s32.totalorder %s13, 0
    %p117 = por %p115, %p116
    %p118 = scmp.ne.s32.totalorder %s110, %s112
    %p119 = scmp.eq.s32.totalorder %s18, 1
    %p120 = por %p118, %p119
    %p121 = scmp.ne.s32.totalorder %s112, %s113
    %p122 = scmp.eq.s32.totalorder %s18, 0
    %p123 = por %p121, %p122
    %p124 = scmp.ne.s32.totalorder %s112, %s113
    %p125 = scmp.eq.s32.totalorder %s19, 1
    %p126 = por %p124, %p125
    %p128 = scmp.ne.s32.totalorder %s113, %s127
    %p129 = scmp.eq.s32.totalorder %s19, 0
    %p130 = por %p128, %p129
    %s132 = sadd.s32 %s131, 1
    %p135 = scmp.eq.s32.totalorder %s13, 1
    %p136 = scmp.ne.s32.totalorder %s131, %s133
    %p137 = scmp.eq.s32.totalorder %s13, 0
    %p138 = por %p136, %p137
    %p139 = scmp.ne.s32.totalorder %s131, %s133
    %p140 = scmp.eq.s32.totalorder %s18, 1
    %p141 = por %p139, %p140
    %p142 = scmp.ne.s32.totalorder %s133, %s134
    %p143 = scmp.eq.s32.totalorder %s18, 0
    %p144 = por %p142, %p143
    %p145 = scmp.ne.s32.totalorder %s133, %s134
    %p146 = scmp.eq.s32.totalorder %s19, 1
    %p147 = por %p145, %p146
    %p149 = scmp.ne.s32.totalorder %s134, %s148
    %p150 = scmp.eq.s32.totalorder %s19, 0
    %p151 = por %p149, %p150
    %s153 = sadd.s32 %s152, 1
    %p156 = scmp.eq.s32.totalorder %s13, 1
    %p157 = scmp.ne.s32.totalorder %s152, %s154
    %p158 = scmp.eq.s32.totalorder %s13, 0
    %p159 = por %p157, %p158
    %p160 = scmp.ne.s32.totalorder %s152, %s154
    %p161 = scmp.eq.s32.totalorder %s18, 1
    %p162 = por %p160, %p161
    %p163 = scmp.ne.s32.totalorder %s154, %s155
    %p164 = scmp.eq.s32.totalorder %s18, 0
    %p165 = por %p163, %p164
    %p166 = scmp.ne.s32.totalorder %s154, %s155
    %p167 = scmp.eq.s32.totalorder %s19, 1
    %p168 = por %p166, %p167
    %p170 = scmp.ne.s32.totalorder %s155, %s169
    %p171 = scmp.eq.s32.totalorder %s19, 0
    %p172 = por %p170, %p171
    %s173 = ssub.s32 %s13, %s20
    %p174 = scmp.eq.s32.totalorder %s173, 0
    %s176 = sadd.s32 %s175, 1
    %s177 = scalar_select %p174, %s175, %s176
    %p180 = pneg %p174
    %p181 = scmp.eq.s32.totalorder %s13, 1
    %p182 = por %p180, %p181
    %p183 = scmp.ne.s32.totalorder %s175, %s178
    %p184 = scmp.eq.s32.totalorder %s13, 0
    %p185 = por %p183, %p184
    %p186 = scmp.ne.s32.totalorder %s175, %s178
    %p187 = scmp.eq.s32.totalorder %s18, 1
    %p188 = por %p186, %p187
    %p189 = scmp.ne.s32.totalorder %s178, %s179
    %p190 = scmp.eq.s32.totalorder %s18, 0
    %p191 = por %p189, %p190
    %p192 = scmp.ne.s32.totalorder %s178, %s179
    %p193 = scmp.eq.s32.totalorder %s19, 1
    %p194 = por %p192, %p193
    %p196 = scmp.ne.s32.totalorder %s179, %s195
    %p197 = scmp.eq.s32.totalorder %s19, 0
    %p198 = por %p196, %p197
    %p199 = scmp.le.s32.totalorder 1, %s13
    %p200 = scmp.lt.s32.totalorder %s13, 3
    %p201 = pnand %p199, %p200
    %p202 = pneg %p201
    // Predicated region
    $region9: #{rede_multiplas_saidas.1} parent=5 // pred_check
      _
    $region10: #{rede_multiplas_saidas.1} parent=5 // pred_check_branch
      %204 = sbr.rel (%p201) target = $region12
    $region11: #{rede_multiplas_saidas.1} parent=5 // pred_region
      %s205 = ssub.s32 %s13, 1
      // Predicated region
      $region13: #{rede_multiplas_saidas.1} parent=11 // pred_check
        %p206 = pneg %p60
      $region14: #{rede_multiplas_saidas.1} parent=11 // pred_check_branch
        %208 = sbr.rel (%p206) target = $region16
      $region15: #{rede_multiplas_saidas.1} parent=11 // pred_region
        _
      $region16: #{rede_multiplas_saidas.1} parent=11 // pred_fallthru
        _
      // Predicated region
      $region17: #{rede_multiplas_saidas.1} parent=11 // pred_check
        %p209 = pneg %p81
      $region18: #{rede_multiplas_saidas.1} parent=11 // pred_check_branch
        %211 = sbr.rel (%p209) target = $region20
      $region19: #{rede_multiplas_saidas.1} parent=11 // pred_region
        _
      $region20: #{rede_multiplas_saidas.1} parent=11 // pred_fallthru
        _
      // Predicated region
      $region21: #{rede_multiplas_saidas.1} parent=11 // pred_check
        %p212 = pneg %p102
      $region22: #{rede_multiplas_saidas.1} parent=11 // pred_check_branch
        %214 = sbr.rel (%p212) target = $region24
      $region23: #{rede_multiplas_saidas.1} parent=11 // pred_region
        _
      $region24: #{rede_multiplas_saidas.1} parent=11 // pred_fallthru
        _
      // Predicated region
      $region25: #{rede_multiplas_saidas.1} parent=11 // pred_check
        %p215 = pneg %p123
      $region26: #{rede_multiplas_saidas.1} parent=11 // pred_check_branch
        %217 = sbr.rel (%p215) target = $region28
      $region27: #{rede_multiplas_saidas.1} parent=11 // pred_region
        _
      $region28: #{rede_multiplas_saidas.1} parent=11 // pred_fallthru
        _
      // Predicated region
      $region29: #{rede_multiplas_saidas.1} parent=11 // pred_check
        %p218 = pneg %p144
      $region30: #{rede_multiplas_saidas.1} parent=11 // pred_check_branch
        %220 = sbr.rel (%p218) target = $region32
      $region31: #{rede_multiplas_saidas.1} parent=11 // pred_region
        _
      $region32: #{rede_multiplas_saidas.1} parent=11 // pred_fallthru
        _
      // Predicated region
      $region33: #{rede_multiplas_saidas.1} parent=11 // pred_check
        %p221 = pneg %p165
      $region34: #{rede_multiplas_saidas.1} parent=11 // pred_check_branch
        %223 = sbr.rel (%p221) target = $region36
      $region35: #{rede_multiplas_saidas.1} parent=11 // pred_region
        _
      $region36: #{rede_multiplas_saidas.1} parent=11 // pred_fallthru
        _
    $region12: #{rede_multiplas_saidas.1} parent=5 // pred_fallthru
      _
    %p224 = scmp.lt.s32.totalorder %s13, 2
    // Predicated region
    $region37: #{rede_multiplas_saidas.1} parent=5 // pred_check
      %p225 = pneg %p224
    $region38: #{rede_multiplas_saidas.1} parent=5 // pred_check_branch
      %227 = sbr.rel (%p225) target = $region40
    $region39: #{rede_multiplas_saidas.1} parent=5 // pred_region
      // Predicated region
      $region41: #{rede_multiplas_saidas.1} parent=39 // pred_check
        %p228 = pneg %p33
      $region42: #{rede_multiplas_saidas.1} parent=39 // pred_check_branch
        %230 = sbr.rel (%p228) target = $region44
      $region43: #{rede_multiplas_saidas.1} parent=39 // pred_region
        %s231 = smul.u32 64, %s13
        %p232 = scmp.lt.s32.totalorder %s231, 127
        %s233 = scalar_select %p232, %s231, 127
        %s234 = smul.addr %s233, 4
        %s235 = scalar_lea.vmem %s0, %s234
        %s236 = smul.u32 64, %s13
      $region44: #{rede_multiplas_saidas.1} parent=39 // pred_fallthru
        _
    $region40: #{rede_multiplas_saidas.1} parent=5 // pred_fallthru
      _
    %p237 = scmp.le.s32.totalorder 1, %s13
    %p238 = scmp.lt.s32.totalorder %s13, 3
    %p239 = pnand %p237, %p238
    %p240 = pneg %p239
    // Predicated region
    $region45: #{rede_multiplas_saidas.1} parent=5 // pred_check
      _
    $region46: #{rede_multiplas_saidas.1} parent=5 // pred_check_branch
      %242 = sbr.rel (%p239) target = $region48
    $region47: #{rede_multiplas_saidas.1} parent=5 // pred_region
      %s243 = ssub.s32 %s13, 1
      %s244 = smul.u32 64, %s18
      %p245 = scmp.lt.s32.totalorder %s244, 127
      %s246 = scalar_select %p245, %s244, 127
      %s247 = smul.addr %s246, 4
      %s248 = scalar_lea.vmem %s0, %s247
      %p249 = pneg %p39
      %p250 = pneg %p36
      %p251 = pneg %p60
      %p252 = pneg %p57
      %p253 = pneg %p81
      %p254 = pneg %p78
      %p255 = pneg %p102
      %p256 = pneg %p99
      %p257 = pneg %p123
      %p258 = pneg %p120
      %p259 = pneg %p144
      %p260 = pneg %p141
      %p261 = pneg %p165
      %p262 = pneg %p162
      %p263 = pneg %p191
      %p264 = pneg %p188
      %s265 = smul.u32 64, %s18
      %p266 = scmp.lt.s32.totalorder %s265, 127
      %s267 = scalar_select %p266, %s265, 127
      %s268 = smul.addr %s267, 2
      %s269 = smul.addr %s268, 8
      %s270 = scalar_lea.vmem %s7, %s269
      %s271 = smul.u32 64, %s18
      %p272 = scmp.lt.s32.totalorder %s271, 127
      %s273 = scalar_select %p272, %s271, 127
      %s274 = smul.addr %s273, 4
      %s275 = scalar_lea.vmem %s0, %s274
      %s276 = smul.u32 64, %s18
      %s277 = smul.u32 64, %s18
      %p278 = scmp.lt.s32.totalorder %s277, 127
      %s279 = scalar_select %p278, %s277, 127
      %s280 = smul.addr %s279, 2
      %s281 = smul.addr %s280, 8
      %s282 = scalar_lea.vmem %s7, %s281
      %s283 = smul.u32 64, %s18
      %v284 = vld [vmem:[%s275] sm:$0xf]
      %v285 = vld [vmem:[%s275 + $0x4] sm:$0xf]
      %v286 = vld [vmem:[%s275 + $0x8] sm:$0xf]
      %v287 = vld [vmem:[%s275 + $0xc] sm:$0xf]
      %v288 = vld [vmem:[%s275 + $0x10] sm:$0xf]
      %v289 = vld [vmem:[%s275 + $0x14] sm:$0xf]
      %v290 = vld [vmem:[%s275 + $0x18] sm:$0xf]
      %v291 = vld [vmem:[%s275 + $0x1c] sm:$0xf]
      %v292 = vld [vmem:[%s275 + $0x20] sm:$0xf]
      %v293 = vld [vmem:[%s275 + $0x24] sm:$0xf]
      %v294 = vld [vmem:[%s275 + $0x28] sm:$0xf]
      %v295 = vld [vmem:[%s275 + $0x2c] sm:$0xf]
      %v296 = vld [vmem:[%s275 + $0x30] sm:$0xf]
      %v297 = vld [vmem:[%s275 + $0x34] sm:$0xf]
      %v298 = vld [vmem:[%s275 + $0x38] sm:$0xf]
      %v299 = vld [vmem:[%s275 + $0x3c] sm:$0xf]
      %v300 = vld [vmem:[%s275 + $0x40] sm:$0xf]
      %v301 = vld [vmem:[%s275 + $0x44] sm:$0xf]
      %v302 = vld [vmem:[%s275 + $0x48] sm:$0xf]
      %v303 = vld [vmem:[%s275 + $0x4c] sm:$0xf]
      %v304 = vld [vmem:[%s275 + $0x50] sm:$0xf]
      %v305 = vld [vmem:[%s275 + $0x54] sm:$0xf]
      %v306 = vld [vmem:[%s275 + $0x58] sm:$0xf]
      %v307 = vld [vmem:[%s275 + $0x5c] sm:$0xf]
      %v308 = vld [vmem:[%s275 + $0x60] sm:$0xf]
      %v309 = vld [vmem:[%s275 + $0x64] sm:$0xf]
      %v310 = vld [vmem:[%s275 + $0x68] sm:$0xf]
      %v311 = vld [vmem:[%s275 + $0x6c] sm:$0xf]
      %v312 = vld [vmem:[%s275 + $0x70] sm:$0xf]
      %v313 = vld [vmem:[%s275 + $0x74] sm:$0xf]
      %v314 = vld [vmem:[%s275 + $0x78] sm:$0xf]
      %v315 = vld [vmem:[%s275 + $0x7c] sm:$0xf]
      %v316 = vld [vmem:[%s275 + $0x80] sm:$0xf]
      %v317 = vld [vmem:[%s275 + $0x84] sm:$0xf]
      %v318 = vld [vmem:[%s275 + $0x88] sm:$0xf]
      %v319 = vld [vmem:[%s275 + $0x8c] sm:$0xf]
      %v320 = vld [vmem:[%s275 + $0x90] sm:$0xf]
      %v321 = vld [vmem:[%s275 + $0x94] sm:$0xf]
      %v322 = vld [vmem:[%s275 + $0x98] sm:$0xf]
      %v323 = vld [vmem:[%s275 + $0x9c] sm:$0xf]
      %v324 = vld [vmem:[%s275 + $0xa0] sm:$0xf]
      %v325 = vld [vmem:[%s275 + $0xa4] sm:$0xf]
      %v326 = vld [vmem:[%s275 + $0xa8] sm:$0xf]
      %v327 = vld [vmem:[%s275 + $0xac] sm:$0xf]
      %v328 = vld [vmem:[%s275 + $0xb0] sm:$0xf]
      %v329 = vld [vmem:[%s275 + $0xb4] sm:$0xf]
      %v330 = vld [vmem:[%s275 + $0xb8] sm:$0xf]
      %v331 = vld [vmem:[%s275 + $0xbc] sm:$0xf]
      %v332 = vld [vmem:[%s275 + $0xc0] sm:$0xf]
      %v333 = vld [vmem:[%s275 + $0xc4] sm:$0xf]
      %v334 = vld [vmem:[%s275 + $0xc8] sm:$0xf]
      %v335 = vld [vmem:[%s275 + $0xcc] sm:$0xf]
      %v336 = vld [vmem:[%s275 + $0xd0] sm:$0xf]
      %v337 = vld [vmem:[%s275 + $0xd4] sm:$0xf]
      %v338 = vld [vmem:[%s275 + $0xd8] sm:$0xf]
      %v339 = vld [vmem:[%s275 + $0xdc] sm:$0xf]
      %v340 = vld [vmem:[%s275 + $0xe0] sm:$0xf]
      %v341 = vld [vmem:[%s275 + $0xe4] sm:$0xf]
      %v342 = vld [vmem:[%s275 + $0xe8] sm:$0xf]
      %v343 = vld [vmem:[%s275 + $0xec] sm:$0xf]
      %v344 = vld [vmem:[%s275 + $0xf0] sm:$0xf]
      %v345 = vld [vmem:[%s275 + $0xf4] sm:$0xf]
      %v346 = vld [vmem:[%s275 + $0xf8] sm:$0xf]
      %v347 = vld [vmem:[%s275 + $0xfc] sm:$0xf]
      %v348 = vld [vmem:[%s1] sm:$0xf]
      %v349 = vld [vmem:[%s1 + $0x4] sm:$0xf]
      %v350 = vld [vmem:[%s1 + $0x8] sm:$0xf]
      %v351 = vld [vmem:[%s1 + $0xc] sm:$0xf]
      %v352 = vld [vmem:[%s1 + $0x10] sm:$0xf]
      %v353 = vld [vmem:[%s1 + $0x14] sm:$0xf]
      %v354 = vld [vmem:[%s1 + $0x18] sm:$0xf]
      %v355 = vld [vmem:[%s1 + $0x1c] sm:$0xf]
      %v356 = vld [vmem:[%s1 + $0x20] sm:$0xf]
      %v357 = vld [vmem:[%s1 + $0x24] sm:$0xf]
      %v358 = vld [vmem:[%s1 + $0x28] sm:$0xf]
      %v359 = vld [vmem:[%s1 + $0x2c] sm:$0xf]
      %v360 = vld [vmem:[%s1 + $0x30] sm:$0xf]
      %v361 = vld [vmem:[%s1 + $0x34] sm:$0xf]
      %v362 = vld [vmem:[%s1 + $0x38] sm:$0xf]
      %v363 = vld [vmem:[%s1 + $0x3c] sm:$0xf]
      %v364 = vld [vmem:[%s2] sm:$0x1]
      %v366 = vperm.slane %v364, 0
      %v432 = vunpack.c.l.b16 %v284
      %v433 = vunpack.c.l.b16 %v285
      %v434 = vunpack.c.l.b16 %v286
      %v435 = vunpack.c.l.b16 %v287
      %v436 = vunpack.c.l.b16 %v288
      %v437 = vunpack.c.l.b16 %v289
      %v438 = vunpack.c.l.b16 %v290
      %v439 = vunpack.c.l.b16 %v291
      %v440 = vunpack.c.l.b16 %v292
      %v441 = vunpack.c.l.b16 %v293
      %v442 = vunpack.c.l.b16 %v294
      %v443 = vunpack.c.l.b16 %v295
      %v444 = vunpack.c.l.b16 %v296
      %v445 = vunpack.c.l.b16 %v297
      %v446 = vunpack.c.l.b16 %v298
      %v447 = vunpack.c.l.b16 %v299
      %v448 = vunpack.c.l.b16 %v300
      %v449 = vunpack.c.l.b16 %v301
      %v450 = vunpack.c.l.b16 %v302
      %v451 = vunpack.c.l.b16 %v303
      %v452 = vunpack.c.l.b16 %v304
      %v453 = vunpack.c.l.b16 %v305
      %v454 = vunpack.c.l.b16 %v306
      %v455 = vunpack.c.l.b16 %v307
      %v456 = vunpack.c.l.b16 %v308
      %v457 = vunpack.c.l.b16 %v309
      %v458 = vunpack.c.l.b16 %v310
      %v459 = vunpack.c.l.b16 %v311
      %v460 = vunpack.c.l.b16 %v312
      %v461 = vunpack.c.l.b16 %v313
      %v462 = vunpack.c.l.b16 %v314
      %v463 = vunpack.c.l.b16 %v315
      %v464 = vunpack.c.l.b16 %v316
      %v465 = vunpack.c.l.b16 %v317
      %v466 = vunpack.c.l.b16 %v318
      %v467 = vunpack.c.l.b16 %v319
      %v468 = vunpack.c.l.b16 %v320
      %v469 = vunpack.c.l.b16 %v321
      %v470 = vunpack.c.l.b16 %v322
      %v471 = vunpack.c.l.b16 %v323
      %v472 = vunpack.c.l.b16 %v324
      %v473 = vunpack.c.l.b16 %v325
      %v474 = vunpack.c.l.b16 %v326
      %v475 = vunpack.c.l.b16 %v327
      %v476 = vunpack.c.l.b16 %v328
      %v477 = vunpack.c.l.b16 %v329
      %v478 = vunpack.c.l.b16 %v330
      %v479 = vunpack.c.l.b16 %v331
      %v480 = vunpack.c.l.b16 %v332
      %v481 = vunpack.c.l.b16 %v333
      %v482 = vunpack.c.l.b16 %v334
      %v483 = vunpack.c.l.b16 %v335
      %v484 = vunpack.c.l.b16 %v336
      %v485 = vunpack.c.l.b16 %v337
      %v486 = vunpack.c.l.b16 %v338
      %v487 = vunpack.c.l.b16 %v339
      %v488 = vunpack.c.l.b16 %v340
      %v489 = vunpack.c.l.b16 %v341
      %v490 = vunpack.c.l.b16 %v342
      %v491 = vunpack.c.l.b16 %v343
      %v492 = vunpack.c.l.b16 %v344
      %v493 = vunpack.c.l.b16 %v345
      %v494 = vunpack.c.l.b16 %v346
      %v495 = vunpack.c.l.b16 %v347
      %v496 = vpack.c.b16 %v433, %v432
      %v497 = vpack.c.b16 %v435, %v434
      %v498 = vpack.c.b16 %v437, %v436
      %v499 = vpack.c.b16 %v439, %v438
      %v500 = vpack.c.b16 %v441, %v440
      %v501 = vpack.c.b16 %v443, %v442
      %v502 = vpack.c.b16 %v445, %v444
      %v503 = vpack.c.b16 %v447, %v446
      %v504 = vpack.c.b16 %v449, %v448
      %v505 = vpack.c.b16 %v451, %v450
      %v506 = vpack.c.b16 %v453, %v452
      %v507 = vpack.c.b16 %v455, %v454
      %v508 = vpack.c.b16 %v457, %v456
      %v509 = vpack.c.b16 %v459, %v458
      %v510 = vpack.c.b16 %v461, %v460
      %v511 = vpack.c.b16 %v463, %v462
      %v512 = vpack.c.b16 %v465, %v464
      %v513 = vpack.c.b16 %v467, %v466
      %v514 = vpack.c.b16 %v469, %v468
      %v515 = vpack.c.b16 %v471, %v470
      %v516 = vpack.c.b16 %v473, %v472
      %v517 = vpack.c.b16 %v475, %v474
      %v518 = vpack.c.b16 %v477, %v476
      %v519 = vpack.c.b16 %v479, %v478
      %v520 = vpack.c.b16 %v481, %v480
      %v521 = vpack.c.b16 %v483, %v482
      %v522 = vpack.c.b16 %v485, %v484
      %v523 = vpack.c.b16 %v487, %v486
      %v524 = vpack.c.b16 %v489, %v488
      %v525 = vpack.c.b16 %v491, %v490
      %v526 = vpack.c.b16 %v493, %v492
      %v527 = vpack.c.b16 %v495, %v494
      %v576 = vunpack.c.l.b16 %v348
      %v577 = vunpack.c.l.b16 %v349
      %v578 = vunpack.c.l.b16 %v350
      %v579 = vunpack.c.l.b16 %v351
      %v580 = vunpack.c.l.b16 %v352
      %v581 = vunpack.c.l.b16 %v353
      %v582 = vunpack.c.l.b16 %v354
      %v583 = vunpack.c.l.b16 %v355
      %v584 = vunpack.c.l.b16 %v356
      %v585 = vunpack.c.l.b16 %v357
      %v586 = vunpack.c.l.b16 %v358
      %v587 = vunpack.c.l.b16 %v359
      %v588 = vunpack.c.l.b16 %v360
      %v589 = vunpack.c.l.b16 %v361
      %v590 = vunpack.c.l.b16 %v362
      %v591 = vunpack.c.l.b16 %v363
      %v592 = vpack.c.b16 %v577, %v576
      %v593 = vpack.c.b16 %v579, %v578
      %v594 = vpack.c.b16 %v581, %v580
      %v595 = vpack.c.b16 %v583, %v582
      %v596 = vpack.c.b16 %v585, %v584
      %v597 = vpack.c.b16 %v587, %v586
      %v598 = vpack.c.b16 %v589, %v588
      %v599 = vpack.c.b16 %v591, %v590
      %608 = vmatpush.bf16.msra.mxu0 %v599
      %609 = vmatpush.bf16.msra.mxu0 %v598
      %610 = vmatpush.bf16.msra.mxu0 %v597
      %611 = vmatpush.bf16.msra.mxu0 %v596
      %612 = vmatpush.bf16.msra.mxu0 %v595
      %613 = vmatpush.bf16.msra.mxu0 %v594
      %614 = vmatpush.bf16.msra.mxu0 %v593
      %615 = vmatpush.bf16.msra.mxu0 %v592
      %616 = vmatmul.bf16.gmra.mxu0 %v496
      %v617 = vpop.f32.mrf.mxu0
      %v618 = vadd.f32 %v366, %v617
      %v619 = vpop.f32.mrf.mxu0
      %v620 = vadd.f32 %v366, %v619
      %621 = vmatmul.bf16.gmra.mxu0 %v497
      %v622 = vpop.f32.mrf.mxu0
      %v623 = vadd.f32 %v366, %v622
      %v624 = vpop.f32.mrf.mxu0
      %v625 = vadd.f32 %v366, %v624
      %626 = vmatmul.bf16.gmra.mxu0 %v498
      %v627 = vpop.f32.mrf.mxu0
      %v628 = vadd.f32 %v366, %v627
      %v629 = vpop.f32.mrf.mxu0
      %v630 = vadd.f32 %v366, %v629
      %631 = vmatmul.bf16.gmra.mxu0 %v499
      %v632 = vpop.f32.mrf.mxu0
      %v633 = vadd.f32 %v366, %v632
      %v634 = vpop.f32.mrf.mxu0
      %v635 = vadd.f32 %v366, %v634
      %636 = vmatmul.bf16.gmra.mxu0 %v500
      %v637 = vpop.f32.mrf.mxu0
      %v638 = vadd.f32 %v366, %v637
      %v639 = vpop.f32.mrf.mxu0
      %v640 = vadd.f32 %v366, %v639
      %641 = vmatmul.bf16.gmra.mxu0 %v501
      %v642 = vpop.f32.mrf.mxu0
      %v643 = vadd.f32 %v366, %v642
      %v644 = vpop.f32.mrf.mxu0
      %v645 = vadd.f32 %v366, %v644
      %646 = vmatmul.bf16.gmra.mxu0 %v502
      %v647 = vpop.f32.mrf.mxu0
      %v648 = vadd.f32 %v366, %v647
      %v649 = vpop.f32.mrf.mxu0
      %v650 = vadd.f32 %v366, %v649
      %651 = vmatmul.bf16.gmra.mxu0 %v503
      %v652 = vpop.f32.mrf.mxu0
      %v653 = vadd.f32 %v366, %v652
      %v654 = vpop.f32.mrf.mxu0
      %v655 = vadd.f32 %v366, %v654
      %656 = vmatmul.bf16.gmra.mxu0 %v504
      %v657 = vpop.f32.mrf.mxu0
      %v658 = vadd.f32 %v366, %v657
      %v659 = vpop.f32.mrf.mxu0
      %v660 = vadd.f32 %v366, %v659
      %661 = vmatmul.bf16.gmra.mxu0 %v505
      %v662 = vpop.f32.mrf.mxu0
      %v663 = vadd.f32 %v366, %v662
      %v664 = vpop.f32.mrf.mxu0
      %v665 = vadd.f32 %v366, %v664
      %666 = vmatmul.bf16.gmra.mxu0 %v506
      %v667 = vpop.f32.mrf.mxu0
      %v668 = vadd.f32 %v366, %v667
      %v669 = vpop.f32.mrf.mxu0
      %v670 = vadd.f32 %v366, %v669
      %671 = vmatmul.bf16.gmra.mxu0 %v507
      %v672 = vpop.f32.mrf.mxu0
      %v673 = vadd.f32 %v366, %v672
      %v674 = vpop.f32.mrf.mxu0
      %v675 = vadd.f32 %v366, %v674
      %676 = vmatmul.bf16.gmra.mxu0 %v508
      %v677 = vpop.f32.mrf.mxu0
      %v678 = vadd.f32 %v366, %v677
      %v679 = vpop.f32.mrf.mxu0
      %v680 = vadd.f32 %v366, %v679
      %681 = vmatmul.bf16.gmra.mxu0 %v509
      %v682 = vpop.f32.mrf.mxu0
      %v683 = vadd.f32 %v366, %v682
      %v684 = vpop.f32.mrf.mxu0
      %v685 = vadd.f32 %v366, %v684
      %686 = vmatmul.bf16.gmra.mxu0 %v510
      %v687 = vpop.f32.mrf.mxu0
      %v688 = vadd.f32 %v366, %v687
      %v689 = vpop.f32.mrf.mxu0
      %v690 = vadd.f32 %v366, %v689
      %691 = vmatmul.bf16.gmra.mxu0 %v511
      %v692 = vpop.f32.mrf.mxu0
      %v693 = vadd.f32 %v366, %v692
      %v694 = vpop.f32.mrf.mxu0
      %v695 = vadd.f32 %v366, %v694
      %696 = vmatmul.bf16.gmra.mxu0 %v512
      %v697 = vpop.f32.mrf.mxu0
      %v698 = vadd.f32 %v366, %v697
      %v699 = vpop.f32.mrf.mxu0
      %v700 = vadd.f32 %v366, %v699
      %701 = vmatmul.bf16.gmra.mxu0 %v513
      %v702 = vpop.f32.mrf.mxu0
      %v703 = vadd.f32 %v366, %v702
      %v704 = vpop.f32.mrf.mxu0
      %v705 = vadd.f32 %v366, %v704
      %706 = vmatmul.bf16.gmra.mxu0 %v514
      %v707 = vpop.f32.mrf.mxu0
      %v708 = vadd.f32 %v366, %v707
      %v709 = vpop.f32.mrf.mxu0
      %v710 = vadd.f32 %v366, %v709
      %711 = vmatmul.bf16.gmra.mxu0 %v515
      %v712 = vpop.f32.mrf.mxu0
      %v713 = vadd.f32 %v366, %v712
      %v714 = vpop.f32.mrf.mxu0
      %v715 = vadd.f32 %v366, %v714
      %716 = vmatmul.bf16.gmra.mxu0 %v516
      %v717 = vpop.f32.mrf.mxu0
      %v718 = vadd.f32 %v366, %v717
      %v719 = vpop.f32.mrf.mxu0
      %v720 = vadd.f32 %v366, %v719
      %721 = vmatmul.bf16.gmra.mxu0 %v517
      %v722 = vpop.f32.mrf.mxu0
      %v723 = vadd.f32 %v366, %v722
      %v724 = vpop.f32.mrf.mxu0
      %v725 = vadd.f32 %v366, %v724
      %726 = vmatmul.bf16.gmra.mxu0 %v518
      %v727 = vpop.f32.mrf.mxu0
      %v728 = vadd.f32 %v366, %v727
      %v729 = vpop.f32.mrf.mxu0
      %v730 = vadd.f32 %v366, %v729
      %731 = vmatmul.bf16.gmra.mxu0 %v519
      %v732 = vpop.f32.mrf.mxu0
      %v733 = vadd.f32 %v366, %v732
      %v734 = vpop.f32.mrf.mxu0
      %v735 = vadd.f32 %v366, %v734
      %736 = vmatmul.bf16.gmra.mxu0 %v520
      %v737 = vpop.f32.mrf.mxu0
      %v738 = vadd.f32 %v366, %v737
      %v739 = vpop.f32.mrf.mxu0
      %v740 = vadd.f32 %v366, %v739
      %741 = vmatmul.bf16.gmra.mxu0 %v521
      %v742 = vpop.f32.mrf.mxu0
      %v743 = vadd.f32 %v366, %v742
      %v744 = vpop.f32.mrf.mxu0
      %v745 = vadd.f32 %v366, %v744
      %746 = vmatmul.bf16.gmra.mxu0 %v522
      %v747 = vpop.f32.mrf.mxu0
      %v748 = vadd.f32 %v366, %v747
      %v749 = vpop.f32.mrf.mxu0
      %v750 = vadd.f32 %v366, %v749
      %751 = vmatmul.bf16.gmra.mxu0 %v523
      %v752 = vpop.f32.mrf.mxu0
      %v753 = vadd.f32 %v366, %v752
      %v754 = vpop.f32.mrf.mxu0
      %v755 = vadd.f32 %v366, %v754
      %756 = vmatmul.bf16.gmra.mxu0 %v524
      %v757 = vpop.f32.mrf.mxu0
      %v758 = vadd.f32 %v366, %v757
      %v759 = vpop.f32.mrf.mxu0
      %v760 = vadd.f32 %v366, %v759
      %761 = vmatmul.bf16.gmra.mxu0 %v525
      %v762 = vpop.f32.mrf.mxu0
      %v763 = vadd.f32 %v366, %v762
      %v764 = vpop.f32.mrf.mxu0
      %v765 = vadd.f32 %v366, %v764
      %766 = vmatmul.bf16.gmra.mxu0 %v526
      %v767 = vpop.f32.mrf.mxu0
      %v768 = vadd.f32 %v366, %v767
      %v769 = vpop.f32.mrf.mxu0
      %v770 = vadd.f32 %v366, %v769
      %771 = vmatmul.bf16.gmra.mxu0 %v527
      %v772 = vpop.f32.mrf.mxu0
      %v773 = vadd.f32 %v366, %v772
      %v774 = vpop.f32.mrf.mxu0
      %v775 = vadd.f32 %v366, %v774
      %776 = vdwg.mxu0
      %v777 = vmax.f32 %v618, 0.0
      %v778 = vmax.f32 %v620, 0.0
      %v779 = vmax.f32 %v623, 0.0
      %v780 = vmax.f32 %v625, 0.0
      %v781 = vmax.f32 %v628, 0.0
      %v782 = vmax.f32 %v630, 0.0
      %v783 = vmax.f32 %v633, 0.0
      %v784 = vmax.f32 %v635, 0.0
      %v785 = vmax.f32 %v638, 0.0
      %v786 = vmax.f32 %v640, 0.0
      %v787 = vmax.f32 %v643, 0.0
      %v788 = vmax.f32 %v645, 0.0
      %v789 = vmax.f32 %v648, 0.0
      %v790 = vmax.f32 %v650, 0.0
      %v791 = vmax.f32 %v653, 0.0
      %v792 = vmax.f32 %v655, 0.0
      %v793 = vmax.f32 %v658, 0.0
      %v794 = vmax.f32 %v660, 0.0
      %v795 = vmax.f32 %v663, 0.0
      %v796 = vmax.f32 %v665, 0.0
      %v797 = vmax.f32 %v668, 0.0
      %v798 = vmax.f32 %v670, 0.0
      %v799 = vmax.f32 %v673, 0.0
      %v800 = vmax.f32 %v675, 0.0
      %v801 = vmax.f32 %v678, 0.0
      %v802 = vmax.f32 %v680, 0.0
      %v803 = vmax.f32 %v683, 0.0
      %v804 = vmax.f32 %v685, 0.0
      %v805 = vmax.f32 %v688, 0.0
      %v806 = vmax.f32 %v690, 0.0
      %v807 = vmax.f32 %v693, 0.0
      %v808 = vmax.f32 %v695, 0.0
      %v809 = vmax.f32 %v698, 0.0
      %v810 = vmax.f32 %v700, 0.0
      %v811 = vmax.f32 %v703, 0.0
      %v812 = vmax.f32 %v705, 0.0
      %v813 = vmax.f32 %v708, 0.0
      %v814 = vmax.f32 %v710, 0.0
      %v815 = vmax.f32 %v713, 0.0
      %v816 = vmax.f32 %v715, 0.0
      %v817 = vmax.f32 %v718, 0.0
      %v818 = vmax.f32 %v720, 0.0
      %v819 = vmax.f32 %v723, 0.0
      %v820 = vmax.f32 %v725, 0.0
      %v821 = vmax.f32 %v728, 0.0
      %v822 = vmax.f32 %v730, 0.0
      %v823 = vmax.f32 %v733, 0.0
      %v824 = vmax.f32 %v735, 0.0
      %v825 = vmax.f32 %v738, 0.0
      %v826 = vmax.f32 %v740, 0.0
      %v827 = vmax.f32 %v743, 0.0
      %v828 = vmax.f32 %v745, 0.0
      %v829 = vmax.f32 %v748, 0.0
      %v830 = vmax.f32 %v750, 0.0
      %v831 = vmax.f32 %v753, 0.0
      %v832 = vmax.f32 %v755, 0.0
      %v833 = vmax.f32 %v758, 0.0
      %v834 = vmax.f32 %v760, 0.0
      %v835 = vmax.f32 %v763, 0.0
      %v836 = vmax.f32 %v765, 0.0
      %v837 = vmax.f32 %v768, 0.0
      %v838 = vmax.f32 %v770, 0.0
      %v839 = vmax.f32 %v773, 0.0
      %v840 = vmax.f32 %v775, 0.0
      %v841 = vpack.c.bf16 %v778, %v777
      %v842 = vpack.c.bf16 %v780, %v779
      %v843 = vpack.c.bf16 %v782, %v781
      %v844 = vpack.c.bf16 %v784, %v783
      %v845 = vpack.c.bf16 %v786, %v785
      %v846 = vpack.c.bf16 %v788, %v787
      %v847 = vpack.c.bf16 %v790, %v789
      %v848 = vpack.c.bf16 %v792, %v791
      %v849 = vpack.c.bf16 %v794, %v793
      %v850 = vpack.c.bf16 %v796, %v795
      %v851 = vpack.c.bf16 %v798, %v797
      %v852 = vpack.c.bf16 %v800, %v799
      %v853 = vpack.c.bf16 %v802, %v801
      %v854 = vpack.c.bf16 %v804, %v803
      %v855 = vpack.c.bf16 %v806, %v805
      %v856 = vpack.c.bf16 %v808, %v807
      %v857 = vpack.c.bf16 %v810, %v809
      %v858 = vpack.c.bf16 %v812, %v811
      %v859 = vpack.c.bf16 %v814, %v813
      %v860 = vpack.c.bf16 %v816, %v815
      %v861 = vpack.c.bf16 %v818, %v817
      %v862 = vpack.c.bf16 %v820, %v819
      %v863 = vpack.c.bf16 %v822, %v821
      %v864 = vpack.c.bf16 %v824, %v823
      %v865 = vpack.c.bf16 %v826, %v825
      %v866 = vpack.c.bf16 %v828, %v827
      %v867 = vpack.c.bf16 %v830, %v829
      %v868 = vpack.c.bf16 %v832, %v831
      %v869 = vpack.c.bf16 %v834, %v833
      %v870 = vpack.c.bf16 %v836, %v835
      %v871 = vpack.c.bf16 %v838, %v837
      %v872 = vpack.c.bf16 %v840, %v839
      %v873 = vld [vmem:[%s3] sm:$0xf]
      %v874 = vld [vmem:[%s3 + $0x4] sm:$0xf]
      %v875 = vld [vmem:[%s3 + $0x8] sm:$0xf]
      %v876 = vld [vmem:[%s3 + $0xc] sm:$0xf]
      %v877 = vld [vmem:[%s3 + $0x10] sm:$0xf]
      %v878 = vld [vmem:[%s3 + $0x14] sm:$0xf]
      %v879 = vld [vmem:[%s3 + $0x18] sm:$0xf]
      %v880 = vld [vmem:[%s3 + $0x1c] sm:$0xf]
      %v881 = vld [vmem:[%s3 + $0x20] sm:$0xf]
      %v882 = vld [vmem:[%s3 + $0x24] sm:$0xf]
      %v883 = vld [vmem:[%s3 + $0x28] sm:$0xf]
      %v884 = vld [vmem:[%s3 + $0x2c] sm:$0xf]
      %v885 = vld [vmem:[%s3 + $0x30] sm:$0xf]
      %v886 = vld [vmem:[%s3 + $0x34] sm:$0xf]
      %v887 = vld [vmem:[%s3 + $0x38] sm:$0xf]
      %v888 = vld [vmem:[%s3 + $0x3c] sm:$0xf]
      %v889 = vld [vmem:[%s4] sm:$0x1]
      %v891 = vperm.slane %v889, 0
      %v909 = vunpack.c.l.b16 %v873
      %v910 = vunpack.c.l.b16 %v874
      %v911 = vunpack.c.l.b16 %v875
      %v912 = vunpack.c.l.b16 %v876
      %v913 = vunpack.c.l.b16 %v877
      %v914 = vunpack.c.l.b16 %v878
      %v915 = vunpack.c.l.b16 %v879
      %v916 = vunpack.c.l.b16 %v880
      %v917 = vunpack.c.l.b16 %v881
      %v918 = vunpack.c.l.b16 %v882
      %v919 = vunpack.c.l.b16 %v883
      %v920 = vunpack.c.l.b16 %v884
      %v921 = vunpack.c.l.b16 %v885
      %v922 = vunpack.c.l.b16 %v886
      %v923 = vunpack.c.l.b16 %v887
      %v924 = vunpack.c.l.b16 %v888
      %v925 = vpack.c.b16 %v910, %v909
      %v926 = vpack.c.b16 %v912, %v911
      %v927 = vpack.c.b16 %v914, %v913
      %v928 = vpack.c.b16 %v916, %v915
      %v929 = vpack.c.b16 %v918, %v917
      %v930 = vpack.c.b16 %v920, %v919
      %v931 = vpack.c.b16 %v922, %v921
      %v932 = vpack.c.b16 %v924, %v923
      %941 = vmatpush.bf16.msra.mxu0 %v932
      %942 = vmatpush.bf16.msra.mxu0 %v931
      %943 = vmatpush.bf16.msra.mxu0 %v930
      %944 = vmatpush.bf16.msra.mxu0 %v929
      %945 = vmatpush.bf16.msra.mxu0 %v928
      %946 = vmatpush.bf16.msra.mxu0 %v927
      %947 = vmatpush.bf16.msra.mxu0 %v926
      %948 = vmatpush.bf16.msra.mxu0 %v925
      %949 = vmatmul.bf16.gmra.mxu0 %v841
      %v950 = vpop.f32.mrf.mxu0
      %v951 = vadd.f32 %v891, %v950
      %v952 = vpop.f32.mrf.mxu0
      %v953 = vadd.f32 %v891, %v952
      %954 = vmatmul.bf16.gmra.mxu0 %v842
      %v955 = vpop.f32.mrf.mxu0
      %v956 = vadd.f32 %v891, %v955
      %v957 = vpop.f32.mrf.mxu0
      %v958 = vadd.f32 %v891, %v957
      %959 = vmatmul.bf16.gmra.mxu0 %v843
      %v960 = vpop.f32.mrf.mxu0
      %v961 = vadd.f32 %v891, %v960
      %v962 = vpop.f32.mrf.mxu0
      %v963 = vadd.f32 %v891, %v962
      %964 = vmatmul.bf16.gmra.mxu0 %v844
      %v965 = vpop.f32.mrf.mxu0
      %v966 = vadd.f32 %v891, %v965
      %v967 = vpop.f32.mrf.mxu0
      %v968 = vadd.f32 %v891, %v967
      %969 = vmatmul.bf16.gmra.mxu0 %v845
      %v970 = vpop.f32.mrf.mxu0
      %v971 = vadd.f32 %v891, %v970
      %v972 = vpop.f32.mrf.mxu0
      %v973 = vadd.f32 %v891, %v972
      %974 = vmatmul.bf16.gmra.mxu0 %v846
      %v975 = vpop.f32.mrf.mxu0
      %v976 = vadd.f32 %v891, %v975
      %v977 = vpop.f32.mrf.mxu0
      %v978 = vadd.f32 %v891, %v977
      %979 = vmatmul.bf16.gmra.mxu0 %v847
      %v980 = vpop.f32.mrf.mxu0
      %v981 = vadd.f32 %v891, %v980
      %v982 = vpop.f32.mrf.mxu0
      %v983 = vadd.f32 %v891, %v982
      %984 = vmatmul.bf16.gmra.mxu0 %v848
      %v985 = vpop.f32.mrf.mxu0
      %v986 = vadd.f32 %v891, %v985
      %v987 = vpop.f32.mrf.mxu0
      %v988 = vadd.f32 %v891, %v987
      %989 = vmatmul.bf16.gmra.mxu0 %v849
      %v990 = vpop.f32.mrf.mxu0
      %v991 = vadd.f32 %v891, %v990
      %v992 = vpop.f32.mrf.mxu0
      %v993 = vadd.f32 %v891, %v992
      %994 = vmatmul.bf16.gmra.mxu0 %v850
      %v995 = vpop.f32.mrf.mxu0
      %v996 = vadd.f32 %v891, %v995
      %v997 = vpop.f32.mrf.mxu0
      %v998 = vadd.f32 %v891, %v997
      %999 = vmatmul.bf16.gmra.mxu0 %v851
      %v1000 = vpop.f32.mrf.mxu0
      %v1001 = vadd.f32 %v891, %v1000
      %v1002 = vpop.f32.mrf.mxu0
      %v1003 = vadd.f32 %v891, %v1002
      %1004 = vmatmul.bf16.gmra.mxu0 %v852
      %v1005 = vpop.f32.mrf.mxu0
      %v1006 = vadd.f32 %v891, %v1005
      %v1007 = vpop.f32.mrf.mxu0
      %v1008 = vadd.f32 %v891, %v1007
      %1009 = vmatmul.bf16.gmra.mxu0 %v853
      %v1010 = vpop.f32.mrf.mxu0
      %v1011 = vadd.f32 %v891, %v1010
      %v1012 = vpop.f32.mrf.mxu0
      %v1013 = vadd.f32 %v891, %v1012
      %1014 = vmatmul.bf16.gmra.mxu0 %v854
      %v1015 = vpop.f32.mrf.mxu0
      %v1016 = vadd.f32 %v891, %v1015
      %v1017 = vpop.f32.mrf.mxu0
      %v1018 = vadd.f32 %v891, %v1017
      %1019 = vmatmul.bf16.gmra.mxu0 %v855
      %v1020 = vpop.f32.mrf.mxu0
      %v1021 = vadd.f32 %v891, %v1020
      %v1022 = vpop.f32.mrf.mxu0
      %v1023 = vadd.f32 %v891, %v1022
      %1024 = vmatmul.bf16.gmra.mxu0 %v856
      %v1025 = vpop.f32.mrf.mxu0
      %v1026 = vadd.f32 %v891, %v1025
      %v1027 = vpop.f32.mrf.mxu0
      %v1028 = vadd.f32 %v891, %v1027
      %1029 = vmatmul.bf16.gmra.mxu0 %v857
      %v1030 = vpop.f32.mrf.mxu0
      %v1031 = vadd.f32 %v891, %v1030
      %v1032 = vpop.f32.mrf.mxu0
      %v1033 = vadd.f32 %v891, %v1032
      %1034 = vmatmul.bf16.gmra.mxu0 %v858
      %v1035 = vpop.f32.mrf.mxu0
      %v1036 = vadd.f32 %v891, %v1035
      %v1037 = vpop.f32.mrf.mxu0
      %v1038 = vadd.f32 %v891, %v1037
      %1039 = vmatmul.bf16.gmra.mxu0 %v859
      %v1040 = vpop.f32.mrf.mxu0
      %v1041 = vadd.f32 %v891, %v1040
      %v1042 = vpop.f32.mrf.mxu0
      %v1043 = vadd.f32 %v891, %v1042
      %1044 = vmatmul.bf16.gmra.mxu0 %v860
      %v1045 = vpop.f32.mrf.mxu0
      %v1046 = vadd.f32 %v891, %v1045
      %v1047 = vpop.f32.mrf.mxu0
      %v1048 = vadd.f32 %v891, %v1047
      %1049 = vmatmul.bf16.gmra.mxu0 %v861
      %v1050 = vpop.f32.mrf.mxu0
      %v1051 = vadd.f32 %v891, %v1050
      %v1052 = vpop.f32.mrf.mxu0
      %v1053 = vadd.f32 %v891, %v1052
      %1054 = vmatmul.bf16.gmra.mxu0 %v862
      %v1055 = vpop.f32.mrf.mxu0
      %v1056 = vadd.f32 %v891, %v1055
      %v1057 = vpop.f32.mrf.mxu0
      %v1058 = vadd.f32 %v891, %v1057
      %1059 = vmatmul.bf16.gmra.mxu0 %v863
      %v1060 = vpop.f32.mrf.mxu0
      %v1061 = vadd.f32 %v891, %v1060
      %v1062 = vpop.f32.mrf.mxu0
      %v1063 = vadd.f32 %v891, %v1062
      %1064 = vmatmul.bf16.gmra.mxu0 %v864
      %v1065 = vpop.f32.mrf.mxu0
      %v1066 = vadd.f32 %v891, %v1065
      %v1067 = vpop.f32.mrf.mxu0
      %v1068 = vadd.f32 %v891, %v1067
      %1069 = vmatmul.bf16.gmra.mxu0 %v865
      %v1070 = vpop.f32.mrf.mxu0
      %v1071 = vadd.f32 %v891, %v1070
      %v1072 = vpop.f32.mrf.mxu0
      %v1073 = vadd.f32 %v891, %v1072
      %1074 = vmatmul.bf16.gmra.mxu0 %v866
      %v1075 = vpop.f32.mrf.mxu0
      %v1076 = vadd.f32 %v891, %v1075
      %v1077 = vpop.f32.mrf.mxu0
      %v1078 = vadd.f32 %v891, %v1077
      %1079 = vmatmul.bf16.gmra.mxu0 %v867
      %v1080 = vpop.f32.mrf.mxu0
      %v1081 = vadd.f32 %v891, %v1080
      %v1082 = vpop.f32.mrf.mxu0
      %v1083 = vadd.f32 %v891, %v1082
      %1084 = vmatmul.bf16.gmra.mxu0 %v868
      %v1085 = vpop.f32.mrf.mxu0
      %v1086 = vadd.f32 %v891, %v1085
      %v1087 = vpop.f32.mrf.mxu0
      %v1088 = vadd.f32 %v891, %v1087
      %1089 = vmatmul.bf16.gmra.mxu0 %v869
      %v1090 = vpop.f32.mrf.mxu0
      %v1091 = vadd.f32 %v891, %v1090
      %v1092 = vpop.f32.mrf.mxu0
      %v1093 = vadd.f32 %v891, %v1092
      %1094 = vmatmul.bf16.gmra.mxu0 %v870
      %v1095 = vpop.f32.mrf.mxu0
      %v1096 = vadd.f32 %v891, %v1095
      %v1097 = vpop.f32.mrf.mxu0
      %v1098 = vadd.f32 %v891, %v1097
      %1099 = vmatmul.bf16.gmra.mxu0 %v871
      %v1100 = vpop.f32.mrf.mxu0
      %v1101 = vadd.f32 %v891, %v1100
      %v1102 = vpop.f32.mrf.mxu0
      %v1103 = vadd.f32 %v891, %v1102
      %1104 = vmatmul.bf16.gmra.mxu0 %v872
      %v1105 = vpop.f32.mrf.mxu0
      %v1106 = vadd.f32 %v891, %v1105
      %v1107 = vpop.f32.mrf.mxu0
      %v1108 = vadd.f32 %v891, %v1107
      %1109 = vdwg.mxu0
      %v1110 = vmax.f32 %v951, 0.0
      %v1111 = vmax.f32 %v953, 0.0
      %v1112 = vmax.f32 %v956, 0.0
      %v1113 = vmax.f32 %v958, 0.0
      %v1114 = vmax.f32 %v961, 0.0
      %v1115 = vmax.f32 %v963, 0.0
      %v1116 = vmax.f32 %v966, 0.0
      %v1117 = vmax.f32 %v968, 0.0
      %v1118 = vmax.f32 %v971, 0.0
      %v1119 = vmax.f32 %v973, 0.0
      %v1120 = vmax.f32 %v976, 0.0
      %v1121 = vmax.f32 %v978, 0.0
      %v1122 = vmax.f32 %v981, 0.0
      %v1123 = vmax.f32 %v983, 0.0
      %v1124 = vmax.f32 %v986, 0.0
      %v1125 = vmax.f32 %v988, 0.0
      %v1126 = vmax.f32 %v991, 0.0
      %v1127 = vmax.f32 %v993, 0.0
      %v1128 = vmax.f32 %v996, 0.0
      %v1129 = vmax.f32 %v998, 0.0
      %v1130 = vmax.f32 %v1001, 0.0
      %v1131 = vmax.f32 %v1003, 0.0
      %v1132 = vmax.f32 %v1006, 0.0
      %v1133 = vmax.f32 %v1008, 0.0
      %v1134 = vmax.f32 %v1011, 0.0
      %v1135 = vmax.f32 %v1013, 0.0
      %v1136 = vmax.f32 %v1016, 0.0
      %v1137 = vmax.f32 %v1018, 0.0
      %v1138 = vmax.f32 %v1021, 0.0
      %v1139 = vmax.f32 %v1023, 0.0
      %v1140 = vmax.f32 %v1026, 0.0
      %v1141 = vmax.f32 %v1028, 0.0
      %v1142 = vmax.f32 %v1031, 0.0
      %v1143 = vmax.f32 %v1033, 0.0
      %v1144 = vmax.f32 %v1036, 0.0
      %v1145 = vmax.f32 %v1038, 0.0
      %v1146 = vmax.f32 %v1041, 0.0
      %v1147 = vmax.f32 %v1043, 0.0
      %v1148 = vmax.f32 %v1046, 0.0
      %v1149 = vmax.f32 %v1048, 0.0
      %v1150 = vmax.f32 %v1051, 0.0
      %v1151 = vmax.f32 %v1053, 0.0
      %v1152 = vmax.f32 %v1056, 0.0
      %v1153 = vmax.f32 %v1058, 0.0
      %v1154 = vmax.f32 %v1061, 0.0
      %v1155 = vmax.f32 %v1063, 0.0
      %v1156 = vmax.f32 %v1066, 0.0
      %v1157 = vmax.f32 %v1068, 0.0
      %v1158 = vmax.f32 %v1071, 0.0
      %v1159 = vmax.f32 %v1073, 0.0
      %v1160 = vmax.f32 %v1076, 0.0
      %v1161 = vmax.f32 %v1078, 0.0
      %v1162 = vmax.f32 %v1081, 0.0
      %v1163 = vmax.f32 %v1083, 0.0
      %v1164 = vmax.f32 %v1086, 0.0
      %v1165 = vmax.f32 %v1088, 0.0
      %v1166 = vmax.f32 %v1091, 0.0
      %v1167 = vmax.f32 %v1093, 0.0
      %v1168 = vmax.f32 %v1096, 0.0
      %v1169 = vmax.f32 %v1098, 0.0
      %v1170 = vmax.f32 %v1101, 0.0
      %v1171 = vmax.f32 %v1103, 0.0
      %v1172 = vmax.f32 %v1106, 0.0
      %v1173 = vmax.f32 %v1108, 0.0
      %v1174 = vpack.c.bf16 %v1111, %v1110
      %v1175 = vpack.c.bf16 %v1113, %v1112
      %v1176 = vpack.c.bf16 %v1115, %v1114
      %v1177 = vpack.c.bf16 %v1117, %v1116
      %v1178 = vpack.c.bf16 %v1119, %v1118
      %v1179 = vpack.c.bf16 %v1121, %v1120
      %v1180 = vpack.c.bf16 %v1123, %v1122
      %v1181 = vpack.c.bf16 %v1125, %v1124
      %v1182 = vpack.c.bf16 %v1127, %v1126
      %v1183 = vpack.c.bf16 %v1129, %v1128
      %v1184 = vpack.c.bf16 %v1131, %v1130
      %v1185 = vpack.c.bf16 %v1133, %v1132
      %v1186 = vpack.c.bf16 %v1135, %v1134
      %v1187 = vpack.c.bf16 %v1137, %v1136
      %v1188 = vpack.c.bf16 %v1139, %v1138
      %v1189 = vpack.c.bf16 %v1141, %v1140
      %v1190 = vpack.c.bf16 %v1143, %v1142
      %v1191 = vpack.c.bf16 %v1145, %v1144
      %v1192 = vpack.c.bf16 %v1147, %v1146
      %v1193 = vpack.c.bf16 %v1149, %v1148
      %v1194 = vpack.c.bf16 %v1151, %v1150
      %v1195 = vpack.c.bf16 %v1153, %v1152
      %v1196 = vpack.c.bf16 %v1155, %v1154
      %v1197 = vpack.c.bf16 %v1157, %v1156
      %v1198 = vpack.c.bf16 %v1159, %v1158
      %v1199 = vpack.c.bf16 %v1161, %v1160
      %v1200 = vpack.c.bf16 %v1163, %v1162
      %v1201 = vpack.c.bf16 %v1165, %v1164
      %v1202 = vpack.c.bf16 %v1167, %v1166
      %v1203 = vpack.c.bf16 %v1169, %v1168
      %v1204 = vpack.c.bf16 %v1171, %v1170
      %v1205 = vpack.c.bf16 %v1173, %v1172
      %v1206 = vld [vmem:[%s5] sm:$0xff]
      %v1207 = vld [vmem:[%s5 + $0x8] sm:$0xff]
      %v1208 = vld [vmem:[%s5 + $0x10] sm:$0xff]
      %v1209 = vld [vmem:[%s5 + $0x18] sm:$0xff]
      %v1210 = vld [vmem:[%s5 + $0x20] sm:$0xff]
      %v1211 = vld [vmem:[%s5 + $0x28] sm:$0xff]
      %v1212 = vld [vmem:[%s5 + $0x30] sm:$0xff]
      %v1213 = vld [vmem:[%s5 + $0x38] sm:$0xff]
      %v1214 = vld [vmem:[%s5 + $0x40] sm:$0xff]
      %v1215 = vld [vmem:[%s5 + $0x48] sm:$0xff]
      %v1216 = vld [vmem:[%s5 + $0x50] sm:$0xff]
      %v1217 = vld [vmem:[%s5 + $0x58] sm:$0xff]
      %v1218 = vld [vmem:[%s5 + $0x60] sm:$0xff]
      %v1219 = vld [vmem:[%s5 + $0x68] sm:$0xff]
      %v1220 = vld [vmem:[%s5 + $0x70] sm:$0xff]
      %v1221 = vld [vmem:[%s5 + $0x78] sm:$0xff]
      %v1222 = vld [vmem:[%s6] sm:$0x3]
      %v1224 = vperm.slane %v1222, 0
      %v1225 = vperm.slane %v1222, 1
      %v1244 = vunpack.c.l.b16 %v1206
      %v1245 = vunpack.c.h.b16 %v1206
      %v1246 = vunpack.c.l.b16 %v1207
      %v1247 = vunpack.c.h.b16 %v1207
      %v1248 = vunpack.c.l.b16 %v1208
      %v1249 = vunpack.c.h.b16 %v1208
      %v1250 = vunpack.c.l.b16 %v1209
      %v1251 = vunpack.c.h.b16 %v1209
      %v1252 = vunpack.c.l.b16 %v1210
      %v1253 = vunpack.c.h.b16 %v1210
      %v1254 = vunpack.c.l.b16 %v1211
      %v1255 = vunpack.c.h.b16 %v1211
      %v1256 = vunpack.c.l.b16 %v1212
      %v1257 = vunpack.c.h.b16 %v1212
      %v1258 = vunpack.c.l.b16 %v1213
      %v1259 = vunpack.c.h.b16 %v1213
      %v1260 = vunpack.c.l.b16 %v1214
      %v1261 = vunpack.c.h.b16 %v1214
      %v1262 = vunpack.c.l.b16 %v1215
      %v1263 = vunpack.c.h.b16 %v1215
      %v1264 = vunpack.c.l.b16 %v1216
      %v1265 = vunpack.c.h.b16 %v1216
      %v1266 = vunpack.c.l.b16 %v1217
      %v1267 = vunpack.c.h.b16 %v1217
      %v1268 = vunpack.c.l.b16 %v1218
      %v1269 = vunpack.c.h.b16 %v1218
      %v1270 = vunpack.c.l.b16 %v1219
      %v1271 = vunpack.c.h.b16 %v1219
      %v1272 = vunpack.c.l.b16 %v1220
      %v1273 = vunpack.c.h.b16 %v1220
      %v1274 = vunpack.c.l.b16 %v1221
      %v1275 = vunpack.c.h.b16 %v1221
      %v1276 = vpack.c.b16 %v1246, %v1244
      %v1277 = vpack.c.b16 %v1247, %v1245
      %v1278 = vpack.c.b16 %v1250, %v1248
      %v1279 = vpack.c.b16 %v1251, %v1249
      %v1280 = vpack.c.b16 %v1254, %v1252
      %v1281 = vpack.c.b16 %v1255, %v1253
      %v1282 = vpack.c.b16 %v1258, %v1256
      %v1283 = vpack.c.b16 %v1259, %v1257
      %v1284 = vpack.c.b16 %v1262, %v1260
      %v1285 = vpack.c.b16 %v1263, %v1261
      %v1286 = vpack.c.b16 %v1266, %v1264
      %v1287 = vpack.c.b16 %v1267, %v1265
      %v1288 = vpack.c.b16 %v1270, %v1268
      %v1289 = vpack.c.b16 %v1271, %v1269
      %v1290 = vpack.c.b16 %v1274, %v1272
      %v1291 = vpack.c.b16 %v1275, %v1273
      %1308 = vmatpush.bf16.msra.mxu0 %v1290
      %1309 = vmatpush.bf16.msra.mxu0 %v1288
      %1310 = vmatpush.bf16.msra.mxu0 %v1286
      %1311 = vmatpush.bf16.msra.mxu0 %v1284
      %1312 = vmatpush.bf16.msra.mxu0 %v1282
      %1313 = vmatpush.bf16.msra.mxu0 %v1280
      %1314 = vmatpush.bf16.msra.mxu0 %v1278
      %1315 = vmatpush.bf16.msra.mxu0 %v1276
      %1316 = vmatmul.bf16.gmra.mxu0 %v1174
      %v1317 = vpop.f32.mrf.mxu0
      %v1318 = vadd.f32 %v1224, %v1317
      %v1319 = vpop.f32.mrf.mxu0
      %v1320 = vadd.f32 %v1224, %v1319
      %1321 = vmatmul.bf16.gmra.mxu0 %v1175
      %v1322 = vpop.f32.mrf.mxu0
      %v1323 = vadd.f32 %v1224, %v1322
      %v1324 = vpop.f32.mrf.mxu0
      %v1325 = vadd.f32 %v1224, %v1324
      %1326 = vmatmul.bf16.gmra.mxu0 %v1176
      %v1327 = vpop.f32.mrf.mxu0
      %v1328 = vadd.f32 %v1224, %v1327
      %v1329 = vpop.f32.mrf.mxu0
      %v1330 = vadd.f32 %v1224, %v1329
      %1331 = vmatmul.bf16.gmra.mxu0 %v1177
      %v1332 = vpop.f32.mrf.mxu0
      %v1333 = vadd.f32 %v1224, %v1332
      %v1334 = vpop.f32.mrf.mxu0
      %v1335 = vadd.f32 %v1224, %v1334
      %1336 = vmatmul.bf16.gmra.mxu0 %v1178
      %v1337 = vpop.f32.mrf.mxu0
      %v1338 = vadd.f32 %v1224, %v1337
      %v1339 = vpop.f32.mrf.mxu0
      %v1340 = vadd.f32 %v1224, %v1339
      %1341 = vmatmul.bf16.gmra.mxu0 %v1179
      %v1342 = vpop.f32.mrf.mxu0
      %v1343 = vadd.f32 %v1224, %v1342
      %v1344 = vpop.f32.mrf.mxu0
      %v1345 = vadd.f32 %v1224, %v1344
      %1346 = vmatmul.bf16.gmra.mxu0 %v1180
      %v1347 = vpop.f32.mrf.mxu0
      %v1348 = vadd.f32 %v1224, %v1347
      %v1349 = vpop.f32.mrf.mxu0
      %v1350 = vadd.f32 %v1224, %v1349
      %1351 = vmatmul.bf16.gmra.mxu0 %v1181
      %v1352 = vpop.f32.mrf.mxu0
      %v1353 = vadd.f32 %v1224, %v1352
      %v1354 = vpop.f32.mrf.mxu0
      %v1355 = vadd.f32 %v1224, %v1354
      %1356 = vmatmul.bf16.gmra.mxu0 %v1182
      %v1357 = vpop.f32.mrf.mxu0
      %v1358 = vadd.f32 %v1224, %v1357
      %v1359 = vpop.f32.mrf.mxu0
      %v1360 = vadd.f32 %v1224, %v1359
      %1361 = vmatmul.bf16.gmra.mxu0 %v1183
      %v1362 = vpop.f32.mrf.mxu0
      %v1363 = vadd.f32 %v1224, %v1362
      %v1364 = vpop.f32.mrf.mxu0
      %v1365 = vadd.f32 %v1224, %v1364
      %1366 = vmatmul.bf16.gmra.mxu0 %v1184
      %v1367 = vpop.f32.mrf.mxu0
      %v1368 = vadd.f32 %v1224, %v1367
      %v1369 = vpop.f32.mrf.mxu0
      %v1370 = vadd.f32 %v1224, %v1369
      %1371 = vmatmul.bf16.gmra.mxu0 %v1185
      %v1372 = vpop.f32.mrf.mxu0
      %v1373 = vadd.f32 %v1224, %v1372
      %v1374 = vpop.f32.mrf.mxu0
      %v1375 = vadd.f32 %v1224, %v1374
      %1376 = vmatmul.bf16.gmra.mxu0 %v1186
      %v1377 = vpop.f32.mrf.mxu0
      %v1378 = vadd.f32 %v1224, %v1377
      %v1379 = vpop.f32.mrf.mxu0
      %v1380 = vadd.f32 %v1224, %v1379
      %1381 = vmatmul.bf16.gmra.mxu0 %v1187
      %v1382 = vpop.f32.mrf.mxu0
      %v1383 = vadd.f32 %v1224, %v1382
      %v1384 = vpop.f32.mrf.mxu0
      %v1385 = vadd.f32 %v1224, %v1384
      %1386 = vmatmul.bf16.gmra.mxu0 %v1188
      %v1387 = vpop.f32.mrf.mxu0
      %v1388 = vadd.f32 %v1224, %v1387
      %v1389 = vpop.f32.mrf.mxu0
      %v1390 = vadd.f32 %v1224, %v1389
      %1391 = vmatmul.bf16.gmra.mxu0 %v1189
      %v1392 = vpop.f32.mrf.mxu0
      %v1393 = vadd.f32 %v1224, %v1392
      %v1394 = vpop.f32.mrf.mxu0
      %v1395 = vadd.f32 %v1224, %v1394
      %1396 = vmatmul.bf16.gmra.mxu0 %v1190
      %v1397 = vpop.f32.mrf.mxu0
      %v1398 = vadd.f32 %v1224, %v1397
      %v1399 = vpop.f32.mrf.mxu0
      %v1400 = vadd.f32 %v1224, %v1399
      %1401 = vmatmul.bf16.gmra.mxu0 %v1191
      %v1402 = vpop.f32.mrf.mxu0
      %v1403 = vadd.f32 %v1224, %v1402
      %v1404 = vpop.f32.mrf.mxu0
      %v1405 = vadd.f32 %v1224, %v1404
      %1406 = vmatmul.bf16.gmra.mxu0 %v1192
      %v1407 = vpop.f32.mrf.mxu0
      %v1408 = vadd.f32 %v1224, %v1407
      %v1409 = vpop.f32.mrf.mxu0
      %v1410 = vadd.f32 %v1224, %v1409
      %1411 = vmatmul.bf16.gmra.mxu0 %v1193
      %v1412 = vpop.f32.mrf.mxu0
      %v1413 = vadd.f32 %v1224, %v1412
      %v1414 = vpop.f32.mrf.mxu0
      %v1415 = vadd.f32 %v1224, %v1414
      %1416 = vmatmul.bf16.gmra.mxu0 %v1194
      %v1417 = vpop.f32.mrf.mxu0
      %v1418 = vadd.f32 %v1224, %v1417
      %v1419 = vpop.f32.mrf.mxu0
      %v1420 = vadd.f32 %v1224, %v1419
      %1421 = vmatmul.bf16.gmra.mxu0 %v1195
      %v1422 = vpop.f32.mrf.mxu0
      %v1423 = vadd.f32 %v1224, %v1422
      %v1424 = vpop.f32.mrf.mxu0
      %v1425 = vadd.f32 %v1224, %v1424
      %1426 = vmatmul.bf16.gmra.mxu0 %v1196
      %v1427 = vpop.f32.mrf.mxu0
      %v1428 = vadd.f32 %v1224, %v1427
      %v1429 = vpop.f32.mrf.mxu0
      %v1430 = vadd.f32 %v1224, %v1429
      %1431 = vmatmul.bf16.gmra.mxu0 %v1197
      %v1432 = vpop.f32.mrf.mxu0
      %v1433 = vadd.f32 %v1224, %v1432
      %v1434 = vpop.f32.mrf.mxu0
      %v1435 = vadd.f32 %v1224, %v1434
      %1436 = vmatmul.bf16.gmra.mxu0 %v1198
      %v1437 = vpop.f32.mrf.mxu0
      %v1438 = vadd.f32 %v1224, %v1437
      %v1439 = vpop.f32.mrf.mxu0
      %v1440 = vadd.f32 %v1224, %v1439
      %1441 = vmatmul.bf16.gmra.mxu0 %v1199
      %v1442 = vpop.f32.mrf.mxu0
      %v1443 = vadd.f32 %v1224, %v1442
      %v1444 = vpop.f32.mrf.mxu0
      %v1445 = vadd.f32 %v1224, %v1444
      %1446 = vmatmul.bf16.gmra.mxu0 %v1200
      %v1447 = vpop.f32.mrf.mxu0
      %v1448 = vadd.f32 %v1224, %v1447
      %v1449 = vpop.f32.mrf.mxu0
      %v1450 = vadd.f32 %v1224, %v1449
      %1451 = vmatmul.bf16.gmra.mxu0 %v1201
      %v1452 = vpop.f32.mrf.mxu0
      %v1453 = vadd.f32 %v1224, %v1452
      %v1454 = vpop.f32.mrf.mxu0
      %v1455 = vadd.f32 %v1224, %v1454
      %1456 = vmatmul.bf16.gmra.mxu0 %v1202
      %v1457 = vpop.f32.mrf.mxu0
      %v1458 = vadd.f32 %v1224, %v1457
      %v1459 = vpop.f32.mrf.mxu0
      %v1460 = vadd.f32 %v1224, %v1459
      %1461 = vmatmul.bf16.gmra.mxu0 %v1203
      %v1462 = vpop.f32.mrf.mxu0
      %v1463 = vadd.f32 %v1224, %v1462
      %v1464 = vpop.f32.mrf.mxu0
      %v1465 = vadd.f32 %v1224, %v1464
      %1466 = vmatmul.bf16.gmra.mxu0 %v1204
      %v1467 = vpop.f32.mrf.mxu0
      %v1468 = vadd.f32 %v1224, %v1467
      %v1469 = vpop.f32.mrf.mxu0
      %v1470 = vadd.f32 %v1224, %v1469
      %1471 = vmatmul.bf16.gmra.mxu0 %v1205
      %v1472 = vpop.f32.mrf.mxu0
      %v1473 = vadd.f32 %v1224, %v1472
      %v1474 = vpop.f32.mrf.mxu0
      %v1475 = vadd.f32 %v1224, %v1474
      %1476 = vdwg.mxu0
      %1477 = vmatpush.bf16.msra.mxu0 %v1291
      %1478 = vmatpush.bf16.msra.mxu0 %v1289
      %1479 = vmatpush.bf16.msra.mxu0 %v1287
      %1480 = vmatpush.bf16.msra.mxu0 %v1285
      %1481 = vmatpush.bf16.msra.mxu0 %v1283
      %1482 = vmatpush.bf16.msra.mxu0 %v1281
      %1483 = vmatpush.bf16.msra.mxu0 %v1279
      %1484 = vmatpush.bf16.msra.mxu0 %v1277
      %1485 = vmatmul.bf16.gmra.mxu0 %v1174
      %v1486 = vpop.f32.mrf.mxu0
      %v1487 = vadd.f32 %v1225, %v1486
      %v1488 = vpop.f32.mrf.mxu0
      %v1489 = vadd.f32 %v1225, %v1488
      %1490 = vmatmul.bf16.gmra.mxu0 %v1175
      %v1491 = vpop.f32.mrf.mxu0
      %v1492 = vadd.f32 %v1225, %v1491
      %v1493 = vpop.f32.mrf.mxu0
      %v1494 = vadd.f32 %v1225, %v1493
      %1495 = vmatmul.bf16.gmra.mxu0 %v1176
      %v1496 = vpop.f32.mrf.mxu0
      %v1497 = vadd.f32 %v1225, %v1496
      %v1498 = vpop.f32.mrf.mxu0
      %v1499 = vadd.f32 %v1225, %v1498
      %1500 = vmatmul.bf16.gmra.mxu0 %v1177
      %v1501 = vpop.f32.mrf.mxu0
      %v1502 = vadd.f32 %v1225, %v1501
      %v1503 = vpop.f32.mrf.mxu0
      %v1504 = vadd.f32 %v1225, %v1503
      %1505 = vmatmul.bf16.gmra.mxu0 %v1178
      %v1506 = vpop.f32.mrf.mxu0
      %v1507 = vadd.f32 %v1225, %v1506
      %v1508 = vpop.f32.mrf.mxu0
      %v1509 = vadd.f32 %v1225, %v1508
      %1510 = vmatmul.bf16.gmra.mxu0 %v1179
      %v1511 = vpop.f32.mrf.mxu0
      %v1512 = vadd.f32 %v1225, %v1511
      %v1513 = vpop.f32.mrf.mxu0
      %v1514 = vadd.f32 %v1225, %v1513
      %1515 = vmatmul.bf16.gmra.mxu0 %v1180
      %v1516 = vpop.f32.mrf.mxu0
      %v1517 = vadd.f32 %v1225, %v1516
      %v1518 = vpop.f32.mrf.mxu0
      %v1519 = vadd.f32 %v1225, %v1518
      %1520 = vmatmul.bf16.gmra.mxu0 %v1181
      %v1521 = vpop.f32.mrf.mxu0
      %v1522 = vadd.f32 %v1225, %v1521
      %v1523 = vpop.f32.mrf.mxu0
      %v1524 = vadd.f32 %v1225, %v1523
      %1525 = vmatmul.bf16.gmra.mxu0 %v1182
      %v1526 = vpop.f32.mrf.mxu0
      %v1527 = vadd.f32 %v1225, %v1526
      %v1528 = vpop.f32.mrf.mxu0
      %v1529 = vadd.f32 %v1225, %v1528
      %1530 = vmatmul.bf16.gmra.mxu0 %v1183
      %v1531 = vpop.f32.mrf.mxu0
      %v1532 = vadd.f32 %v1225, %v1531
      %v1533 = vpop.f32.mrf.mxu0
      %v1534 = vadd.f32 %v1225, %v1533
      %1535 = vmatmul.bf16.gmra.mxu0 %v1184
      %v1536 = vpop.f32.mrf.mxu0
      %v1537 = vadd.f32 %v1225, %v1536
      %v1538 = vpop.f32.mrf.mxu0
      %v1539 = vadd.f32 %v1225, %v1538
      %1540 = vmatmul.bf16.gmra.mxu0 %v1185
      %v1541 = vpop.f32.mrf.mxu0
      %v1542 = vadd.f32 %v1225, %v1541
      %v1543 = vpop.f32.mrf.mxu0
      %v1544 = vadd.f32 %v1225, %v1543
      %1545 = vmatmul.bf16.gmra.mxu0 %v1186
      %v1546 = vpop.f32.mrf.mxu0
      %v1547 = vadd.f32 %v1225, %v1546
      %v1548 = vpop.f32.mrf.mxu0
      %v1549 = vadd.f32 %v1225, %v1548
      %1550 = vmatmul.bf16.gmra.mxu0 %v1187
      %v1551 = vpop.f32.mrf.mxu0
      %v1552 = vadd.f32 %v1225, %v1551
      %v1553 = vpop.f32.mrf.mxu0
      %v1554 = vadd.f32 %v1225, %v1553
      %1555 = vmatmul.bf16.gmra.mxu0 %v1188
      %v1556 = vpop.f32.mrf.mxu0
      %v1557 = vadd.f32 %v1225, %v1556
      %v1558 = vpop.f32.mrf.mxu0
      %v1559 = vadd.f32 %v1225, %v1558
      %1560 = vmatmul.bf16.gmra.mxu0 %v1189
      %v1561 = vpop.f32.mrf.mxu0
      %v1562 = vadd.f32 %v1225, %v1561
      %v1563 = vpop.f32.mrf.mxu0
      %v1564 = vadd.f32 %v1225, %v1563
      %1565 = vmatmul.bf16.gmra.mxu0 %v1190
      %v1566 = vpop.f32.mrf.mxu0
      %v1567 = vadd.f32 %v1225, %v1566
      %v1568 = vpop.f32.mrf.mxu0
      %v1569 = vadd.f32 %v1225, %v1568
      %1570 = vmatmul.bf16.gmra.mxu0 %v1191
      %v1571 = vpop.f32.mrf.mxu0
      %v1572 = vadd.f32 %v1225, %v1571
      %v1573 = vpop.f32.mrf.mxu0
      %v1574 = vadd.f32 %v1225, %v1573
      %1575 = vmatmul.bf16.gmra.mxu0 %v1192
      %v1576 = vpop.f32.mrf.mxu0
      %v1577 = vadd.f32 %v1225, %v1576
      %v1578 = vpop.f32.mrf.mxu0
      %v1579 = vadd.f32 %v1225, %v1578
      %1580 = vmatmul.bf16.gmra.mxu0 %v1193
      %v1581 = vpop.f32.mrf.mxu0
      %v1582 = vadd.f32 %v1225, %v1581
      %v1583 = vpop.f32.mrf.mxu0
      %v1584 = vadd.f32 %v1225, %v1583
      %1585 = vmatmul.bf16.gmra.mxu0 %v1194
      %v1586 = vpop.f32.mrf.mxu0
      %v1587 = vadd.f32 %v1225, %v1586
      %v1588 = vpop.f32.mrf.mxu0
      %v1589 = vadd.f32 %v1225, %v1588
      %1590 = vmatmul.bf16.gmra.mxu0 %v1195
      %v1591 = vpop.f32.mrf.mxu0
      %v1592 = vadd.f32 %v1225, %v1591
      %v1593 = vpop.f32.mrf.mxu0
      %v1594 = vadd.f32 %v1225, %v1593
      %1595 = vmatmul.bf16.gmra.mxu0 %v1196
      %v1596 = vpop.f32.mrf.mxu0
      %v1597 = vadd.f32 %v1225, %v1596
      %v1598 = vpop.f32.mrf.mxu0
      %v1599 = vadd.f32 %v1225, %v1598
      %1600 = vmatmul.bf16.gmra.mxu0 %v1197
      %v1601 = vpop.f32.mrf.mxu0
      %v1602 = vadd.f32 %v1225, %v1601
      %v1603 = vpop.f32.mrf.mxu0
      %v1604 = vadd.f32 %v1225, %v1603
      %1605 = vmatmul.bf16.gmra.mxu0 %v1198
      %v1606 = vpop.f32.mrf.mxu0
      %v1607 = vadd.f32 %v1225, %v1606
      %v1608 = vpop.f32.mrf.mxu0
      %v1609 = vadd.f32 %v1225, %v1608
      %1610 = vmatmul.bf16.gmra.mxu0 %v1199
      %v1611 = vpop.f32.mrf.mxu0
      %v1612 = vadd.f32 %v1225, %v1611
      %v1613 = vpop.f32.mrf.mxu0
      %v1614 = vadd.f32 %v1225, %v1613
      %1615 = vmatmul.bf16.gmra.mxu0 %v1200
      %v1616 = vpop.f32.mrf.mxu0
      %v1617 = vadd.f32 %v1225, %v1616
      %v1618 = vpop.f32.mrf.mxu0
      %v1619 = vadd.f32 %v1225, %v1618
      %1620 = vmatmul.bf16.gmra.mxu0 %v1201
      %v1621 = vpop.f32.mrf.mxu0
      %v1622 = vadd.f32 %v1225, %v1621
      %v1623 = vpop.f32.mrf.mxu0
      %v1624 = vadd.f32 %v1225, %v1623
      %1625 = vmatmul.bf16.gmra.mxu0 %v1202
      %v1626 = vpop.f32.mrf.mxu0
      %v1627 = vadd.f32 %v1225, %v1626
      %v1628 = vpop.f32.mrf.mxu0
      %v1629 = vadd.f32 %v1225, %v1628
      %1630 = vmatmul.bf16.gmra.mxu0 %v1203
      %v1631 = vpop.f32.mrf.mxu0
      %v1632 = vadd.f32 %v1225, %v1631
      %v1633 = vpop.f32.mrf.mxu0
      %v1634 = vadd.f32 %v1225, %v1633
      %1635 = vmatmul.bf16.gmra.mxu0 %v1204
      %v1636 = vpop.f32.mrf.mxu0
      %v1637 = vadd.f32 %v1225, %v1636
      %v1638 = vpop.f32.mrf.mxu0
      %v1639 = vadd.f32 %v1225, %v1638
      %1640 = vmatmul.bf16.gmra.mxu0 %v1205
      %v1641 = vpop.f32.mrf.mxu0
      %v1642 = vadd.f32 %v1225, %v1641
      %v1643 = vpop.f32.mrf.mxu0
      %v1644 = vadd.f32 %v1225, %v1643
      %1645 = vdwg.mxu0
      %1646 = vst [vmem:[%s282] sm:$0xff] %v1318
      %1647 = vst [vmem:[%s282 + $0x8] sm:$0xff] %v1487
      %1648 = vst [vmem:[%s282 + $0x10] sm:$0xff] %v1320
      %1649 = vst [vmem:[%s282 + $0x18] sm:$0xff] %v1489
      %1650 = vst [vmem:[%s282 + $0x20] sm:$0xff] %v1323
      %1651 = vst [vmem:[%s282 + $0x28] sm:$0xff] %v1492
      %1652 = vst [vmem:[%s282 + $0x30] sm:$0xff] %v1325
      %1653 = vst [vmem:[%s282 + $0x38] sm:$0xff] %v1494
      %1654 = vst [vmem:[%s282 + $0x40] sm:$0xff] %v1328
      %1655 = vst [vmem:[%s282 + $0x48] sm:$0xff] %v1497
      %1656 = vst [vmem:[%s282 + $0x50] sm:$0xff] %v1330
      %1657 = vst [vmem:[%s282 + $0x58] sm:$0xff] %v1499
      %1658 = vst [vmem:[%s282 + $0x60] sm:$0xff] %v1333
      %1659 = vst [vmem:[%s282 + $0x68] sm:$0xff] %v1502
      %1660 = vst [vmem:[%s282 + $0x70] sm:$0xff] %v1335
      %1661 = vst [vmem:[%s282 + $0x78] sm:$0xff] %v1504
      %1662 = vst [vmem:[%s282 + $0x80] sm:$0xff] %v1338
      %1663 = vst [vmem:[%s282 + $0x88] sm:$0xff] %v1507
      %1664 = vst [vmem:[%s282 + $0x90] sm:$0xff] %v1340
      %1665 = vst [vmem:[%s282 + $0x98] sm:$0xff] %v1509
      %1666 = vst [vmem:[%s282 + $0xa0] sm:$0xff] %v1343
      %1667 = vst [vmem:[%s282 + $0xa8] sm:$0xff] %v1512
      %1668 = vst [vmem:[%s282 + $0xb0] sm:$0xff] %v1345
      %1669 = vst [vmem:[%s282 + $0xb8] sm:$0xff] %v1514
      %1670 = vst [vmem:[%s282 + $0xc0] sm:$0xff] %v1348
      %1671 = vst [vmem:[%s282 + $0xc8] sm:$0xff] %v1517
      %1672 = vst [vmem:[%s282 + $0xd0] sm:$0xff] %v1350
      %1673 = vst [vmem:[%s282 + $0xd8] sm:$0xff] %v1519
      %1674 = vst [vmem:[%s282 + $0xe0] sm:$0xff] %v1353
      %1675 = vst [vmem:[%s282 + $0xe8] sm:$0xff] %v1522
      %1676 = vst [vmem:[%s282 + $0xf0] sm:$0xff] %v1355
      %1677 = vst [vmem:[%s282 + $0xf8] sm:$0xff] %v1524
      %1678 = vst [vmem:[%s282 + $0x100] sm:$0xff] %v1358
      %1679 = vst [vmem:[%s282 + $0x108] sm:$0xff] %v1527
      %1680 = vst [vmem:[%s282 + $0x110] sm:$0xff] %v1360
      %1681 = vst [vmem:[%s282 + $0x118] sm:$0xff] %v1529
      %1682 = vst [vmem:[%s282 + $0x120] sm:$0xff] %v1363
      %1683 = vst [vmem:[%s282 + $0x128] sm:$0xff] %v1532
      %1684 = vst [vmem:[%s282 + $0x130] sm:$0xff] %v1365
      %1685 = vst [vmem:[%s282 + $0x138] sm:$0xff] %v1534
      %1686 = vst [vmem:[%s282 + $0x140] sm:$0xff] %v1368
      %1687 = vst [vmem:[%s282 + $0x148] sm:$0xff] %v1537
      %1688 = vst [vmem:[%s282 + $0x150] sm:$0xff] %v1370
      %1689 = vst [vmem:[%s282 + $0x158] sm:$0xff] %v1539
      %1690 = vst [vmem:[%s282 + $0x160] sm:$0xff] %v1373
      %1691 = vst [vmem:[%s282 + $0x168] sm:$0xff] %v1542
      %1692 = vst [vmem:[%s282 + $0x170] sm:$0xff] %v1375
      %1693 = vst [vmem:[%s282 + $0x178] sm:$0xff] %v1544
      %1694 = vst [vmem:[%s282 + $0x180] sm:$0xff] %v1378
      %1695 = vst [vmem:[%s282 + $0x188] sm:$0xff] %v1547
      %1696 = vst [vmem:[%s282 + $0x190] sm:$0xff] %v1380
      %1697 = vst [vmem:[%s282 + $0x198] sm:$0xff] %v1549
      %1698 = vst [vmem:[%s282 + $0x1a0] sm:$0xff] %v1383
      %1699 = vst [vmem:[%s282 + $0x1a8] sm:$0xff] %v1552
      %1700 = vst [vmem:[%s282 + $0x1b0] sm:$0xff] %v1385
      %1701 = vst [vmem:[%s282 + $0x1b8] sm:$0xff] %v1554
      %1702 = vst [vmem:[%s282 + $0x1c0] sm:$0xff] %v1388
      %1703 = vst [vmem:[%s282 + $0x1c8] sm:$0xff] %v1557
      %1704 = vst [vmem:[%s282 + $0x1d0] sm:$0xff] %v1390
      %1705 = vst [vmem:[%s282 + $0x1d8] sm:$0xff] %v1559
      %1706 = vst [vmem:[%s282 + $0x1e0] sm:$0xff] %v1393
      %1707 = vst [vmem:[%s282 + $0x1e8] sm:$0xff] %v1562
      %1708 = vst [vmem:[%s282 + $0x1f0] sm:$0xff] %v1395
      %1709 = vst [vmem:[%s282 + $0x1f8] sm:$0xff] %v1564
      %1710 = vst [vmem:[%s282 + $0x200] sm:$0xff] %v1398
      %1711 = vst [vmem:[%s282 + $0x208] sm:$0xff] %v1567
      %1712 = vst [vmem:[%s282 + $0x210] sm:$0xff] %v1400
      %1713 = vst [vmem:[%s282 + $0x218] sm:$0xff] %v1569
      %1714 = vst [vmem:[%s282 + $0x220] sm:$0xff] %v1403
      %1715 = vst [vmem:[%s282 + $0x228] sm:$0xff] %v1572
      %1716 = vst [vmem:[%s282 + $0x230] sm:$0xff] %v1405
      %1717 = vst [vmem:[%s282 + $0x238] sm:$0xff] %v1574
      %1718 = vst [vmem:[%s282 + $0x240] sm:$0xff] %v1408
      %1719 = vst [vmem:[%s282 + $0x248] sm:$0xff] %v1577
      %1720 = vst [vmem:[%s282 + $0x250] sm:$0xff] %v1410
      %1721 = vst [vmem:[%s282 + $0x258] sm:$0xff] %v1579
      %1722 = vst [vmem:[%s282 + $0x260] sm:$0xff] %v1413
      %1723 = vst [vmem:[%s282 + $0x268] sm:$0xff] %v1582
      %1724 = vst [vmem:[%s282 + $0x270] sm:$0xff] %v1415
      %1725 = vst [vmem:[%s282 + $0x278] sm:$0xff] %v1584
      %1726 = vst [vmem:[%s282 + $0x280] sm:$0xff] %v1418
      %1727 = vst [vmem:[%s282 + $0x288] sm:$0xff] %v1587
      %1728 = vst [vmem:[%s282 + $0x290] sm:$0xff] %v1420
      %1729 = vst [vmem:[%s282 + $0x298] sm:$0xff] %v1589
      %1730 = vst [vmem:[%s282 + $0x2a0] sm:$0xff] %v1423
      %1731 = vst [vmem:[%s282 + $0x2a8] sm:$0xff] %v1592
      %1732 = vst [vmem:[%s282 + $0x2b0] sm:$0xff] %v1425
      %1733 = vst [vmem:[%s282 + $0x2b8] sm:$0xff] %v1594
      %1734 = vst [vmem:[%s282 + $0x2c0] sm:$0xff] %v1428
      %1735 = vst [vmem:[%s282 + $0x2c8] sm:$0xff] %v1597
      %1736 = vst [vmem:[%s282 + $0x2d0] sm:$0xff] %v1430
      %1737 = vst [vmem:[%s282 + $0x2d8] sm:$0xff] %v1599
      %1738 = vst [vmem:[%s282 + $0x2e0] sm:$0xff] %v1433
      %1739 = vst [vmem:[%s282 + $0x2e8] sm:$0xff] %v1602
      %1740 = vst [vmem:[%s282 + $0x2f0] sm:$0xff] %v1435
      %1741 = vst [vmem:[%s282 + $0x2f8] sm:$0xff] %v1604
      %1742 = vst [vmem:[%s282 + $0x300] sm:$0xff] %v1438
      %1743 = vst [vmem:[%s282 + $0x308] sm:$0xff] %v1607
      %1744 = vst [vmem:[%s282 + $0x310] sm:$0xff] %v1440
      %1745 = vst [vmem:[%s282 + $0x318] sm:$0xff] %v1609
      %1746 = vst [vmem:[%s282 + $0x320] sm:$0xff] %v1443
      %1747 = vst [vmem:[%s282 + $0x328] sm:$0xff] %v1612
      %1748 = vst [vmem:[%s282 + $0x330] sm:$0xff] %v1445
      %1749 = vst [vmem:[%s282 + $0x338] sm:$0xff] %v1614
      %1750 = vst [vmem:[%s282 + $0x340] sm:$0xff] %v1448
      %1751 = vst [vmem:[%s282 + $0x348] sm:$0xff] %v1617
      %1752 = vst [vmem:[%s282 + $0x350] sm:$0xff] %v1450
      %1753 = vst [vmem:[%s282 + $0x358] sm:$0xff] %v1619
      %1754 = vst [vmem:[%s282 + $0x360] sm:$0xff] %v1453
      %1755 = vst [vmem:[%s282 + $0x368] sm:$0xff] %v1622
      %1756 = vst [vmem:[%s282 + $0x370] sm:$0xff] %v1455
      %1757 = vst [vmem:[%s282 + $0x378] sm:$0xff] %v1624
      %1758 = vst [vmem:[%s282 + $0x380] sm:$0xff] %v1458
      %1759 = vst [vmem:[%s282 + $0x388] sm:$0xff] %v1627
      %1760 = vst [vmem:[%s282 + $0x390] sm:$0xff] %v1460
      %1761 = vst [vmem:[%s282 + $0x398] sm:$0xff] %v1629
      %1762 = vst [vmem:[%s282 + $0x3a0] sm:$0xff] %v1463
      %1763 = vst [vmem:[%s282 + $0x3a8] sm:$0xff] %v1632
      %1764 = vst [vmem:[%s282 + $0x3b0] sm:$0xff] %v1465
      %1765 = vst [vmem:[%s282 + $0x3b8] sm:$0xff] %v1634
      %1766 = vst [vmem:[%s282 + $0x3c0] sm:$0xff] %v1468
      %1767 = vst [vmem:[%s282 + $0x3c8] sm:$0xff] %v1637
      %1768 = vst [vmem:[%s282 + $0x3d0] sm:$0xff] %v1470
      %1769 = vst [vmem:[%s282 + $0x3d8] sm:$0xff] %v1639
      %1770 = vst [vmem:[%s282 + $0x3e0] sm:$0xff] %v1473
      %1771 = vst [vmem:[%s282 + $0x3e8] sm:$0xff] %v1642
      %1772 = vst [vmem:[%s282 + $0x3f0] sm:$0xff] %v1475
      %1773 = vst [vmem:[%s282 + $0x3f8] sm:$0xff] %v1644
      %s1774 = smul.u32 64, %s18
      %p1775 = scmp.lt.s32.totalorder %s1774, 127
      %s1776 = scalar_select %p1775, %s1774, 127
      %s1777 = smul.addr %s1776, 2
      %s1778 = smul.addr %s1777, 8
      %s1779 = scalar_lea.vmem %s7, %s1778
      // Predicated region
      $region49: #{rede_multiplas_saidas.1} parent=47 // pred_check
        %p1780 = pneg %p188
      $region50: #{rede_multiplas_saidas.1} parent=47 // pred_check_branch
        %1782 = sbr.rel (%p1780) target = $region52
      $region51: #{rede_multiplas_saidas.1} parent=47 // pred_region
        %s1783 = smul.u32 64, %s18
      $region52: #{rede_multiplas_saidas.1} parent=47 // pred_fallthru
        _
    $region48: #{rede_multiplas_saidas.1} parent=5 // pred_fallthru
      _
    %p1784 = scmp.le.s32.totalorder 2, %s13
    // Predicated region
    $region53: #{rede_multiplas_saidas.1} parent=5 // pred_check
      %p1785 = pneg %p1784
    $region54: #{rede_multiplas_saidas.1} parent=5 // pred_check_branch
      %1787 = sbr.rel (%p1785) target = $region56
    $region55: #{rede_multiplas_saidas.1} parent=5 // pred_region
      %s1788 = ssub.s32 %s13, 2
      // Predicated region
      $region57: #{rede_multiplas_saidas.1} parent=55 // pred_check
        %p1789 = pneg %p194
      $region58: #{rede_multiplas_saidas.1} parent=55 // pred_check_branch
        %1791 = sbr.rel (%p1789) target = $region60
      $region59: #{rede_multiplas_saidas.1} parent=55 // pred_region
        %s1792 = smul.u32 64, %s19
        %p1793 = scmp.lt.s32.totalorder %s1792, 127
        %s1794 = scalar_select %p1793, %s1792, 127
        %s1795 = smul.addr %s1794, 2
        %s1796 = smul.addr %s1795, 8
        %s1797 = scalar_lea.vmem %s7, %s1796
      $region60: #{rede_multiplas_saidas.1} parent=55 // pred_fallthru
        _
    $region56: #{rede_multiplas_saidas.1} parent=5 // pred_fallthru
      _
  $region6: #{rede_multiplas_saidas.1} parent=0 // loop_footer
    %s17 = sadd.s32 1, %s13
  $region7: #{rede_multiplas_saidas.1} parent=0 // loop_footer_branch
    %12 = sbr.rel target = $region3
  $region8: #{rede_multiplas_saidas.1} parent=0 // loop_exit
    _

</llo_original>
